<compile_context>
chip_gen: v6e
topology: v6e:2x2x1
jax: 0.10.0
libtpu: 0.0.40
codegen_flags: <defaults>
</compile_context>

<pallas_src>
import numpy as np
import jax
import jax.numpy as jnp
from jax import lax
from jax.experimental import pallas as pl
from jax.experimental.pallas import tpu as pltpu

LANE = 128
SUBLANE = 8
_UNROLL_SEQ = 32      # fully unroll the recurrences when seq <= this
_SEQ_CHUNK = 32       # xproj scratch depth (seq chunk) for long sequences


def _round_up(x, m):
    return (x + m - 1) // m * m


def _gate_pad(g):
    """Per-gate padded width: keep the natural width when all 4 gates fit in one
    128-lane vreg; otherwise pad each gate block to a 128-lane multiple."""
    return g if 4 * g <= LANE else _round_up(g, LANE)


def _gates_to_hc(gates, c, hs):
    """PyTorch LSTM/LSTMCell gate math (gate order i, f, g, o); gates pre-biased."""
    i = jax.nn.sigmoid(gates[:, 0 * hs:1 * hs])
    f = jax.nn.sigmoid(gates[:, 1 * hs:2 * hs])
    g = jnp.tanh(gates[:, 2 * hs:3 * hs])
    o = jax.nn.sigmoid(gates[:, 3 * hs:4 * hs])
    c_new = f * c + i * g
    h_new = o * jnp.tanh(c_new)
    return h_new, c_new


# ----------------------------- Pallas kernel ------------------------------ #

def lstm_ae_kernel(x_ref, wxe_ref, whe_ref, be_ref,
                   wxd_ref, bd_ref, wcomb_ref, bcomb_ref,
                   out_ref, xproj_ref):
    seq, Bt, Fin = x_ref.shape
    Hp = whe_ref.shape[0]            # per-gate encoder hidden width (padded)
    Fp = wcomb_ref.shape[0]          # per-gate decoder hidden width (padded)
    chunk = xproj_ref.shape[0]
    unrolled = (chunk == seq)        # wrapper sets chunk == seq for short sequences

    # Small f32 bias rows (few vregs each); broadcast on the fly in the adds.
    be = be_ref[...]                 # (1, 4*Hp) f32 (encoder bias, folded into xproj)
    bd = bd_ref[...]                 # (1, 4*Fp) f32 (decoder t=0 bias)
    bcomb = bcomb_ref[...]           # (1, 4*Fp) f32 (decoder fused-feedback bias)

    # ---- encoder input projection, computed chunk-wise into VMEM scratch ----
    def project(start, size):
        # Reshapes only merge/split the two leading dims -> copy-free.
        xc = x_ref[pl.ds(start, size)].reshape(size * Bt, Fin)
        pj = jnp.dot(xc, wxe_ref[...], preferred_element_type=jnp.float32) + be
        xproj_ref[pl.ds(0, size)] = (
            pj.reshape(size, Bt, 4 * Hp).astype(xproj_ref.dtype))

    def enc_step(t, carry):
        h, c = carry
        gates = (xproj_ref[t].astype(jnp.float32)
                 + jnp.dot(h.astype(whe_ref.dtype), whe_ref[...],
                           preferred_element_type=jnp.float32))
        return _gates_to_hc(gates, c, Hp)

    h = jnp.zeros((Bt, Hp), jnp.float32)
    c = jnp.zeros((Bt, Hp), jnp.float32)

    if unrolled:
        project(0, seq)
        for t in range(seq):                       # fully unrolled (short seq)
            h, c = enc_step(t, (h, c))
    else:
        n_full, rem = divmod(seq, chunk)

        def chunk_body(ci, carry):
            project(pl.multiple_of(ci * chunk, chunk), chunk)
            return lax.fori_loop(0, chunk, enc_step, carry, unroll=2)

        if n_full:
            h, c = lax.fori_loop(0, n_full, chunk_body, (h, c))
        if rem:
            project(n_full * chunk, rem)
            h, c = lax.fori_loop(0, rem, enc_step, (h, c), unroll=2)
    # h is now h[-1] of the encoder (padded lanes stay exactly zero).

    # ----- decoder: LSTMCell with the feedback Linear fused (wcomb/bcomb) ----
    def dec_step(t, carry):
        hd, cd = carry
        gates = jnp.dot(hd.astype(wcomb_ref.dtype), wcomb_ref[...],
                        preferred_element_type=jnp.float32) + bcomb
        hd, cd = _gates_to_hc(gates, cd, Fp)
        out_ref[pl.ds(seq - t, 1), :, :] = hd[None, :, :].astype(out_ref.dtype)
        return hd, cd

    cd = jnp.zeros((Bt, Fp), jnp.float32)
    gates0 = jnp.dot(h.astype(wxd_ref.dtype), wxd_ref[...],
                     preferred_element_type=jnp.float32) + bd
    hd, cd = _gates_to_hc(gates0, cd, Fp)
    out_ref[0, :, :] = hd.astype(out_ref.dtype)    # x_hat[0] = h_dec(t=0)

    if unrolled:
        for t in range(1, seq):                    # fully unrolled (short seq)
            hd, cd = dec_step(t, (hd, cd))
    else:
        hd, cd = lax.fori_loop(1, seq, dec_step, (hd, cd), unroll=2)


# ----------------------- parameter prep (pad + fuse) ----------------------- #

def _pad_gate_mat(m, rows_p, g, g_p):
    """(R, 4*g) -> (rows_p, 4*g_p): each gate block zero-padded to g_p lanes."""
    r = m.shape[0]
    out = jnp.zeros((rows_p, 4, g_p), m.dtype)
    out = out.at[:r, :, :g].set(m.reshape(r, 4, g))
    return out.reshape(rows_p, 4 * g_p)


def _pad_gate_vec(b, g, g_p):
    out = jnp.zeros((1, 4, g_p), b.dtype)
    out = out.at[:, :, :g].set(b.reshape(1, 4, g))
    return out.reshape(1, 4 * g_p)


def prepare_kernel_params(p, compute_dtype):
    """Fuse the decoder Linear into the cell input projection and pad gate
    blocks.  Zero padding is dynamics-preserving (padded h/c lanes stay exactly
    zero, also in bf16 since bf16(0) == 0).  Weight matrices are cast to
    compute_dtype (MXU operands); biases stay f32."""
    F = p["whd"].shape[0]          # n_features (decoder hidden size)
    H = p["whe"].shape[0]          # encoder hidden size
    F_in = p["wxe"].shape[0]       # encoder input size (== n_features here)
    Hp = _gate_pad(H)
    Fp = _gate_pad(F)
    Fin_p = _round_up(F_in, SUBLANE)

    # Fused decoder feedback:  (hd @ wl + bl) @ wxd + hd @ whd + bd
    #                        = hd @ (wl @ wxd + whd) + (bl @ wxd + bd)
    wcomb = jnp.dot(p["wl"], p["wxd"]) + p["whd"]     # (F, 4F)
    bcomb = jnp.dot(p["bl"], p["wxd"]) + p["bd"]      # (1, 4F)

    kp = {
        "wxe": _pad_gate_mat(p["wxe"], Fin_p, H, Hp),   # (Fin_p, 4*Hp)
        "whe": _pad_gate_mat(p["whe"], Hp, H, Hp),      # (Hp, 4*Hp)
        "be": _pad_gate_vec(p["be"], H, Hp),            # (1, 4*Hp)
        "wxd": _pad_gate_mat(p["wxd"], Hp, F, Fp),      # (Hp, 4*Fp)
        "bd": _pad_gate_vec(p["bd"], F, Fp),            # (1, 4*Fp)
        "wcomb": _pad_gate_mat(wcomb, Fp, F, Fp),       # (Fp, 4*Fp)
        "bcomb": _pad_gate_vec(bcomb, F, Fp),           # (1, 4*Fp)
    }
    for k in ("wxe", "whe", "wxd", "wcomb"):
        kp[k] = kp[k].astype(compute_dtype)
    for k in ("be", "bd", "bcomb"):
        kp[k] = kp[k].astype(jnp.float32)
    return kp, (H, Hp, F, Fp, Fin_p)


# -------------------------------- wrapper ---------------------------------- #

def lstm_autoencoder_forward(x, params, compute_dtype=jnp.bfloat16):
    seq, B, F_in = x.shape
    kp, (H, Hp, F, Fp, Fin_p) = prepare_kernel_params(params, compute_dtype)
    esize = np.dtype(compute_dtype).itemsize

    chunk = seq if seq <= _UNROLL_SEQ else _SEQ_CHUNK

    # ----- per-generation tiling / VMEM budgeting -----
    kind = jax.devices()[0].device_kind.lower()
    is_v5e = ("v5 lite" in kind) or ("v5e" in kind)
    is_v7 = "v7" in kind
    megacore = is_v7 or ("v4" in kind) or (("v5" in kind) and not is_v5e)
    mxu_rows = 128 if is_v5e else 256                  # v6e/v7x MXU has 256 rows
    vmem_budget = (44 << 20) if is_v7 else (96 << 20)  # v7x has only 64 MiB VMEM
    vmem_hard_cap = (60 << 20) if is_v7 else (120 << 20)

    w_bytes = sum(int(v.size) * v.dtype.itemsize for v in kp.values())

    def footprint(bt):
        x_blk = seq * bt * Fin_p * esize
        out_blk = seq * bt * Fp * 4
        xproj_blk = chunk * bt * 4 * Hp * esize
        proj_tmp = chunk * bt * 4 * Hp * 4       # f32 intermediate of the projection
        return 2 * (x_blk + out_blk) + xproj_blk + proj_tmp + 2 * w_bytes + (2 << 20)

    b8 = _round_up(B, SUBLANE)
    b_tile = min(b8, mxu_rows)
    if megacore and b8 >= 2 * SUBLANE:
        # Ensure >= 2 batch tiles so the ("parallel",) axis spans both TensorCores.
        b_tile = min(b_tile, _round_up(-(-b8 // 2), SUBLANE))
    while b_tile > SUBLANE and footprint(b_tile) > vmem_budget:
        b_tile = max(SUBLANE, _round_up(b_tile // 2, SUBLANE))
    Bp = _round_up(B, b_tile)
    n_btiles = Bp // b_tile

    vmem_limit = int(min(max(footprint(b_tile) + (2 << 20), 32 << 20), vmem_hard_cap))

    xp = jnp.zeros((seq, Bp, Fin_p), compute_dtype)
    xp = xp.at[:, :B, :F_in].set(x.astype(compute_dtype))

    flops = int(2 * seq * Bp * Fin_p * (4 * Hp)        # encoder input projection
                + 2 * seq * Bp * Hp * (4 * Hp)         # encoder recurrence
                + 2 * Bp * Hp * (4 * Fp)               # decoder first step
                + 2 * max(seq - 1, 0) * Bp * Fp * (4 * Fp))
    transcendentals = int(5 * seq * Bp * (Hp + Fp))
    bytes_accessed = int(xp.size * esize + w_bytes + seq * Bp * Fp * 4)
    cost = pl.CostEstimate(flops=flops, transcendentals=transcendentals,
                           bytes_accessed=bytes_accessed)

    def build(single_buffer_weights):
        def wspec(shape):
            if single_buffer_weights:
                # Grid-invariant operand: one resident VMEM buffer is enough.
                return pl.BlockSpec(shape, lambda b: (0, 0),
                                    pipeline_mode=pl.Buffered(1))
            return pl.BlockSpec(shape, lambda b: (0, 0))

        grid_spec = pltpu.PrefetchScalarGridSpec(
            num_scalar_prefetch=0,
            grid=(n_btiles,),
            in_specs=[
                pl.BlockSpec((seq, b_tile, Fin_p), lambda b: (0, b, 0)),   # x
                wspec((Fin_p, 4 * Hp)),                                    # wxe
                wspec((Hp, 4 * Hp)),                                       # whe
                wspec((1, 4 * Hp)),                                        # be
                wspec((Hp, 4 * Fp)),                                       # wxd
                wspec((1, 4 * Fp)),                                        # bd
                wspec((Fp, 4 * Fp)),                                       # wcomb
                wspec((1, 4 * Fp)),                                        # bcomb
            ],
            out_specs=pl.BlockSpec((seq, b_tile, Fp), lambda b: (0, b, 0)),
            scratch_shapes=[pltpu.VMEM((chunk, b_tile, 4 * Hp), compute_dtype)],
        )
        return pl.pallas_call(
            lstm_ae_kernel,
            out_shape=jax.ShapeDtypeStruct((seq, Bp, Fp), jnp.float32),
            grid_spec=grid_spec,
            compiler_params=pltpu.CompilerParams(
                dimension_semantics=("parallel",),
                vmem_limit_bytes=vmem_limit),
            cost_estimate=cost,
        )

    args = (xp, kp["wxe"], kp["whe"], kp["be"], kp["wxd"], kp["bd"],
            kp["wcomb"], kp["bcomb"])

    if hasattr(pl, "Buffered"):
        try:
            out_p = build(True)(*args)
        except Exception:
            # pipeline_mode=pl.Buffered(1) not supported by this JAX version;
            # fall back to default double-buffered weight blocks.
            out_p = build(False)(*args)
    else:
        out_p = build(False)(*args)

    return out_p[:, :B, :F]


# --------------------------- params + reference ---------------------------- #

def make_params(key, n_features, hidden_size):
    """Deterministic synthetic parameters with PyTorch-shaped weights,
    pre-transposed / bias-combined (unfused, unpadded — reference layout)."""
    F, H = n_features, hidden_size
    ks = jax.random.split(key, 10)
    u = lambda k, shape, s: jax.random.uniform(k, shape, jnp.float32, -s, s)

    # encoder nn.LSTM(F -> H), 1 layer
    w_ih_e = u(ks[0], (4 * H, F), 1.0 / np.sqrt(H))
    w_hh_e = u(ks[1], (4 * H, H), 1.0 / np.sqrt(H))
    b_ih_e = u(ks[2], (4 * H,), 1.0 / np.sqrt(H))
    b_hh_e = u(ks[3], (4 * H,), 1.0 / np.sqrt(H))
    # decoder nn.LSTMCell(H -> F)
    w_ih_d = u(ks[4], (4 * F, H), 1.0 / np.sqrt(F))
    w_hh_d = u(ks[5], (4 * F, F), 1.0 / np.sqrt(F))
    b_ih_d = u(ks[6], (4 * F,), 1.0 / np.sqrt(F))
    b_hh_d = u(ks[7], (4 * F,), 1.0 / np.sqrt(F))
    # decoder nn.Linear(F -> H)
    w_lin = u(ks[8], (H, F), 1.0 / np.sqrt(F))
    b_lin = u(ks[9], (H,), 1.0 / np.sqrt(F))

    return {
        "wxe": w_ih_e.T,                       # (F, 4H)
        "whe": w_hh_e.T,                       # (H, 4H)
        "be": (b_ih_e + b_hh_e)[None, :],      # (1, 4H)
        "wxd": w_ih_d.T,                       # (H, 4F)
        "whd": w_hh_d.T,                       # (F, 4F)
        "bd": (b_ih_d + b_hh_d)[None, :],      # (1, 4F)
        "wl": w_lin.T,                         # (F, H)
        "bl": b_lin[None, :],                  # (1, H)
    }


def _ref_lstm_step(x_t, h, c, wx, wh, b, hs):
    gates = jnp.dot(x_t, wx) + jnp.dot(h, wh) + b
    return _gates_to_hc(gates, c, hs)


def reference_forward(x, p):
    """Pure-JAX f32 reference of the PyTorch module's forward pass (unfused)."""
    seq, B, _ = x.shape
    H = p["whe"].shape[0]
    F = p["whd"].shape[0]
    h = jnp.zeros((B, H), jnp.float32)
    c = jnp.zeros((B, H), jnp.float32)
    for t in range(seq):
        h, c = _ref_lstm_step(x[t], h, c, p["wxe"], p["whe"], p["be"], H)
    x_hat = [None] * seq
    hd, cd = _ref_lstm_step(h, jnp.zeros((B, F), jnp.float32),
                            jnp.zeros((B, F), jnp.float32),
                            p["wxd"], p["whd"], p["bd"], F)
    x_hat[0] = hd
    for t in range(1, seq):
        inp = jnp.dot(hd, p["wl"]) + p["bl"]
        hd, cd = _ref_lstm_step(inp, hd, cd, p["wxd"], p["whd"], p["bd"], F)
        x_hat[(-t) % seq] = hd
    return jnp.stack(x_hat, axis=0)


if __name__ == "__main__":
    key = jax.random.PRNGKey(0)
    k_x1, k_p1, k_x2, k_p2 = jax.random.split(key, 4)

    # Config 1 (default path): small shapes, unrolled recurrence, natural
    # (unpadded) gate widths, bf16 MXU operands.  Loose tolerance covers the
    # bf16 weight/activation rounding vs. the f32 reference.
    SEQ, BATCH, N_FEATURES, HIDDEN = 8, 2, 4, 32
    x1 = jax.random.normal(k_x1, (SEQ, BATCH, N_FEATURES), jnp.float32)
    params1 = make_params(k_p1, N_FEATURES, HIDDEN)
    x_hat1 = jax.block_until_ready(lstm_autoencoder_forward(x1, params1))
    ref1 = reference_forward(x1, params1)
    np.testing.assert_allclose(np.asarray(x_hat1), np.asarray(ref1),
                               rtol=5e-2, atol=5e-2)

    # Config 2: module-default hidden_size=90 (lane-padded gates) and a longer
    # sequence (chunked fori_loop recurrence path), f32 operands so the exact
    # semantics are verified at tight tolerance.
    SEQ2, BATCH2, N_FEATURES2, HIDDEN2 = 48, 4, 4, 90
    x2 = jax.random.normal(k_x2, (SEQ2, BATCH2, N_FEATURES2), jnp.float32)
    params2 = make_params(k_p2, N_FEATURES2, HIDDEN2)
    x_hat2 = jax.block_until_ready(
        lstm_autoencoder_forward(x2, params2, compute_dtype=jnp.float32))
    ref2 = reference_forward(x2, params2)
    np.testing.assert_allclose(np.asarray(x_hat2), np.asarray(ref2),
                               rtol=1e-3, atol=5e-4)

    print("KERNEL_OK")
</pallas_src>

<mosaic_0001>
module attributes {stable_mosaic.version = 11 : i64} {
  func.func @lstm_ae_kernel(%arg0: i32, %arg1: memref<8x8x8xbf16, #tpu.memory_space<vmem>>, %arg2: memref<8x128xbf16, #tpu.memory_space<vmem>>, %arg3: memref<32x128xbf16, #tpu.memory_space<vmem>>, %arg4: memref<1x128xf32, #tpu.memory_space<vmem>>, %arg5: memref<32x16xbf16, #tpu.memory_space<vmem>>, %arg6: memref<1x16xf32, #tpu.memory_space<vmem>>, %arg7: memref<4x16xbf16, #tpu.memory_space<vmem>>, %arg8: memref<1x16xf32, #tpu.memory_space<vmem>>, %arg9: memref<8x8x4xf32, #tpu.memory_space<vmem>>, %arg10: memref<8x8x128xbf16, #tpu.memory_space<vmem>>) attributes {dimension_semantics = [#tpu.dimension_semantics<parallel>], iteration_bounds = array<i64: 1>, scalar_prefetch = 0 : i64, scratch_operands = 1 : i64, tpu.core_type = #tpu.core_type<tc>, window_params = [{transform_indices = @transform_0, window_bounds = array<i64: 8, 8, 8>}, {pipeline_mode = #tpu.pipeline_mode<synchronous>, transform_indices = @transform_1, window_bounds = array<i64: 8, 128>}, {pipeline_mode = #tpu.pipeline_mode<synchronous>, transform_indices = @transform_2, window_bounds = array<i64: 32, 128>}, {pipeline_mode = #tpu.pipeline_mode<synchronous>, transform_indices = @transform_3, window_bounds = array<i64: 1, 128>}, {pipeline_mode = #tpu.pipeline_mode<synchronous>, transform_indices = @transform_4, window_bounds = array<i64: 32, 16>}, {pipeline_mode = #tpu.pipeline_mode<synchronous>, transform_indices = @transform_5, window_bounds = array<i64: 1, 16>}, {pipeline_mode = #tpu.pipeline_mode<synchronous>, transform_indices = @transform_6, window_bounds = array<i64: 4, 16>}, {pipeline_mode = #tpu.pipeline_mode<synchronous>, transform_indices = @transform_7, window_bounds = array<i64: 1, 16>}, {transform_indices = @transform_8, window_bounds = array<i64: 8, 8, 4>}]} {
    %c0 = arith.constant 0 : index
    %c0_0 = arith.constant 0 : index
    %0 = vector.load %arg4[%c0, %c0_0] : memref<1x128xf32, #tpu.memory_space<vmem>>, vector<1x128xf32>
    %c0_1 = arith.constant 0 : index
    %c0_2 = arith.constant 0 : index
    %1 = vector.load %arg6[%c0_1, %c0_2] : memref<1x16xf32, #tpu.memory_space<vmem>>, vector<1x16xf32>
    %c0_3 = arith.constant 0 : index
    %c0_4 = arith.constant 0 : index
    %2 = vector.load %arg8[%c0_3, %c0_4] : memref<1x16xf32, #tpu.memory_space<vmem>>, vector<1x16xf32>
    %cst = arith.constant 0.000000e+00 : f32
    %3 = vector.broadcast %cst : f32 to vector<8x32xf32>
    %cst_5 = arith.constant 0.000000e+00 : f32
    %4 = vector.broadcast %cst_5 : f32 to vector<8x32xf32>
    %c0_6 = arith.constant 0 : index
    %c0_7 = arith.constant 0 : index
    %c0_8 = arith.constant 0 : index
    %5 = vector.load %arg1[%c0_6, %c0_7, %c0_8] : memref<8x8x8xbf16, #tpu.memory_space<vmem>>, vector<8x8x8xbf16>
    %6 = vector.shape_cast %5 : vector<8x8x8xbf16> to vector<64x8xbf16>
    %c0_9 = arith.constant 0 : index
    %c0_10 = arith.constant 0 : index
    %7 = vector.load %arg2[%c0_9, %c0_10] : memref<8x128xbf16, #tpu.memory_space<vmem>>, vector<8x128xbf16>
    %cst_11 = arith.constant dense<0.000000e+00> : vector<64x128xf32>
    %8 = tpu.matmul %6, %7, %cst_11 {dimension_numbers = #tpu.dot_dimension_numbers<[1], [0], [0], [1], [0, 0, 1, 1], [], []>} : vector<64x8xbf16>, vector<8x128xbf16>, vector<64x128xf32> -> vector<64x128xf32>
    %9 = vector.broadcast %0 : vector<1x128xf32> to vector<64x128xf32>
    %10 = arith.addf %8, %9 : vector<64x128xf32>
    %11 = vector.shape_cast %10 : vector<64x128xf32> to vector<8x8x128xf32>
    %12 = arith.truncf %11 : vector<8x8x128xf32> to vector<8x8x128xbf16>
    %c0_12 = arith.constant 0 : index
    %c0_13 = arith.constant 0 : index
    %c0_14 = arith.constant 0 : index
    %13 = vector.load %arg10[%c0_12, %c0_13, %c0_14] : memref<8x8x128xbf16, #tpu.memory_space<vmem>>, vector<8x8x128xbf16>
    tpu.vector_store %arg10[%c0_12, %c0_13, %c0_14], %12 {strides = array<i32>} : memref<8x8x128xbf16, #tpu.memory_space<vmem>>, vector<8x8x128xbf16>,
    %c0_15 = arith.constant 0 : index
    %c0_16 = arith.constant 0 : index
    %c0_17 = arith.constant 0 : index
    %14 = vector.load %arg10[%c0_15, %c0_16, %c0_17] : memref<8x8x128xbf16, #tpu.memory_space<vmem>>, vector<1x8x128xbf16>
    %15 = vector.shape_cast %14 : vector<1x8x128xbf16> to vector<8x128xbf16>
    %16 = arith.extf %15 : vector<8x128xbf16> to vector<8x128xf32>
    %17 = arith.truncf %3 : vector<8x32xf32> to vector<8x32xbf16>
    %c0_18 = arith.constant 0 : index
    %c0_19 = arith.constant 0 : index
    %18 = vector.load %arg3[%c0_18, %c0_19] : memref<32x128xbf16, #tpu.memory_space<vmem>>, vector<32x128xbf16>
    %cst_20 = arith.constant dense<0.000000e+00> : vector<8x128xf32>
    %19 = tpu.matmul %17, %18, %cst_20 {dimension_numbers = #tpu.dot_dimension_numbers<[1], [0], [0], [1], [0, 0, 1, 1], [], []>} : vector<8x32xbf16>, vector<32x128xbf16>, vector<8x128xf32> -> vector<8x128xf32>
    %20 = arith.addf %16, %19 : vector<8x128xf32>
    %21 = vector.extract_strided_slice %20 {offsets = [0, 0], sizes = [8, 32], strides = [1, 1]} : vector<8x128xf32> to vector<8x32xf32>
    %22 = arith.negf %21 : vector<8x32xf32>
    %23 = math.exp %22 : vector<8x32xf32>
    %cst_21 = arith.constant 1.000000e+00 : f32
    %24 = vector.broadcast %cst_21 : f32 to vector<8x32xf32>
    %25 = arith.addf %24, %23 : vector<8x32xf32>
    %26 = arith.divf %24, %25 : vector<8x32xf32>
    %27 = vector.extract_strided_slice %20 {offsets = [0, 32], sizes = [8, 32], strides = [1, 1]} : vector<8x128xf32> to vector<8x32xf32>
    %28 = arith.negf %27 : vector<8x32xf32>
    %29 = math.exp %28 : vector<8x32xf32>
    %cst_22 = arith.constant 1.000000e+00 : f32
    %30 = vector.broadcast %cst_22 : f32 to vector<8x32xf32>
    %31 = arith.addf %30, %29 : vector<8x32xf32>
    %32 = arith.divf %30, %31 : vector<8x32xf32>
    %33 = vector.extract_strided_slice %20 {offsets = [0, 64], sizes = [8, 32], strides = [1, 1]} : vector<8x128xf32> to vector<8x32xf32>
    %34 = math.tanh %33 : vector<8x32xf32>
    %35 = vector.extract_strided_slice %20 {offsets = [0, 96], sizes = [8, 32], strides = [1, 1]} : vector<8x128xf32> to vector<8x32xf32>
    %36 = arith.negf %35 : vector<8x32xf32>
    %37 = math.exp %36 : vector<8x32xf32>
    %cst_23 = arith.constant 1.000000e+00 : f32
    %38 = vector.broadcast %cst_23 : f32 to vector<8x32xf32>
    %39 = arith.addf %38, %37 : vector<8x32xf32>
    %40 = arith.divf %38, %39 : vector<8x32xf32>
    %41 = arith.mulf %32, %4 : vector<8x32xf32>
    %42 = arith.mulf %26, %34 : vector<8x32xf32>
    %43 = arith.addf %41, %42 : vector<8x32xf32>
    %44 = math.tanh %43 : vector<8x32xf32>
    %45 = arith.mulf %40, %44 : vector<8x32xf32>
    %c1 = arith.constant 1 : index
    %c0_24 = arith.constant 0 : index
    %c0_25 = arith.constant 0 : index
    %46 = vector.load %arg10[%c1, %c0_24, %c0_25] : memref<8x8x128xbf16, #tpu.memory_space<vmem>>, vector<1x8x128xbf16>
    %47 = vector.shape_cast %46 : vector<1x8x128xbf16> to vector<8x128xbf16>
    %48 = arith.extf %47 : vector<8x128xbf16> to vector<8x128xf32>
    %49 = arith.truncf %45 : vector<8x32xf32> to vector<8x32xbf16>
    %c0_26 = arith.constant 0 : index
    %c0_27 = arith.constant 0 : index
    %50 = vector.load %arg3[%c0_26, %c0_27] : memref<32x128xbf16, #tpu.memory_space<vmem>>, vector<32x128xbf16>
    %cst_28 = arith.constant dense<0.000000e+00> : vector<8x128xf32>
    %51 = tpu.matmul %49, %50, %cst_28 {dimension_numbers = #tpu.dot_dimension_numbers<[1], [0], [0], [1], [0, 0, 1, 1], [], []>} : vector<8x32xbf16>, vector<32x128xbf16>, vector<8x128xf32> -> vector<8x128xf32>
    %52 = arith.addf %48, %51 : vector<8x128xf32>
    %53 = vector.extract_strided_slice %52 {offsets = [0, 0], sizes = [8, 32], strides = [1, 1]} : vector<8x128xf32> to vector<8x32xf32>
    %54 = arith.negf %53 : vector<8x32xf32>
    %55 = math.exp %54 : vector<8x32xf32>
    %cst_29 = arith.constant 1.000000e+00 : f32
    %56 = vector.broadcast %cst_29 : f32 to vector<8x32xf32>
    %57 = arith.addf %56, %55 : vector<8x32xf32>
    %58 = arith.divf %56, %57 : vector<8x32xf32>
    %59 = vector.extract_strided_slice %52 {offsets = [0, 32], sizes = [8, 32], strides = [1, 1]} : vector<8x128xf32> to vector<8x32xf32>
    %60 = arith.negf %59 : vector<8x32xf32>
    %61 = math.exp %60 : vector<8x32xf32>
    %cst_30 = arith.constant 1.000000e+00 : f32
    %62 = vector.broadcast %cst_30 : f32 to vector<8x32xf32>
    %63 = arith.addf %62, %61 : vector<8x32xf32>
    %64 = arith.divf %62, %63 : vector<8x32xf32>
    %65 = vector.extract_strided_slice %52 {offsets = [0, 64], sizes = [8, 32], strides = [1, 1]} : vector<8x128xf32> to vector<8x32xf32>
    %66 = math.tanh %65 : vector<8x32xf32>
    %67 = vector.extract_strided_slice %52 {offsets = [0, 96], sizes = [8, 32], strides = [1, 1]} : vector<8x128xf32> to vector<8x32xf32>
    %68 = arith.negf %67 : vector<8x32xf32>
    %69 = math.exp %68 : vector<8x32xf32>
    %cst_31 = arith.constant 1.000000e+00 : f32
    %70 = vector.broadcast %cst_31 : f32 to vector<8x32xf32>
    %71 = arith.addf %70, %69 : vector<8x32xf32>
    %72 = arith.divf %70, %71 : vector<8x32xf32>
    %73 = arith.mulf %64, %43 : vector<8x32xf32>
    %74 = arith.mulf %58, %66 : vector<8x32xf32>
    %75 = arith.addf %73, %74 : vector<8x32xf32>
    %76 = math.tanh %75 : vector<8x32xf32>
    %77 = arith.mulf %72, %76 : vector<8x32xf32>
    %c2 = arith.constant 2 : index
    %c0_32 = arith.constant 0 : index
    %c0_33 = arith.constant 0 : index
    %78 = vector.load %arg10[%c2, %c0_32, %c0_33] : memref<8x8x128xbf16, #tpu.memory_space<vmem>>, vector<1x8x128xbf16>
    %79 = vector.shape_cast %78 : vector<1x8x128xbf16> to vector<8x128xbf16>
    %80 = arith.extf %79 : vector<8x128xbf16> to vector<8x128xf32>
    %81 = arith.truncf %77 : vector<8x32xf32> to vector<8x32xbf16>
    %c0_34 = arith.constant 0 : index
    %c0_35 = arith.constant 0 : index
    %82 = vector.load %arg3[%c0_34, %c0_35] : memref<32x128xbf16, #tpu.memory_space<vmem>>, vector<32x128xbf16>
    %cst_36 = arith.constant dense<0.000000e+00> : vector<8x128xf32>
    %83 = tpu.matmul %81, %82, %cst_36 {dimension_numbers = #tpu.dot_dimension_numbers<[1], [0], [0], [1], [0, 0, 1, 1], [], []>} : vector<8x32xbf16>, vector<32x128xbf16>, vector<8x128xf32> -> vector<8x128xf32>
    %84 = arith.addf %80, %83 : vector<8x128xf32>
    %85 = vector.extract_strided_slice %84 {offsets = [0, 0], sizes = [8, 32], strides = [1, 1]} : vector<8x128xf32> to vector<8x32xf32>
    %86 = arith.negf %85 : vector<8x32xf32>
    %87 = math.exp %86 : vector<8x32xf32>
    %cst_37 = arith.constant 1.000000e+00 : f32
    %88 = vector.broadcast %cst_37 : f32 to vector<8x32xf32>
    %89 = arith.addf %88, %87 : vector<8x32xf32>
    %90 = arith.divf %88, %89 : vector<8x32xf32>
    %91 = vector.extract_strided_slice %84 {offsets = [0, 32], sizes = [8, 32], strides = [1, 1]} : vector<8x128xf32> to vector<8x32xf32>
    %92 = arith.negf %91 : vector<8x32xf32>
    %93 = math.exp %92 : vector<8x32xf32>
    %cst_38 = arith.constant 1.000000e+00 : f32
    %94 = vector.broadcast %cst_38 : f32 to vector<8x32xf32>
    %95 = arith.addf %94, %93 : vector<8x32xf32>
    %96 = arith.divf %94, %95 : vector<8x32xf32>
    %97 = vector.extract_strided_slice %84 {offsets = [0, 64], sizes = [8, 32], strides = [1, 1]} : vector<8x128xf32> to vector<8x32xf32>
    %98 = math.tanh %97 : vector<8x32xf32>
    %99 = vector.extract_strided_slice %84 {offsets = [0, 96], sizes = [8, 32], strides = [1, 1]} : vector<8x128xf32> to vector<8x32xf32>
    %100 = arith.negf %99 : vector<8x32xf32>
    %101 = math.exp %100 : vector<8x32xf32>
    %cst_39 = arith.constant 1.000000e+00 : f32
    %102 = vector.broadcast %cst_39 : f32 to vector<8x32xf32>
    %103 = arith.addf %102, %101 : vector<8x32xf32>
    %104 = arith.divf %102, %103 : vector<8x32xf32>
    %105 = arith.mulf %96, %75 : vector<8x32xf32>
    %106 = arith.mulf %90, %98 : vector<8x32xf32>
    %107 = arith.addf %105, %106 : vector<8x32xf32>
    %108 = math.tanh %107 : vector<8x32xf32>
    %109 = arith.mulf %104, %108 : vector<8x32xf32>
    %c3 = arith.constant 3 : index
    %c0_40 = arith.constant 0 : index
    %c0_41 = arith.constant 0 : index
    %110 = vector.load %arg10[%c3, %c0_40, %c0_41] : memref<8x8x128xbf16, #tpu.memory_space<vmem>>, vector<1x8x128xbf16>
    %111 = vector.shape_cast %110 : vector<1x8x128xbf16> to vector<8x128xbf16>
    %112 = arith.extf %111 : vector<8x128xbf16> to vector<8x128xf32>
    %113 = arith.truncf %109 : vector<8x32xf32> to vector<8x32xbf16>
    %c0_42 = arith.constant 0 : index
    %c0_43 = arith.constant 0 : index
    %114 = vector.load %arg3[%c0_42, %c0_43] : memref<32x128xbf16, #tpu.memory_space<vmem>>, vector<32x128xbf16>
    %cst_44 = arith.constant dense<0.000000e+00> : vector<8x128xf32>
    %115 = tpu.matmul %113, %114, %cst_44 {dimension_numbers = #tpu.dot_dimension_numbers<[1], [0], [0], [1], [0, 0, 1, 1], [], []>} : vector<8x32xbf16>, vector<32x128xbf16>, vector<8x128xf32> -> vector<8x128xf32>
    %116 = arith.addf %112, %115 : vector<8x128xf32>
    %117 = vector.extract_strided_slice %116 {offsets = [0, 0], sizes = [8, 32], strides = [1, 1]} : vector<8x128xf32> to vector<8x32xf32>
    %118 = arith.negf %117 : vector<8x32xf32>
    %119 = math.exp %118 : vector<8x32xf32>
    %cst_45 = arith.constant 1.000000e+00 : f32
    %120 = vector.broadcast %cst_45 : f32 to vector<8x32xf32>
    %121 = arith.addf %120, %119 : vector<8x32xf32>
    %122 = arith.divf %120, %121 : vector<8x32xf32>
    %123 = vector.extract_strided_slice %116 {offsets = [0, 32], sizes = [8, 32], strides = [1, 1]} : vector<8x128xf32> to vector<8x32xf32>
    %124 = arith.negf %123 : vector<8x32xf32>
    %125 = math.exp %124 : vector<8x32xf32>
    %cst_46 = arith.constant 1.000000e+00 : f32
    %126 = vector.broadcast %cst_46 : f32 to vector<8x32xf32>
    %127 = arith.addf %126, %125 : vector<8x32xf32>
    %128 = arith.divf %126, %127 : vector<8x32xf32>
    %129 = vector.extract_strided_slice %116 {offsets = [0, 64], sizes = [8, 32], strides = [1, 1]} : vector<8x128xf32> to vector<8x32xf32>
    %130 = math.tanh %129 : vector<8x32xf32>
    %131 = vector.extract_strided_slice %116 {offsets = [0, 96], sizes = [8, 32], strides = [1, 1]} : vector<8x128xf32> to vector<8x32xf32>
    %132 = arith.negf %131 : vector<8x32xf32>
    %133 = math.exp %132 : vector<8x32xf32>
    %cst_47 = arith.constant 1.000000e+00 : f32
    %134 = vector.broadcast %cst_47 : f32 to vector<8x32xf32>
    %135 = arith.addf %134, %133 : vector<8x32xf32>
    %136 = arith.divf %134, %135 : vector<8x32xf32>
    %137 = arith.mulf %128, %107 : vector<8x32xf32>
    %138 = arith.mulf %122, %130 : vector<8x32xf32>
    %139 = arith.addf %137, %138 : vector<8x32xf32>
    %140 = math.tanh %139 : vector<8x32xf32>
    %141 = arith.mulf %136, %140 : vector<8x32xf32>
    %c4 = arith.constant 4 : index
    %c0_48 = arith.constant 0 : index
    %c0_49 = arith.constant 0 : index
    %142 = vector.load %arg10[%c4, %c0_48, %c0_49] : memref<8x8x128xbf16, #tpu.memory_space<vmem>>, vector<1x8x128xbf16>
    %143 = vector.shape_cast %142 : vector<1x8x128xbf16> to vector<8x128xbf16>
    %144 = arith.extf %143 : vector<8x128xbf16> to vector<8x128xf32>
    %145 = arith.truncf %141 : vector<8x32xf32> to vector<8x32xbf16>
    %c0_50 = arith.constant 0 : index
    %c0_51 = arith.constant 0 : index
    %146 = vector.load %arg3[%c0_50, %c0_51] : memref<32x128xbf16, #tpu.memory_space<vmem>>, vector<32x128xbf16>
    %cst_52 = arith.constant dense<0.000000e+00> : vector<8x128xf32>
    %147 = tpu.matmul %145, %146, %cst_52 {dimension_numbers = #tpu.dot_dimension_numbers<[1], [0], [0], [1], [0, 0, 1, 1], [], []>} : vector<8x32xbf16>, vector<32x128xbf16>, vector<8x128xf32> -> vector<8x128xf32>
    %148 = arith.addf %144, %147 : vector<8x128xf32>
    %149 = vector.extract_strided_slice %148 {offsets = [0, 0], sizes = [8, 32], strides = [1, 1]} : vector<8x128xf32> to vector<8x32xf32>
    %150 = arith.negf %149 : vector<8x32xf32>
    %151 = math.exp %150 : vector<8x32xf32>
    %cst_53 = arith.constant 1.000000e+00 : f32
    %152 = vector.broadcast %cst_53 : f32 to vector<8x32xf32>
    %153 = arith.addf %152, %151 : vector<8x32xf32>
    %154 = arith.divf %152, %153 : vector<8x32xf32>
    %155 = vector.extract_strided_slice %148 {offsets = [0, 32], sizes = [8, 32], strides = [1, 1]} : vector<8x128xf32> to vector<8x32xf32>
    %156 = arith.negf %155 : vector<8x32xf32>
    %157 = math.exp %156 : vector<8x32xf32>
    %cst_54 = arith.constant 1.000000e+00 : f32
    %158 = vector.broadcast %cst_54 : f32 to vector<8x32xf32>
    %159 = arith.addf %158, %157 : vector<8x32xf32>
    %160 = arith.divf %158, %159 : vector<8x32xf32>
    %161 = vector.extract_strided_slice %148 {offsets = [0, 64], sizes = [8, 32], strides = [1, 1]} : vector<8x128xf32> to vector<8x32xf32>
    %162 = math.tanh %161 : vector<8x32xf32>
    %163 = vector.extract_strided_slice %148 {offsets = [0, 96], sizes = [8, 32], strides = [1, 1]} : vector<8x128xf32> to vector<8x32xf32>
    %164 = arith.negf %163 : vector<8x32xf32>
    %165 = math.exp %164 : vector<8x32xf32>
    %cst_55 = arith.constant 1.000000e+00 : f32
    %166 = vector.broadcast %cst_55 : f32 to vector<8x32xf32>
    %167 = arith.addf %166, %165 : vector<8x32xf32>
    %168 = arith.divf %166, %167 : vector<8x32xf32>
    %169 = arith.mulf %160, %139 : vector<8x32xf32>
    %170 = arith.mulf %154, %162 : vector<8x32xf32>
    %171 = arith.addf %169, %170 : vector<8x32xf32>
    %172 = math.tanh %171 : vector<8x32xf32>
    %173 = arith.mulf %168, %172 : vector<8x32xf32>
    %c5 = arith.constant 5 : index
    %c0_56 = arith.constant 0 : index
    %c0_57 = arith.constant 0 : index
    %174 = vector.load %arg10[%c5, %c0_56, %c0_57] : memref<8x8x128xbf16, #tpu.memory_space<vmem>>, vector<1x8x128xbf16>
    %175 = vector.shape_cast %174 : vector<1x8x128xbf16> to vector<8x128xbf16>
    %176 = arith.extf %175 : vector<8x128xbf16> to vector<8x128xf32>
    %177 = arith.truncf %173 : vector<8x32xf32> to vector<8x32xbf16>
    %c0_58 = arith.constant 0 : index
    %c0_59 = arith.constant 0 : index
    %178 = vector.load %arg3[%c0_58, %c0_59] : memref<32x128xbf16, #tpu.memory_space<vmem>>, vector<32x128xbf16>
    %cst_60 = arith.constant dense<0.000000e+00> : vector<8x128xf32>
    %179 = tpu.matmul %177, %178, %cst_60 {dimension_numbers = #tpu.dot_dimension_numbers<[1], [0], [0], [1], [0, 0, 1, 1], [], []>} : vector<8x32xbf16>, vector<32x128xbf16>, vector<8x128xf32> -> vector<8x128xf32>
    %180 = arith.addf %176, %179 : vector<8x128xf32>
    %181 = vector.extract_strided_slice %180 {offsets = [0, 0], sizes = [8, 32], strides = [1, 1]} : vector<8x128xf32> to vector<8x32xf32>
    %182 = arith.negf %181 : vector<8x32xf32>
    %183 = math.exp %182 : vector<8x32xf32>
    %cst_61 = arith.constant 1.000000e+00 : f32
    %184 = vector.broadcast %cst_61 : f32 to vector<8x32xf32>
    %185 = arith.addf %184, %183 : vector<8x32xf32>
    %186 = arith.divf %184, %185 : vector<8x32xf32>
    %187 = vector.extract_strided_slice %180 {offsets = [0, 32], sizes = [8, 32], strides = [1, 1]} : vector<8x128xf32> to vector<8x32xf32>
    %188 = arith.negf %187 : vector<8x32xf32>
    %189 = math.exp %188 : vector<8x32xf32>
    %cst_62 = arith.constant 1.000000e+00 : f32
    %190 = vector.broadcast %cst_62 : f32 to vector<8x32xf32>
    %191 = arith.addf %190, %189 : vector<8x32xf32>
    %192 = arith.divf %190, %191 : vector<8x32xf32>
    %193 = vector.extract_strided_slice %180 {offsets = [0, 64], sizes = [8, 32], strides = [1, 1]} : vector<8x128xf32> to vector<8x32xf32>
    %194 = math.tanh %193 : vector<8x32xf32>
    %195 = vector.extract_strided_slice %180 {offsets = [0, 96], sizes = [8, 32], strides = [1, 1]} : vector<8x128xf32> to vector<8x32xf32>
    %196 = arith.negf %195 : vector<8x32xf32>
    %197 = math.exp %196 : vector<8x32xf32>
    %cst_63 = arith.constant 1.000000e+00 : f32
    %198 = vector.broadcast %cst_63 : f32 to vector<8x32xf32>
    %199 = arith.addf %198, %197 : vector<8x32xf32>
    %200 = arith.divf %198, %199 : vector<8x32xf32>
    %201 = arith.mulf %192, %171 : vector<8x32xf32>
    %202 = arith.mulf %186, %194 : vector<8x32xf32>
    %203 = arith.addf %201, %202 : vector<8x32xf32>
    %204 = math.tanh %203 : vector<8x32xf32>
    %205 = arith.mulf %200, %204 : vector<8x32xf32>
    %c6 = arith.constant 6 : index
    %c0_64 = arith.constant 0 : index
    %c0_65 = arith.constant 0 : index
    %206 = vector.load %arg10[%c6, %c0_64, %c0_65] : memref<8x8x128xbf16, #tpu.memory_space<vmem>>, vector<1x8x128xbf16>
    %207 = vector.shape_cast %206 : vector<1x8x128xbf16> to vector<8x128xbf16>
    %208 = arith.extf %207 : vector<8x128xbf16> to vector<8x128xf32>
    %209 = arith.truncf %205 : vector<8x32xf32> to vector<8x32xbf16>
    %c0_66 = arith.constant 0 : index
    %c0_67 = arith.constant 0 : index
    %210 = vector.load %arg3[%c0_66, %c0_67] : memref<32x128xbf16, #tpu.memory_space<vmem>>, vector<32x128xbf16>
    %cst_68 = arith.constant dense<0.000000e+00> : vector<8x128xf32>
    %211 = tpu.matmul %209, %210, %cst_68 {dimension_numbers = #tpu.dot_dimension_numbers<[1], [0], [0], [1], [0, 0, 1, 1], [], []>} : vector<8x32xbf16>, vector<32x128xbf16>, vector<8x128xf32> -> vector<8x128xf32>
    %212 = arith.addf %208, %211 : vector<8x128xf32>
    %213 = vector.extract_strided_slice %212 {offsets = [0, 0], sizes = [8, 32], strides = [1, 1]} : vector<8x128xf32> to vector<8x32xf32>
    %214 = arith.negf %213 : vector<8x32xf32>
    %215 = math.exp %214 : vector<8x32xf32>
    %cst_69 = arith.constant 1.000000e+00 : f32
    %216 = vector.broadcast %cst_69 : f32 to vector<8x32xf32>
    %217 = arith.addf %216, %215 : vector<8x32xf32>
    %218 = arith.divf %216, %217 : vector<8x32xf32>
    %219 = vector.extract_strided_slice %212 {offsets = [0, 32], sizes = [8, 32], strides = [1, 1]} : vector<8x128xf32> to vector<8x32xf32>
    %220 = arith.negf %219 : vector<8x32xf32>
    %221 = math.exp %220 : vector<8x32xf32>
    %cst_70 = arith.constant 1.000000e+00 : f32
    %222 = vector.broadcast %cst_70 : f32 to vector<8x32xf32>
    %223 = arith.addf %222, %221 : vector<8x32xf32>
    %224 = arith.divf %222, %223 : vector<8x32xf32>
    %225 = vector.extract_strided_slice %212 {offsets = [0, 64], sizes = [8, 32], strides = [1, 1]} : vector<8x128xf32> to vector<8x32xf32>
    %226 = math.tanh %225 : vector<8x32xf32>
    %227 = vector.extract_strided_slice %212 {offsets = [0, 96], sizes = [8, 32], strides = [1, 1]} : vector<8x128xf32> to vector<8x32xf32>
    %228 = arith.negf %227 : vector<8x32xf32>
    %229 = math.exp %228 : vector<8x32xf32>
    %cst_71 = arith.constant 1.000000e+00 : f32
    %230 = vector.broadcast %cst_71 : f32 to vector<8x32xf32>
    %231 = arith.addf %230, %229 : vector<8x32xf32>
    %232 = arith.divf %230, %231 : vector<8x32xf32>
    %233 = arith.mulf %224, %203 : vector<8x32xf32>
    %234 = arith.mulf %218, %226 : vector<8x32xf32>
    %235 = arith.addf %233, %234 : vector<8x32xf32>
    %236 = math.tanh %235 : vector<8x32xf32>
    %237 = arith.mulf %232, %236 : vector<8x32xf32>
    %c7 = arith.constant 7 : index
    %c0_72 = arith.constant 0 : index
    %c0_73 = arith.constant 0 : index
    %238 = vector.load %arg10[%c7, %c0_72, %c0_73] : memref<8x8x128xbf16, #tpu.memory_space<vmem>>, vector<1x8x128xbf16>
    %239 = vector.shape_cast %238 : vector<1x8x128xbf16> to vector<8x128xbf16>
    %240 = arith.extf %239 : vector<8x128xbf16> to vector<8x128xf32>
    %241 = arith.truncf %237 : vector<8x32xf32> to vector<8x32xbf16>
    %c0_74 = arith.constant 0 : index
    %c0_75 = arith.constant 0 : index
    %242 = vector.load %arg3[%c0_74, %c0_75] : memref<32x128xbf16, #tpu.memory_space<vmem>>, vector<32x128xbf16>
    %cst_76 = arith.constant dense<0.000000e+00> : vector<8x128xf32>
    %243 = tpu.matmul %241, %242, %cst_76 {dimension_numbers = #tpu.dot_dimension_numbers<[1], [0], [0], [1], [0, 0, 1, 1], [], []>} : vector<8x32xbf16>, vector<32x128xbf16>, vector<8x128xf32> -> vector<8x128xf32>
    %244 = arith.addf %240, %243 : vector<8x128xf32>
    %245 = vector.extract_strided_slice %244 {offsets = [0, 0], sizes = [8, 32], strides = [1, 1]} : vector<8x128xf32> to vector<8x32xf32>
    %246 = arith.negf %245 : vector<8x32xf32>
    %247 = math.exp %246 : vector<8x32xf32>
    %cst_77 = arith.constant 1.000000e+00 : f32
    %248 = vector.broadcast %cst_77 : f32 to vector<8x32xf32>
    %249 = arith.addf %248, %247 : vector<8x32xf32>
    %250 = arith.divf %248, %249 : vector<8x32xf32>
    %251 = vector.extract_strided_slice %244 {offsets = [0, 32], sizes = [8, 32], strides = [1, 1]} : vector<8x128xf32> to vector<8x32xf32>
    %252 = arith.negf %251 : vector<8x32xf32>
    %253 = math.exp %252 : vector<8x32xf32>
    %cst_78 = arith.constant 1.000000e+00 : f32
    %254 = vector.broadcast %cst_78 : f32 to vector<8x32xf32>
    %255 = arith.addf %254, %253 : vector<8x32xf32>
    %256 = arith.divf %254, %255 : vector<8x32xf32>
    %257 = vector.extract_strided_slice %244 {offsets = [0, 64], sizes = [8, 32], strides = [1, 1]} : vector<8x128xf32> to vector<8x32xf32>
    %258 = math.tanh %257 : vector<8x32xf32>
    %259 = vector.extract_strided_slice %244 {offsets = [0, 96], sizes = [8, 32], strides = [1, 1]} : vector<8x128xf32> to vector<8x32xf32>
    %260 = arith.negf %259 : vector<8x32xf32>
    %261 = math.exp %260 : vector<8x32xf32>
    %cst_79 = arith.constant 1.000000e+00 : f32
    %262 = vector.broadcast %cst_79 : f32 to vector<8x32xf32>
    %263 = arith.addf %262, %261 : vector<8x32xf32>
    %264 = arith.divf %262, %263 : vector<8x32xf32>
    %265 = arith.mulf %256, %235 : vector<8x32xf32>
    %266 = arith.mulf %250, %258 : vector<8x32xf32>
    %267 = arith.addf %265, %266 : vector<8x32xf32>
    %268 = math.tanh %267 : vector<8x32xf32>
    %269 = arith.mulf %264, %268 : vector<8x32xf32>
    %cst_80 = arith.constant 0.000000e+00 : f32
    %270 = vector.broadcast %cst_80 : f32 to vector<8x4xf32>
    %271 = arith.truncf %269 : vector<8x32xf32> to vector<8x32xbf16>
    %c0_81 = arith.constant 0 : index
    %c0_82 = arith.constant 0 : index
    %272 = vector.load %arg5[%c0_81, %c0_82] : memref<32x16xbf16, #tpu.memory_space<vmem>>, vector<32x16xbf16>
    %cst_83 = arith.constant dense<0.000000e+00> : vector<8x16xf32>
    %273 = tpu.matmul %271, %272, %cst_83 {dimension_numbers = #tpu.dot_dimension_numbers<[1], [0], [0], [1], [0, 0, 1, 1], [], []>} : vector<8x32xbf16>, vector<32x16xbf16>, vector<8x16xf32> -> vector<8x16xf32>
    %274 = vector.broadcast %1 : vector<1x16xf32> to vector<8x16xf32>
    %275 = arith.addf %273, %274 : vector<8x16xf32>
    %276 = vector.extract_strided_slice %275 {offsets = [0, 0], sizes = [8, 4], strides = [1, 1]} : vector<8x16xf32> to vector<8x4xf32>
    %277 = arith.negf %276 : vector<8x4xf32>
    %278 = math.exp %277 : vector<8x4xf32>
    %cst_84 = arith.constant 1.000000e+00 : f32
    %279 = vector.broadcast %cst_84 : f32 to vector<8x4xf32>
    %280 = arith.addf %279, %278 : vector<8x4xf32>
    %281 = arith.divf %279, %280 : vector<8x4xf32>
    %282 = vector.extract_strided_slice %275 {offsets = [0, 4], sizes = [8, 4], strides = [1, 1]} : vector<8x16xf32> to vector<8x4xf32>
    %283 = arith.negf %282 : vector<8x4xf32>
    %284 = math.exp %283 : vector<8x4xf32>
    %cst_85 = arith.constant 1.000000e+00 : f32
    %285 = vector.broadcast %cst_85 : f32 to vector<8x4xf32>
    %286 = arith.addf %285, %284 : vector<8x4xf32>
    %287 = arith.divf %285, %286 : vector<8x4xf32>
    %288 = vector.extract_strided_slice %275 {offsets = [0, 8], sizes = [8, 4], strides = [1, 1]} : vector<8x16xf32> to vector<8x4xf32>
    %289 = math.tanh %288 : vector<8x4xf32>
    %290 = vector.extract_strided_slice %275 {offsets = [0, 12], sizes = [8, 4], strides = [1, 1]} : vector<8x16xf32> to vector<8x4xf32>
    %291 = arith.negf %290 : vector<8x4xf32>
    %292 = math.exp %291 : vector<8x4xf32>
    %cst_86 = arith.constant 1.000000e+00 : f32
    %293 = vector.broadcast %cst_86 : f32 to vector<8x4xf32>
    %294 = arith.addf %293, %292 : vector<8x4xf32>
    %295 = arith.divf %293, %294 : vector<8x4xf32>
    %296 = arith.mulf %287, %270 : vector<8x4xf32>
    %297 = arith.mulf %281, %289 : vector<8x4xf32>
    %298 = arith.addf %296, %297 : vector<8x4xf32>
    %299 = math.tanh %298 : vector<8x4xf32>
    %300 = arith.mulf %295, %299 : vector<8x4xf32>
    %c0_87 = arith.constant 0 : index
    %c0_88 = arith.constant 0 : index
    %c0_89 = arith.constant 0 : index
    %301 = vector.load %arg9[%c0_87, %c0_88, %c0_89] : memref<8x8x4xf32, #tpu.memory_space<vmem>>, vector<1x8x4xf32>
    %302 = vector.shape_cast %301 : vector<1x8x4xf32> to vector<8x4xf32>
    %303 = vector.shape_cast %300 : vector<8x4xf32> to vector<1x8x4xf32>
    tpu.vector_store %arg9[%c0_87, %c0_88, %c0_89], %303 {strides = array<i32>} : memref<8x8x4xf32, #tpu.memory_space<vmem>>, vector<1x8x4xf32>,
    %304 = arith.truncf %300 : vector<8x4xf32> to vector<8x4xbf16>
    %c0_90 = arith.constant 0 : index
    %c0_91 = arith.constant 0 : index
    %305 = vector.load %arg7[%c0_90, %c0_91] : memref<4x16xbf16, #tpu.memory_space<vmem>>, vector<4x16xbf16>
    %cst_92 = arith.constant dense<0.000000e+00> : vector<8x16xf32>
    %306 = tpu.matmul %304, %305, %cst_92 {dimension_numbers = #tpu.dot_dimension_numbers<[1], [0], [0], [1], [0, 0, 1, 1], [], []>} : vector<8x4xbf16>, vector<4x16xbf16>, vector<8x16xf32> -> vector<8x16xf32>
    %307 = vector.broadcast %2 : vector<1x16xf32> to vector<8x16xf32>
    %308 = arith.addf %306, %307 : vector<8x16xf32>
    %309 = vector.extract_strided_slice %308 {offsets = [0, 0], sizes = [8, 4], strides = [1, 1]} : vector<8x16xf32> to vector<8x4xf32>
    %310 = arith.negf %309 : vector<8x4xf32>
    %311 = math.exp %310 : vector<8x4xf32>
    %cst_93 = arith.constant 1.000000e+00 : f32
    %312 = vector.broadcast %cst_93 : f32 to vector<8x4xf32>
    %313 = arith.addf %312, %311 : vector<8x4xf32>
    %314 = arith.divf %312, %313 : vector<8x4xf32>
    %315 = vector.extract_strided_slice %308 {offsets = [0, 4], sizes = [8, 4], strides = [1, 1]} : vector<8x16xf32> to vector<8x4xf32>
    %316 = arith.negf %315 : vector<8x4xf32>
    %317 = math.exp %316 : vector<8x4xf32>
    %cst_94 = arith.constant 1.000000e+00 : f32
    %318 = vector.broadcast %cst_94 : f32 to vector<8x4xf32>
    %319 = arith.addf %318, %317 : vector<8x4xf32>
    %320 = arith.divf %318, %319 : vector<8x4xf32>
    %321 = vector.extract_strided_slice %308 {offsets = [0, 8], sizes = [8, 4], strides = [1, 1]} : vector<8x16xf32> to vector<8x4xf32>
    %322 = math.tanh %321 : vector<8x4xf32>
    %323 = vector.extract_strided_slice %308 {offsets = [0, 12], sizes = [8, 4], strides = [1, 1]} : vector<8x16xf32> to vector<8x4xf32>
    %324 = arith.negf %323 : vector<8x4xf32>
    %325 = math.exp %324 : vector<8x4xf32>
    %cst_95 = arith.constant 1.000000e+00 : f32
    %326 = vector.broadcast %cst_95 : f32 to vector<8x4xf32>
    %327 = arith.addf %326, %325 : vector<8x4xf32>
    %328 = arith.divf %326, %327 : vector<8x4xf32>
    %329 = arith.mulf %320, %298 : vector<8x4xf32>
    %330 = arith.mulf %314, %322 : vector<8x4xf32>
    %331 = arith.addf %329, %330 : vector<8x4xf32>
    %332 = math.tanh %331 : vector<8x4xf32>
    %333 = arith.mulf %328, %332 : vector<8x4xf32>
    %334 = vector.shape_cast %333 : vector<8x4xf32> to vector<1x8x4xf32>
    %c7_96 = arith.constant 7 : index
    %c0_97 = arith.constant 0 : index
    %c0_98 = arith.constant 0 : index
    %335 = vector.load %arg9[%c7_96, %c0_97, %c0_98] : memref<8x8x4xf32, #tpu.memory_space<vmem>>, vector<1x8x4xf32>
    tpu.vector_store %arg9[%c7_96, %c0_97, %c0_98], %334 {strides = array<i32>} : memref<8x8x4xf32, #tpu.memory_space<vmem>>, vector<1x8x4xf32>,
    %336 = arith.truncf %333 : vector<8x4xf32> to vector<8x4xbf16>
    %c0_99 = arith.constant 0 : index
    %c0_100 = arith.constant 0 : index
    %337 = vector.load %arg7[%c0_99, %c0_100] : memref<4x16xbf16, #tpu.memory_space<vmem>>, vector<4x16xbf16>
    %cst_101 = arith.constant dense<0.000000e+00> : vector<8x16xf32>
    %338 = tpu.matmul %336, %337, %cst_101 {dimension_numbers = #tpu.dot_dimension_numbers<[1], [0], [0], [1], [0, 0, 1, 1], [], []>} : vector<8x4xbf16>, vector<4x16xbf16>, vector<8x16xf32> -> vector<8x16xf32>
    %339 = vector.broadcast %2 : vector<1x16xf32> to vector<8x16xf32>
    %340 = arith.addf %338, %339 : vector<8x16xf32>
    %341 = vector.extract_strided_slice %340 {offsets = [0, 0], sizes = [8, 4], strides = [1, 1]} : vector<8x16xf32> to vector<8x4xf32>
    %342 = arith.negf %341 : vector<8x4xf32>
    %343 = math.exp %342 : vector<8x4xf32>
    %cst_102 = arith.constant 1.000000e+00 : f32
    %344 = vector.broadcast %cst_102 : f32 to vector<8x4xf32>
    %345 = arith.addf %344, %343 : vector<8x4xf32>
    %346 = arith.divf %344, %345 : vector<8x4xf32>
    %347 = vector.extract_strided_slice %340 {offsets = [0, 4], sizes = [8, 4], strides = [1, 1]} : vector<8x16xf32> to vector<8x4xf32>
    %348 = arith.negf %347 : vector<8x4xf32>
    %349 = math.exp %348 : vector<8x4xf32>
    %cst_103 = arith.constant 1.000000e+00 : f32
    %350 = vector.broadcast %cst_103 : f32 to vector<8x4xf32>
    %351 = arith.addf %350, %349 : vector<8x4xf32>
    %352 = arith.divf %350, %351 : vector<8x4xf32>
    %353 = vector.extract_strided_slice %340 {offsets = [0, 8], sizes = [8, 4], strides = [1, 1]} : vector<8x16xf32> to vector<8x4xf32>
    %354 = math.tanh %353 : vector<8x4xf32>
    %355 = vector.extract_strided_slice %340 {offsets = [0, 12], sizes = [8, 4], strides = [1, 1]} : vector<8x16xf32> to vector<8x4xf32>
    %356 = arith.negf %355 : vector<8x4xf32>
    %357 = math.exp %356 : vector<8x4xf32>
    %cst_104 = arith.constant 1.000000e+00 : f32
    %358 = vector.broadcast %cst_104 : f32 to vector<8x4xf32>
    %359 = arith.addf %358, %357 : vector<8x4xf32>
    %360 = arith.divf %358, %359 : vector<8x4xf32>
    %361 = arith.mulf %352, %331 : vector<8x4xf32>
    %362 = arith.mulf %346, %354 : vector<8x4xf32>
    %363 = arith.addf %361, %362 : vector<8x4xf32>
    %364 = math.tanh %363 : vector<8x4xf32>
    %365 = arith.mulf %360, %364 : vector<8x4xf32>
    %366 = vector.shape_cast %365 : vector<8x4xf32> to vector<1x8x4xf32>
    %c6_105 = arith.constant 6 : index
    %c0_106 = arith.constant 0 : index
    %c0_107 = arith.constant 0 : index
    %367 = vector.load %arg9[%c6_105, %c0_106, %c0_107] : memref<8x8x4xf32, #tpu.memory_space<vmem>>, vector<1x8x4xf32>
    tpu.vector_store %arg9[%c6_105, %c0_106, %c0_107], %366 {strides = array<i32>} : memref<8x8x4xf32, #tpu.memory_space<vmem>>, vector<1x8x4xf32>,
    %368 = arith.truncf %365 : vector<8x4xf32> to vector<8x4xbf16>
    %c0_108 = arith.constant 0 : index
    %c0_109 = arith.constant 0 : index
    %369 = vector.load %arg7[%c0_108, %c0_109] : memref<4x16xbf16, #tpu.memory_space<vmem>>, vector<4x16xbf16>
    %cst_110 = arith.constant dense<0.000000e+00> : vector<8x16xf32>
    %370 = tpu.matmul %368, %369, %cst_110 {dimension_numbers = #tpu.dot_dimension_numbers<[1], [0], [0], [1], [0, 0, 1, 1], [], []>} : vector<8x4xbf16>, vector<4x16xbf16>, vector<8x16xf32> -> vector<8x16xf32>
    %371 = vector.broadcast %2 : vector<1x16xf32> to vector<8x16xf32>
    %372 = arith.addf %370, %371 : vector<8x16xf32>
    %373 = vector.extract_strided_slice %372 {offsets = [0, 0], sizes = [8, 4], strides = [1, 1]} : vector<8x16xf32> to vector<8x4xf32>
    %374 = arith.negf %373 : vector<8x4xf32>
    %375 = math.exp %374 : vector<8x4xf32>
    %cst_111 = arith.constant 1.000000e+00 : f32
    %376 = vector.broadcast %cst_111 : f32 to vector<8x4xf32>
    %377 = arith.addf %376, %375 : vector<8x4xf32>
    %378 = arith.divf %376, %377 : vector<8x4xf32>
    %379 = vector.extract_strided_slice %372 {offsets = [0, 4], sizes = [8, 4], strides = [1, 1]} : vector<8x16xf32> to vector<8x4xf32>
    %380 = arith.negf %379 : vector<8x4xf32>
    %381 = math.exp %380 : vector<8x4xf32>
    %cst_112 = arith.constant 1.000000e+00 : f32
    %382 = vector.broadcast %cst_112 : f32 to vector<8x4xf32>
    %383 = arith.addf %382, %381 : vector<8x4xf32>
    %384 = arith.divf %382, %383 : vector<8x4xf32>
    %385 = vector.extract_strided_slice %372 {offsets = [0, 8], sizes = [8, 4], strides = [1, 1]} : vector<8x16xf32> to vector<8x4xf32>
    %386 = math.tanh %385 : vector<8x4xf32>
    %387 = vector.extract_strided_slice %372 {offsets = [0, 12], sizes = [8, 4], strides = [1, 1]} : vector<8x16xf32> to vector<8x4xf32>
    %388 = arith.negf %387 : vector<8x4xf32>
    %389 = math.exp %388 : vector<8x4xf32>
    %cst_113 = arith.constant 1.000000e+00 : f32
    %390 = vector.broadcast %cst_113 : f32 to vector<8x4xf32>
    %391 = arith.addf %390, %389 : vector<8x4xf32>
    %392 = arith.divf %390, %391 : vector<8x4xf32>
    %393 = arith.mulf %384, %363 : vector<8x4xf32>
    %394 = arith.mulf %378, %386 : vector<8x4xf32>
    %395 = arith.addf %393, %394 : vector<8x4xf32>
    %396 = math.tanh %395 : vector<8x4xf32>
    %397 = arith.mulf %392, %396 : vector<8x4xf32>
    %398 = vector.shape_cast %397 : vector<8x4xf32> to vector<1x8x4xf32>
    %c5_114 = arith.constant 5 : index
    %c0_115 = arith.constant 0 : index
    %c0_116 = arith.constant 0 : index
    %399 = vector.load %arg9[%c5_114, %c0_115, %c0_116] : memref<8x8x4xf32, #tpu.memory_space<vmem>>, vector<1x8x4xf32>
    tpu.vector_store %arg9[%c5_114, %c0_115, %c0_116], %398 {strides = array<i32>} : memref<8x8x4xf32, #tpu.memory_space<vmem>>, vector<1x8x4xf32>,
    %400 = arith.truncf %397 : vector<8x4xf32> to vector<8x4xbf16>
    %c0_117 = arith.constant 0 : index
    %c0_118 = arith.constant 0 : index
    %401 = vector.load %arg7[%c0_117, %c0_118] : memref<4x16xbf16, #tpu.memory_space<vmem>>, vector<4x16xbf16>
    %cst_119 = arith.constant dense<0.000000e+00> : vector<8x16xf32>
    %402 = tpu.matmul %400, %401, %cst_119 {dimension_numbers = #tpu.dot_dimension_numbers<[1], [0], [0], [1], [0, 0, 1, 1], [], []>} : vector<8x4xbf16>, vector<4x16xbf16>, vector<8x16xf32> -> vector<8x16xf32>
    %403 = vector.broadcast %2 : vector<1x16xf32> to vector<8x16xf32>
    %404 = arith.addf %402, %403 : vector<8x16xf32>
    %405 = vector.extract_strided_slice %404 {offsets = [0, 0], sizes = [8, 4], strides = [1, 1]} : vector<8x16xf32> to vector<8x4xf32>
    %406 = arith.negf %405 : vector<8x4xf32>
    %407 = math.exp %406 : vector<8x4xf32>
    %cst_120 = arith.constant 1.000000e+00 : f32
    %408 = vector.broadcast %cst_120 : f32 to vector<8x4xf32>
    %409 = arith.addf %408, %407 : vector<8x4xf32>
    %410 = arith.divf %408, %409 : vector<8x4xf32>
    %411 = vector.extract_strided_slice %404 {offsets = [0, 4], sizes = [8, 4], strides = [1, 1]} : vector<8x16xf32> to vector<8x4xf32>
    %412 = arith.negf %411 : vector<8x4xf32>
    %413 = math.exp %412 : vector<8x4xf32>
    %cst_121 = arith.constant 1.000000e+00 : f32
    %414 = vector.broadcast %cst_121 : f32 to vector<8x4xf32>
    %415 = arith.addf %414, %413 : vector<8x4xf32>
    %416 = arith.divf %414, %415 : vector<8x4xf32>
    %417 = vector.extract_strided_slice %404 {offsets = [0, 8], sizes = [8, 4], strides = [1, 1]} : vector<8x16xf32> to vector<8x4xf32>
    %418 = math.tanh %417 : vector<8x4xf32>
    %419 = vector.extract_strided_slice %404 {offsets = [0, 12], sizes = [8, 4], strides = [1, 1]} : vector<8x16xf32> to vector<8x4xf32>
    %420 = arith.negf %419 : vector<8x4xf32>
    %421 = math.exp %420 : vector<8x4xf32>
    %cst_122 = arith.constant 1.000000e+00 : f32
    %422 = vector.broadcast %cst_122 : f32 to vector<8x4xf32>
    %423 = arith.addf %422, %421 : vector<8x4xf32>
    %424 = arith.divf %422, %423 : vector<8x4xf32>
    %425 = arith.mulf %416, %395 : vector<8x4xf32>
    %426 = arith.mulf %410, %418 : vector<8x4xf32>
    %427 = arith.addf %425, %426 : vector<8x4xf32>
    %428 = math.tanh %427 : vector<8x4xf32>
    %429 = arith.mulf %424, %428 : vector<8x4xf32>
    %430 = vector.shape_cast %429 : vector<8x4xf32> to vector<1x8x4xf32>
    %c4_123 = arith.constant 4 : index
    %c0_124 = arith.constant 0 : index
    %c0_125 = arith.constant 0 : index
    %431 = vector.load %arg9[%c4_123, %c0_124, %c0_125] : memref<8x8x4xf32, #tpu.memory_space<vmem>>, vector<1x8x4xf32>
    tpu.vector_store %arg9[%c4_123, %c0_124, %c0_125], %430 {strides = array<i32>} : memref<8x8x4xf32, #tpu.memory_space<vmem>>, vector<1x8x4xf32>,
    %432 = arith.truncf %429 : vector<8x4xf32> to vector<8x4xbf16>
    %c0_126 = arith.constant 0 : index
    %c0_127 = arith.constant 0 : index
    %433 = vector.load %arg7[%c0_126, %c0_127] : memref<4x16xbf16, #tpu.memory_space<vmem>>, vector<4x16xbf16>
    %cst_128 = arith.constant dense<0.000000e+00> : vector<8x16xf32>
    %434 = tpu.matmul %432, %433, %cst_128 {dimension_numbers = #tpu.dot_dimension_numbers<[1], [0], [0], [1], [0, 0, 1, 1], [], []>} : vector<8x4xbf16>, vector<4x16xbf16>, vector<8x16xf32> -> vector<8x16xf32>
    %435 = vector.broadcast %2 : vector<1x16xf32> to vector<8x16xf32>
    %436 = arith.addf %434, %435 : vector<8x16xf32>
    %437 = vector.extract_strided_slice %436 {offsets = [0, 0], sizes = [8, 4], strides = [1, 1]} : vector<8x16xf32> to vector<8x4xf32>
    %438 = arith.negf %437 : vector<8x4xf32>
    %439 = math.exp %438 : vector<8x4xf32>
    %cst_129 = arith.constant 1.000000e+00 : f32
    %440 = vector.broadcast %cst_129 : f32 to vector<8x4xf32>
    %441 = arith.addf %440, %439 : vector<8x4xf32>
    %442 = arith.divf %440, %441 : vector<8x4xf32>
    %443 = vector.extract_strided_slice %436 {offsets = [0, 4], sizes = [8, 4], strides = [1, 1]} : vector<8x16xf32> to vector<8x4xf32>
    %444 = arith.negf %443 : vector<8x4xf32>
    %445 = math.exp %444 : vector<8x4xf32>
    %cst_130 = arith.constant 1.000000e+00 : f32
    %446 = vector.broadcast %cst_130 : f32 to vector<8x4xf32>
    %447 = arith.addf %446, %445 : vector<8x4xf32>
    %448 = arith.divf %446, %447 : vector<8x4xf32>
    %449 = vector.extract_strided_slice %436 {offsets = [0, 8], sizes = [8, 4], strides = [1, 1]} : vector<8x16xf32> to vector<8x4xf32>
    %450 = math.tanh %449 : vector<8x4xf32>
    %451 = vector.extract_strided_slice %436 {offsets = [0, 12], sizes = [8, 4], strides = [1, 1]} : vector<8x16xf32> to vector<8x4xf32>
    %452 = arith.negf %451 : vector<8x4xf32>
    %453 = math.exp %452 : vector<8x4xf32>
    %cst_131 = arith.constant 1.000000e+00 : f32
    %454 = vector.broadcast %cst_131 : f32 to vector<8x4xf32>
    %455 = arith.addf %454, %453 : vector<8x4xf32>
    %456 = arith.divf %454, %455 : vector<8x4xf32>
    %457 = arith.mulf %448, %427 : vector<8x4xf32>
    %458 = arith.mulf %442, %450 : vector<8x4xf32>
    %459 = arith.addf %457, %458 : vector<8x4xf32>
    %460 = math.tanh %459 : vector<8x4xf32>
    %461 = arith.mulf %456, %460 : vector<8x4xf32>
    %462 = vector.shape_cast %461 : vector<8x4xf32> to vector<1x8x4xf32>
    %c3_132 = arith.constant 3 : index
    %c0_133 = arith.constant 0 : index
    %c0_134 = arith.constant 0 : index
    %463 = vector.load %arg9[%c3_132, %c0_133, %c0_134] : memref<8x8x4xf32, #tpu.memory_space<vmem>>, vector<1x8x4xf32>
    tpu.vector_store %arg9[%c3_132, %c0_133, %c0_134], %462 {strides = array<i32>} : memref<8x8x4xf32, #tpu.memory_space<vmem>>, vector<1x8x4xf32>,
    %464 = arith.truncf %461 : vector<8x4xf32> to vector<8x4xbf16>
    %c0_135 = arith.constant 0 : index
    %c0_136 = arith.constant 0 : index
    %465 = vector.load %arg7[%c0_135, %c0_136] : memref<4x16xbf16, #tpu.memory_space<vmem>>, vector<4x16xbf16>
    %cst_137 = arith.constant dense<0.000000e+00> : vector<8x16xf32>
    %466 = tpu.matmul %464, %465, %cst_137 {dimension_numbers = #tpu.dot_dimension_numbers<[1], [0], [0], [1], [0, 0, 1, 1], [], []>} : vector<8x4xbf16>, vector<4x16xbf16>, vector<8x16xf32> -> vector<8x16xf32>
    %467 = vector.broadcast %2 : vector<1x16xf32> to vector<8x16xf32>
    %468 = arith.addf %466, %467 : vector<8x16xf32>
    %469 = vector.extract_strided_slice %468 {offsets = [0, 0], sizes = [8, 4], strides = [1, 1]} : vector<8x16xf32> to vector<8x4xf32>
    %470 = arith.negf %469 : vector<8x4xf32>
    %471 = math.exp %470 : vector<8x4xf32>
    %cst_138 = arith.constant 1.000000e+00 : f32
    %472 = vector.broadcast %cst_138 : f32 to vector<8x4xf32>
    %473 = arith.addf %472, %471 : vector<8x4xf32>
    %474 = arith.divf %472, %473 : vector<8x4xf32>
    %475 = vector.extract_strided_slice %468 {offsets = [0, 4], sizes = [8, 4], strides = [1, 1]} : vector<8x16xf32> to vector<8x4xf32>
    %476 = arith.negf %475 : vector<8x4xf32>
    %477 = math.exp %476 : vector<8x4xf32>
    %cst_139 = arith.constant 1.000000e+00 : f32
    %478 = vector.broadcast %cst_139 : f32 to vector<8x4xf32>
    %479 = arith.addf %478, %477 : vector<8x4xf32>
    %480 = arith.divf %478, %479 : vector<8x4xf32>
    %481 = vector.extract_strided_slice %468 {offsets = [0, 8], sizes = [8, 4], strides = [1, 1]} : vector<8x16xf32> to vector<8x4xf32>
    %482 = math.tanh %481 : vector<8x4xf32>
    %483 = vector.extract_strided_slice %468 {offsets = [0, 12], sizes = [8, 4], strides = [1, 1]} : vector<8x16xf32> to vector<8x4xf32>
    %484 = arith.negf %483 : vector<8x4xf32>
    %485 = math.exp %484 : vector<8x4xf32>
    %cst_140 = arith.constant 1.000000e+00 : f32
    %486 = vector.broadcast %cst_140 : f32 to vector<8x4xf32>
    %487 = arith.addf %486, %485 : vector<8x4xf32>
    %488 = arith.divf %486, %487 : vector<8x4xf32>
    %489 = arith.mulf %480, %459 : vector<8x4xf32>
    %490 = arith.mulf %474, %482 : vector<8x4xf32>
    %491 = arith.addf %489, %490 : vector<8x4xf32>
    %492 = math.tanh %491 : vector<8x4xf32>
    %493 = arith.mulf %488, %492 : vector<8x4xf32>
    %494 = vector.shape_cast %493 : vector<8x4xf32> to vector<1x8x4xf32>
    %c2_141 = arith.constant 2 : index
    %c0_142 = arith.constant 0 : index
    %c0_143 = arith.constant 0 : index
    %495 = vector.load %arg9[%c2_141, %c0_142, %c0_143] : memref<8x8x4xf32, #tpu.memory_space<vmem>>, vector<1x8x4xf32>
    tpu.vector_store %arg9[%c2_141, %c0_142, %c0_143], %494 {strides = array<i32>} : memref<8x8x4xf32, #tpu.memory_space<vmem>>, vector<1x8x4xf32>,
    %496 = arith.truncf %493 : vector<8x4xf32> to vector<8x4xbf16>
    %c0_144 = arith.constant 0 : index
    %c0_145 = arith.constant 0 : index
    %497 = vector.load %arg7[%c0_144, %c0_145] : memref<4x16xbf16, #tpu.memory_space<vmem>>, vector<4x16xbf16>
    %cst_146 = arith.constant dense<0.000000e+00> : vector<8x16xf32>
    %498 = tpu.matmul %496, %497, %cst_146 {dimension_numbers = #tpu.dot_dimension_numbers<[1], [0], [0], [1], [0, 0, 1, 1], [], []>} : vector<8x4xbf16>, vector<4x16xbf16>, vector<8x16xf32> -> vector<8x16xf32>
    %499 = vector.broadcast %2 : vector<1x16xf32> to vector<8x16xf32>
    %500 = arith.addf %498, %499 : vector<8x16xf32>
    %501 = vector.extract_strided_slice %500 {offsets = [0, 0], sizes = [8, 4], strides = [1, 1]} : vector<8x16xf32> to vector<8x4xf32>
    %502 = arith.negf %501 : vector<8x4xf32>
    %503 = math.exp %502 : vector<8x4xf32>
    %cst_147 = arith.constant 1.000000e+00 : f32
    %504 = vector.broadcast %cst_147 : f32 to vector<8x4xf32>
    %505 = arith.addf %504, %503 : vector<8x4xf32>
    %506 = arith.divf %504, %505 : vector<8x4xf32>
    %507 = vector.extract_strided_slice %500 {offsets = [0, 4], sizes = [8, 4], strides = [1, 1]} : vector<8x16xf32> to vector<8x4xf32>
    %508 = arith.negf %507 : vector<8x4xf32>
    %509 = math.exp %508 : vector<8x4xf32>
    %cst_148 = arith.constant 1.000000e+00 : f32
    %510 = vector.broadcast %cst_148 : f32 to vector<8x4xf32>
    %511 = arith.addf %510, %509 : vector<8x4xf32>
    %512 = arith.divf %510, %511 : vector<8x4xf32>
    %513 = vector.extract_strided_slice %500 {offsets = [0, 8], sizes = [8, 4], strides = [1, 1]} : vector<8x16xf32> to vector<8x4xf32>
    %514 = math.tanh %513 : vector<8x4xf32>
    %515 = vector.extract_strided_slice %500 {offsets = [0, 12], sizes = [8, 4], strides = [1, 1]} : vector<8x16xf32> to vector<8x4xf32>
    %516 = arith.negf %515 : vector<8x4xf32>
    %517 = math.exp %516 : vector<8x4xf32>
    %cst_149 = arith.constant 1.000000e+00 : f32
    %518 = vector.broadcast %cst_149 : f32 to vector<8x4xf32>
    %519 = arith.addf %518, %517 : vector<8x4xf32>
    %520 = arith.divf %518, %519 : vector<8x4xf32>
    %521 = arith.mulf %512, %491 : vector<8x4xf32>
    %522 = arith.mulf %506, %514 : vector<8x4xf32>
    %523 = arith.addf %521, %522 : vector<8x4xf32>
    %524 = math.tanh %523 : vector<8x4xf32>
    %525 = arith.mulf %520, %524 : vector<8x4xf32>
    %526 = vector.shape_cast %525 : vector<8x4xf32> to vector<1x8x4xf32>
    %c1_150 = arith.constant 1 : index
    %c0_151 = arith.constant 0 : index
    %c0_152 = arith.constant 0 : index
    %527 = vector.load %arg9[%c1_150, %c0_151, %c0_152] : memref<8x8x4xf32, #tpu.memory_space<vmem>>, vector<1x8x4xf32>
    tpu.vector_store %arg9[%c1_150, %c0_151, %c0_152], %526 {strides = array<i32>} : memref<8x8x4xf32, #tpu.memory_space<vmem>>, vector<1x8x4xf32>,
    return
  }
  func.func @transform_0(%arg0: i32) -> (i32, i32, i32) {
    %c0_i32 = arith.constant 0 : i32
    %c0_i32_0 = arith.constant 0 : i32
    %c0_i32_1 = arith.constant 0 : i32
    return %c0_i32, %arg0, %c0_i32_0 : i32, i32, i32
  }
  func.func @transform_1(%arg0: i32) -> (i32, i32) {
    %c0_i32 = arith.constant 0 : i32
    %c0_i32_0 = arith.constant 0 : i32
    %c0_i32_1 = arith.constant 0 : i32
    return %c0_i32, %c0_i32_0 : i32, i32
  }
  func.func @transform_2(%arg0: i32) -> (i32, i32) {
    %c0_i32 = arith.constant 0 : i32
    %c0_i32_0 = arith.constant 0 : i32
    %c0_i32_1 = arith.constant 0 : i32
    return %c0_i32, %c0_i32_0 : i32, i32
  }
  func.func @transform_3(%arg0: i32) -> (i32, i32) {
    %c0_i32 = arith.constant 0 : i32
    %c0_i32_0 = arith.constant 0 : i32
    %c0_i32_1 = arith.constant 0 : i32
    return %c0_i32, %c0_i32_0 : i32, i32
  }
  func.func @transform_4(%arg0: i32) -> (i32, i32) {
    %c0_i32 = arith.constant 0 : i32
    %c0_i32_0 = arith.constant 0 : i32
    %c0_i32_1 = arith.constant 0 : i32
    return %c0_i32, %c0_i32_0 : i32, i32
  }
  func.func @transform_5(%arg0: i32) -> (i32, i32) {
    %c0_i32 = arith.constant 0 : i32
    %c0_i32_0 = arith.constant 0 : i32
    %c0_i32_1 = arith.constant 0 : i32
    return %c0_i32, %c0_i32_0 : i32, i32
  }
  func.func @transform_6(%arg0: i32) -> (i32, i32) {
    %c0_i32 = arith.constant 0 : i32
    %c0_i32_0 = arith.constant 0 : i32
    %c0_i32_1 = arith.constant 0 : i32
    return %c0_i32, %c0_i32_0 : i32, i32
  }
  func.func @transform_7(%arg0: i32) -> (i32, i32) {
    %c0_i32 = arith.constant 0 : i32
    %c0_i32_0 = arith.constant 0 : i32
    %c0_i32_1 = arith.constant 0 : i32
    return %c0_i32, %c0_i32_0 : i32, i32
  }
  func.func @transform_8(%arg0: i32) -> (i32, i32, i32) {
    %c0_i32 = arith.constant 0 : i32
    %c0_i32_0 = arith.constant 0 : i32
    %c0_i32_1 = arith.constant 0 : i32
    return %c0_i32, %arg0, %c0_i32_0 : i32, i32, i32
  }
}

module attributes {stable_mosaic.version = 11 : i64} {
  func.func @lstm_ae_kernel(%arg0: i32, %arg1: memref<8x8x8xbf16, #tpu.memory_space<vmem>>, %arg2: memref<8x128xbf16, #tpu.memory_space<vmem>>, %arg3: memref<32x128xbf16, #tpu.memory_space<vmem>>, %arg4: memref<1x128xf32, #tpu.memory_space<vmem>>, %arg5: memref<32x16xbf16, #tpu.memory_space<vmem>>, %arg6: memref<1x16xf32, #tpu.memory_space<vmem>>, %arg7: memref<4x16xbf16, #tpu.memory_space<vmem>>, %arg8: memref<1x16xf32, #tpu.memory_space<vmem>>, %arg9: memref<8x8x4xf32, #tpu.memory_space<vmem>>, %arg10: memref<8x8x128xbf16, #tpu.memory_space<vmem>>) attributes {dimension_semantics = [#tpu.dimension_semantics<parallel>], iteration_bounds = array<i64: 1>, scalar_prefetch = 0 : i64, scratch_operands = 1 : i64, tpu.core_type = #tpu.core_type<tc>, window_params = [{transform_indices = @transform_0, window_bounds = array<i64: 8, 8, 8>}, {pipeline_mode = #tpu.pipeline_mode<synchronous>, transform_indices = @transform_1, window_bounds = array<i64: 8, 128>}, {pipeline_mode = #tpu.pipeline_mode<synchronous>, transform_indices = @transform_2, window_bounds = array<i64: 32, 128>}, {pipeline_mode = #tpu.pipeline_mode<synchronous>, transform_indices = @transform_3, window_bounds = array<i64: 1, 128>}, {pipeline_mode = #tpu.pipeline_mode<synchronous>, transform_indices = @transform_4, window_bounds = array<i64: 32, 16>}, {pipeline_mode = #tpu.pipeline_mode<synchronous>, transform_indices = @transform_5, window_bounds = array<i64: 1, 16>}, {pipeline_mode = #tpu.pipeline_mode<synchronous>, transform_indices = @transform_6, window_bounds = array<i64: 4, 16>}, {pipeline_mode = #tpu.pipeline_mode<synchronous>, transform_indices = @transform_7, window_bounds = array<i64: 1, 16>}, {transform_indices = @transform_8, window_bounds = array<i64: 8, 8, 4>}]} {
    %c0 = arith.constant 0 : index
    %c0_0 = arith.constant 0 : index
    %0 = vector.load %arg4[%c0, %c0_0] : memref<1x128xf32, #tpu.memory_space<vmem>>, vector<1x128xf32>
    %c0_1 = arith.constant 0 : index
    %c0_2 = arith.constant 0 : index
    %1 = vector.load %arg6[%c0_1, %c0_2] : memref<1x16xf32, #tpu.memory_space<vmem>>, vector<1x16xf32>
    %c0_3 = arith.constant 0 : index
    %c0_4 = arith.constant 0 : index
    %2 = vector.load %arg8[%c0_3, %c0_4] : memref<1x16xf32, #tpu.memory_space<vmem>>, vector<1x16xf32>
    %cst = arith.constant 0.000000e+00 : f32
    %3 = vector.broadcast %cst : f32 to vector<8x32xf32>
    %cst_5 = arith.constant 0.000000e+00 : f32
    %4 = vector.broadcast %cst_5 : f32 to vector<8x32xf32>
    %c0_6 = arith.constant 0 : index
    %c0_7 = arith.constant 0 : index
    %c0_8 = arith.constant 0 : index
    %5 = vector.load %arg1[%c0_6, %c0_7, %c0_8] : memref<8x8x8xbf16, #tpu.memory_space<vmem>>, vector<8x8x8xbf16>
    %6 = vector.shape_cast %5 : vector<8x8x8xbf16> to vector<64x8xbf16>
    %c0_9 = arith.constant 0 : index
    %c0_10 = arith.constant 0 : index
    %7 = vector.load %arg2[%c0_9, %c0_10] : memref<8x128xbf16, #tpu.memory_space<vmem>>, vector<8x128xbf16>
    %cst_11 = arith.constant dense<0.000000e+00> : vector<64x128xf32>
    %8 = tpu.matmul %6, %7, %cst_11 {dimension_numbers = #tpu.dot_dimension_numbers<[1], [0], [0], [1], [0, 0, 1, 1], [], []>} : vector<64x8xbf16>, vector<8x128xbf16>, vector<64x128xf32> -> vector<64x128xf32>
    %9 = vector.broadcast %0 : vector<1x128xf32> to vector<64x128xf32>
    %10 = arith.addf %8, %9 : vector<64x128xf32>
    %11 = vector.shape_cast %10 : vector<64x128xf32> to vector<8x8x128xf32>
    %12 = arith.truncf %11 : vector<8x8x128xf32> to vector<8x8x128xbf16>
    %c0_12 = arith.constant 0 : index
    %c0_13 = arith.constant 0 : index
    %c0_14 = arith.constant 0 : index
    %13 = vector.load %arg10[%c0_12, %c0_13, %c0_14] : memref<8x8x128xbf16, #tpu.memory_space<vmem>>, vector<8x8x128xbf16>
    tpu.vector_store %arg10[%c0_12, %c0_13, %c0_14], %12 {strides = array<i32>} : memref<8x8x128xbf16, #tpu.memory_space<vmem>>, vector<8x8x128xbf16>,
    %c0_15 = arith.constant 0 : index
    %c0_16 = arith.constant 0 : index
    %c0_17 = arith.constant 0 : index
    %14 = vector.load %arg10[%c0_15, %c0_16, %c0_17] : memref<8x8x128xbf16, #tpu.memory_space<vmem>>, vector<1x8x128xbf16>
    %15 = vector.shape_cast %14 : vector<1x8x128xbf16> to vector<8x128xbf16>
    %16 = arith.extf %15 : vector<8x128xbf16> to vector<8x128xf32>
    %17 = arith.truncf %3 : vector<8x32xf32> to vector<8x32xbf16>
    %c0_18 = arith.constant 0 : index
    %c0_19 = arith.constant 0 : index
    %18 = vector.load %arg3[%c0_18, %c0_19] : memref<32x128xbf16, #tpu.memory_space<vmem>>, vector<32x128xbf16>
    %cst_20 = arith.constant dense<0.000000e+00> : vector<8x128xf32>
    %19 = tpu.matmul %17, %18, %cst_20 {dimension_numbers = #tpu.dot_dimension_numbers<[1], [0], [0], [1], [0, 0, 1, 1], [], []>} : vector<8x32xbf16>, vector<32x128xbf16>, vector<8x128xf32> -> vector<8x128xf32>
    %20 = arith.addf %16, %19 : vector<8x128xf32>
    %21 = vector.extract_strided_slice %20 {offsets = [0, 0], sizes = [8, 32], strides = [1, 1]} : vector<8x128xf32> to vector<8x32xf32>
    %22 = arith.negf %21 : vector<8x32xf32>
    %23 = math.exp %22 : vector<8x32xf32>
    %cst_21 = arith.constant 1.000000e+00 : f32
    %24 = vector.broadcast %cst_21 : f32 to vector<8x32xf32>
    %25 = arith.addf %24, %23 : vector<8x32xf32>
    %26 = arith.divf %24, %25 : vector<8x32xf32>
    %27 = vector.extract_strided_slice %20 {offsets = [0, 32], sizes = [8, 32], strides = [1, 1]} : vector<8x128xf32> to vector<8x32xf32>
    %28 = arith.negf %27 : vector<8x32xf32>
    %29 = math.exp %28 : vector<8x32xf32>
    %cst_22 = arith.constant 1.000000e+00 : f32
    %30 = vector.broadcast %cst_22 : f32 to vector<8x32xf32>
    %31 = arith.addf %30, %29 : vector<8x32xf32>
    %32 = arith.divf %30, %31 : vector<8x32xf32>
    %33 = vector.extract_strided_slice %20 {offsets = [0, 64], sizes = [8, 32], strides = [1, 1]} : vector<8x128xf32> to vector<8x32xf32>
    %34 = math.tanh %33 : vector<8x32xf32>
    %35 = vector.extract_strided_slice %20 {offsets = [0, 96], sizes = [8, 32], strides = [1, 1]} : vector<8x128xf32> to vector<8x32xf32>
    %36 = arith.negf %35 : vector<8x32xf32>
    %37 = math.exp %36 : vector<8x32xf32>
    %cst_23 = arith.constant 1.000000e+00 : f32
    %38 = vector.broadcast %cst_23 : f32 to vector<8x32xf32>
    %39 = arith.addf %38, %37 : vector<8x32xf32>
    %40 = arith.divf %38, %39 : vector<8x32xf32>
    %41 = arith.mulf %32, %4 : vector<8x32xf32>
    %42 = arith.mulf %26, %34 : vector<8x32xf32>
    %43 = arith.addf %41, %42 : vector<8x32xf32>
    %44 = math.tanh %43 : vector<8x32xf32>
    %45 = arith.mulf %40, %44 : vector<8x32xf32>
    %c1 = arith.constant 1 : index
    %c0_24 = arith.constant 0 : index
    %c0_25 = arith.constant 0 : index
    %46 = vector.load %arg10[%c1, %c0_24, %c0_25] : memref<8x8x128xbf16, #tpu.memory_space<vmem>>, vector<1x8x128xbf16>
    %47 = vector.shape_cast %46 : vector<1x8x128xbf16> to vector<8x128xbf16>
    %48 = arith.extf %47 : vector<8x128xbf16> to vector<8x128xf32>
    %49 = arith.truncf %45 : vector<8x32xf32> to vector<8x32xbf16>
    %c0_26 = arith.constant 0 : index
    %c0_27 = arith.constant 0 : index
    %50 = vector.load %arg3[%c0_26, %c0_27] : memref<32x128xbf16, #tpu.memory_space<vmem>>, vector<32x128xbf16>
    %cst_28 = arith.constant dense<0.000000e+00> : vector<8x128xf32>
    %51 = tpu.matmul %49, %50, %cst_28 {dimension_numbers = #tpu.dot_dimension_numbers<[1], [0], [0], [1], [0, 0, 1, 1], [], []>} : vector<8x32xbf16>, vector<32x128xbf16>, vector<8x128xf32> -> vector<8x128xf32>
    %52 = arith.addf %48, %51 : vector<8x128xf32>
    %53 = vector.extract_strided_slice %52 {offsets = [0, 0], sizes = [8, 32], strides = [1, 1]} : vector<8x128xf32> to vector<8x32xf32>
    %54 = arith.negf %53 : vector<8x32xf32>
    %55 = math.exp %54 : vector<8x32xf32>
    %cst_29 = arith.constant 1.000000e+00 : f32
    %56 = vector.broadcast %cst_29 : f32 to vector<8x32xf32>
    %57 = arith.addf %56, %55 : vector<8x32xf32>
    %58 = arith.divf %56, %57 : vector<8x32xf32>
    %59 = vector.extract_strided_slice %52 {offsets = [0, 32], sizes = [8, 32], strides = [1, 1]} : vector<8x128xf32> to vector<8x32xf32>
    %60 = arith.negf %59 : vector<8x32xf32>
    %61 = math.exp %60 : vector<8x32xf32>
    %cst_30 = arith.constant 1.000000e+00 : f32
    %62 = vector.broadcast %cst_30 : f32 to vector<8x32xf32>
    %63 = arith.addf %62, %61 : vector<8x32xf32>
    %64 = arith.divf %62, %63 : vector<8x32xf32>
    %65 = vector.extract_strided_slice %52 {offsets = [0, 64], sizes = [8, 32], strides = [1, 1]} : vector<8x128xf32> to vector<8x32xf32>
    %66 = math.tanh %65 : vector<8x32xf32>
    %67 = vector.extract_strided_slice %52 {offsets = [0, 96], sizes = [8, 32], strides = [1, 1]} : vector<8x128xf32> to vector<8x32xf32>
    %68 = arith.negf %67 : vector<8x32xf32>
    %69 = math.exp %68 : vector<8x32xf32>
    %cst_31 = arith.constant 1.000000e+00 : f32
    %70 = vector.broadcast %cst_31 : f32 to vector<8x32xf32>
    %71 = arith.addf %70, %69 : vector<8x32xf32>
    %72 = arith.divf %70, %71 : vector<8x32xf32>
    %73 = arith.mulf %64, %43 : vector<8x32xf32>
    %74 = arith.mulf %58, %66 : vector<8x32xf32>
    %75 = arith.addf %73, %74 : vector<8x32xf32>
    %76 = math.tanh %75 : vector<8x32xf32>
    %77 = arith.mulf %72, %76 : vector<8x32xf32>
    %c2 = arith.constant 2 : index
    %c0_32 = arith.constant 0 : index
    %c0_33 = arith.constant 0 : index
    %78 = vector.load %arg10[%c2, %c0_32, %c0_33] : memref<8x8x128xbf16, #tpu.memory_space<vmem>>, vector<1x8x128xbf16>
    %79 = vector.shape_cast %78 : vector<1x8x128xbf16> to vector<8x128xbf16>
    %80 = arith.extf %79 : vector<8x128xbf16> to vector<8x128xf32>
    %81 = arith.truncf %77 : vector<8x32xf32> to vector<8x32xbf16>
    %c0_34 = arith.constant 0 : index
    %c0_35 = arith.constant 0 : index
    %82 = vector.load %arg3[%c0_34, %c0_35] : memref<32x128xbf16, #tpu.memory_space<vmem>>, vector<32x128xbf16>
    %cst_36 = arith.constant dense<0.000000e+00> : vector<8x128xf32>
    %83 = tpu.matmul %81, %82, %cst_36 {dimension_numbers = #tpu.dot_dimension_numbers<[1], [0], [0], [1], [0, 0, 1, 1], [], []>} : vector<8x32xbf16>, vector<32x128xbf16>, vector<8x128xf32> -> vector<8x128xf32>
    %84 = arith.addf %80, %83 : vector<8x128xf32>
    %85 = vector.extract_strided_slice %84 {offsets = [0, 0], sizes = [8, 32], strides = [1, 1]} : vector<8x128xf32> to vector<8x32xf32>
    %86 = arith.negf %85 : vector<8x32xf32>
    %87 = math.exp %86 : vector<8x32xf32>
    %cst_37 = arith.constant 1.000000e+00 : f32
    %88 = vector.broadcast %cst_37 : f32 to vector<8x32xf32>
    %89 = arith.addf %88, %87 : vector<8x32xf32>
    %90 = arith.divf %88, %89 : vector<8x32xf32>
    %91 = vector.extract_strided_slice %84 {offsets = [0, 32], sizes = [8, 32], strides = [1, 1]} : vector<8x128xf32> to vector<8x32xf32>
    %92 = arith.negf %91 : vector<8x32xf32>
    %93 = math.exp %92 : vector<8x32xf32>
    %cst_38 = arith.constant 1.000000e+00 : f32
    %94 = vector.broadcast %cst_38 : f32 to vector<8x32xf32>
    %95 = arith.addf %94, %93 : vector<8x32xf32>
    %96 = arith.divf %94, %95 : vector<8x32xf32>
    %97 = vector.extract_strided_slice %84 {offsets = [0, 64], sizes = [8, 32], strides = [1, 1]} : vector<8x128xf32> to vector<8x32xf32>
    %98 = math.tanh %97 : vector<8x32xf32>
    %99 = vector.extract_strided_slice %84 {offsets = [0, 96], sizes = [8, 32], strides = [1, 1]} : vector<8x128xf32> to vector<8x32xf32>
    %100 = arith.negf %99 : vector<8x32xf32>
    %101 = math.exp %100 : vector<8x32xf32>
    %cst_39 = arith.constant 1.000000e+00 : f32
    %102 = vector.broadcast %cst_39 : f32 to vector<8x32xf32>
    %103 = arith.addf %102, %101 : vector<8x32xf32>
    %104 = arith.divf %102, %103 : vector<8x32xf32>
    %105 = arith.mulf %96, %75 : vector<8x32xf32>
    %106 = arith.mulf %90, %98 : vector<8x32xf32>
    %107 = arith.addf %105, %106 : vector<8x32xf32>
    %108 = math.tanh %107 : vector<8x32xf32>
    %109 = arith.mulf %104, %108 : vector<8x32xf32>
    %c3 = arith.constant 3 : index
    %c0_40 = arith.constant 0 : index
    %c0_41 = arith.constant 0 : index
    %110 = vector.load %arg10[%c3, %c0_40, %c0_41] : memref<8x8x128xbf16, #tpu.memory_space<vmem>>, vector<1x8x128xbf16>
    %111 = vector.shape_cast %110 : vector<1x8x128xbf16> to vector<8x128xbf16>
    %112 = arith.extf %111 : vector<8x128xbf16> to vector<8x128xf32>
    %113 = arith.truncf %109 : vector<8x32xf32> to vector<8x32xbf16>
    %c0_42 = arith.constant 0 : index
    %c0_43 = arith.constant 0 : index
    %114 = vector.load %arg3[%c0_42, %c0_43] : memref<32x128xbf16, #tpu.memory_space<vmem>>, vector<32x128xbf16>
    %cst_44 = arith.constant dense<0.000000e+00> : vector<8x128xf32>
    %115 = tpu.matmul %113, %114, %cst_44 {dimension_numbers = #tpu.dot_dimension_numbers<[1], [0], [0], [1], [0, 0, 1, 1], [], []>} : vector<8x32xbf16>, vector<32x128xbf16>, vector<8x128xf32> -> vector<8x128xf32>
    %116 = arith.addf %112, %115 : vector<8x128xf32>
    %117 = vector.extract_strided_slice %116 {offsets = [0, 0], sizes = [8, 32], strides = [1, 1]} : vector<8x128xf32> to vector<8x32xf32>
    %118 = arith.negf %117 : vector<8x32xf32>
    %119 = math.exp %118 : vector<8x32xf32>
    %cst_45 = arith.constant 1.000000e+00 : f32
    %120 = vector.broadcast %cst_45 : f32 to vector<8x32xf32>
    %121 = arith.addf %120, %119 : vector<8x32xf32>
    %122 = arith.divf %120, %121 : vector<8x32xf32>
    %123 = vector.extract_strided_slice %116 {offsets = [0, 32], sizes = [8, 32], strides = [1, 1]} : vector<8x128xf32> to vector<8x32xf32>
    %124 = arith.negf %123 : vector<8x32xf32>
    %125 = math.exp %124 : vector<8x32xf32>
    %cst_46 = arith.constant 1.000000e+00 : f32
    %126 = vector.broadcast %cst_46 : f32 to vector<8x32xf32>
    %127 = arith.addf %126, %125 : vector<8x32xf32>
    %128 = arith.divf %126, %127 : vector<8x32xf32>
    %129 = vector.extract_strided_slice %116 {offsets = [0, 64], sizes = [8, 32], strides = [1, 1]} : vector<8x128xf32> to vector<8x32xf32>
    %130 = math.tanh %129 : vector<8x32xf32>
    %131 = vector.extract_strided_slice %116 {offsets = [0, 96], sizes = [8, 32], strides = [1, 1]} : vector<8x128xf32> to vector<8x32xf32>
    %132 = arith.negf %131 : vector<8x32xf32>
    %133 = math.exp %132 : vector<8x32xf32>
    %cst_47 = arith.constant 1.000000e+00 : f32
    %134 = vector.broadcast %cst_47 : f32 to vector<8x32xf32>
    %135 = arith.addf %134, %133 : vector<8x32xf32>
    %136 = arith.divf %134, %135 : vector<8x32xf32>
    %137 = arith.mulf %128, %107 : vector<8x32xf32>
    %138 = arith.mulf %122, %130 : vector<8x32xf32>
    %139 = arith.addf %137, %138 : vector<8x32xf32>
    %140 = math.tanh %139 : vector<8x32xf32>
    %141 = arith.mulf %136, %140 : vector<8x32xf32>
    %c4 = arith.constant 4 : index
    %c0_48 = arith.constant 0 : index
    %c0_49 = arith.constant 0 : index
    %142 = vector.load %arg10[%c4, %c0_48, %c0_49] : memref<8x8x128xbf16, #tpu.memory_space<vmem>>, vector<1x8x128xbf16>
    %143 = vector.shape_cast %142 : vector<1x8x128xbf16> to vector<8x128xbf16>
    %144 = arith.extf %143 : vector<8x128xbf16> to vector<8x128xf32>
    %145 = arith.truncf %141 : vector<8x32xf32> to vector<8x32xbf16>
    %c0_50 = arith.constant 0 : index
    %c0_51 = arith.constant 0 : index
    %146 = vector.load %arg3[%c0_50, %c0_51] : memref<32x128xbf16, #tpu.memory_space<vmem>>, vector<32x128xbf16>
    %cst_52 = arith.constant dense<0.000000e+00> : vector<8x128xf32>
    %147 = tpu.matmul %145, %146, %cst_52 {dimension_numbers = #tpu.dot_dimension_numbers<[1], [0], [0], [1], [0, 0, 1, 1], [], []>} : vector<8x32xbf16>, vector<32x128xbf16>, vector<8x128xf32> -> vector<8x128xf32>
    %148 = arith.addf %144, %147 : vector<8x128xf32>
    %149 = vector.extract_strided_slice %148 {offsets = [0, 0], sizes = [8, 32], strides = [1, 1]} : vector<8x128xf32> to vector<8x32xf32>
    %150 = arith.negf %149 : vector<8x32xf32>
    %151 = math.exp %150 : vector<8x32xf32>
    %cst_53 = arith.constant 1.000000e+00 : f32
    %152 = vector.broadcast %cst_53 : f32 to vector<8x32xf32>
    %153 = arith.addf %152, %151 : vector<8x32xf32>
    %154 = arith.divf %152, %153 : vector<8x32xf32>
    %155 = vector.extract_strided_slice %148 {offsets = [0, 32], sizes = [8, 32], strides = [1, 1]} : vector<8x128xf32> to vector<8x32xf32>
    %156 = arith.negf %155 : vector<8x32xf32>
    %157 = math.exp %156 : vector<8x32xf32>
    %cst_54 = arith.constant 1.000000e+00 : f32
    %158 = vector.broadcast %cst_54 : f32 to vector<8x32xf32>
    %159 = arith.addf %158, %157 : vector<8x32xf32>
    %160 = arith.divf %158, %159 : vector<8x32xf32>
    %161 = vector.extract_strided_slice %148 {offsets = [0, 64], sizes = [8, 32], strides = [1, 1]} : vector<8x128xf32> to vector<8x32xf32>
    %162 = math.tanh %161 : vector<8x32xf32>
    %163 = vector.extract_strided_slice %148 {offsets = [0, 96], sizes = [8, 32], strides = [1, 1]} : vector<8x128xf32> to vector<8x32xf32>
    %164 = arith.negf %163 : vector<8x32xf32>
    %165 = math.exp %164 : vector<8x32xf32>
    %cst_55 = arith.constant 1.000000e+00 : f32
    %166 = vector.broadcast %cst_55 : f32 to vector<8x32xf32>
    %167 = arith.addf %166, %165 : vector<8x32xf32>
    %168 = arith.divf %166, %167 : vector<8x32xf32>
    %169 = arith.mulf %160, %139 : vector<8x32xf32>
    %170 = arith.mulf %154, %162 : vector<8x32xf32>
    %171 = arith.addf %169, %170 : vector<8x32xf32>
    %172 = math.tanh %171 : vector<8x32xf32>
    %173 = arith.mulf %168, %172 : vector<8x32xf32>
    %c5 = arith.constant 5 : index
    %c0_56 = arith.constant 0 : index
    %c0_57 = arith.constant 0 : index
    %174 = vector.load %arg10[%c5, %c0_56, %c0_57] : memref<8x8x128xbf16, #tpu.memory_space<vmem>>, vector<1x8x128xbf16>
    %175 = vector.shape_cast %174 : vector<1x8x128xbf16> to vector<8x128xbf16>
    %176 = arith.extf %175 : vector<8x128xbf16> to vector<8x128xf32>
    %177 = arith.truncf %173 : vector<8x32xf32> to vector<8x32xbf16>
    %c0_58 = arith.constant 0 : index
    %c0_59 = arith.constant 0 : index
    %178 = vector.load %arg3[%c0_58, %c0_59] : memref<32x128xbf16, #tpu.memory_space<vmem>>, vector<32x128xbf16>
    %cst_60 = arith.constant dense<0.000000e+00> : vector<8x128xf32>
    %179 = tpu.matmul %177, %178, %cst_60 {dimension_numbers = #tpu.dot_dimension_numbers<[1], [0], [0], [1], [0, 0, 1, 1], [], []>} : vector<8x32xbf16>, vector<32x128xbf16>, vector<8x128xf32> -> vector<8x128xf32>
    %180 = arith.addf %176, %179 : vector<8x128xf32>
    %181 = vector.extract_strided_slice %180 {offsets = [0, 0], sizes = [8, 32], strides = [1, 1]} : vector<8x128xf32> to vector<8x32xf32>
    %182 = arith.negf %181 : vector<8x32xf32>
    %183 = math.exp %182 : vector<8x32xf32>
    %cst_61 = arith.constant 1.000000e+00 : f32
    %184 = vector.broadcast %cst_61 : f32 to vector<8x32xf32>
    %185 = arith.addf %184, %183 : vector<8x32xf32>
    %186 = arith.divf %184, %185 : vector<8x32xf32>
    %187 = vector.extract_strided_slice %180 {offsets = [0, 32], sizes = [8, 32], strides = [1, 1]} : vector<8x128xf32> to vector<8x32xf32>
    %188 = arith.negf %187 : vector<8x32xf32>
    %189 = math.exp %188 : vector<8x32xf32>
    %cst_62 = arith.constant 1.000000e+00 : f32
    %190 = vector.broadcast %cst_62 : f32 to vector<8x32xf32>
    %191 = arith.addf %190, %189 : vector<8x32xf32>
    %192 = arith.divf %190, %191 : vector<8x32xf32>
    %193 = vector.extract_strided_slice %180 {offsets = [0, 64], sizes = [8, 32], strides = [1, 1]} : vector<8x128xf32> to vector<8x32xf32>
    %194 = math.tanh %193 : vector<8x32xf32>
    %195 = vector.extract_strided_slice %180 {offsets = [0, 96], sizes = [8, 32], strides = [1, 1]} : vector<8x128xf32> to vector<8x32xf32>
    %196 = arith.negf %195 : vector<8x32xf32>
    %197 = math.exp %196 : vector<8x32xf32>
    %cst_63 = arith.constant 1.000000e+00 : f32
    %198 = vector.broadcast %cst_63 : f32 to vector<8x32xf32>
    %199 = arith.addf %198, %197 : vector<8x32xf32>
    %200 = arith.divf %198, %199 : vector<8x32xf32>
    %201 = arith.mulf %192, %171 : vector<8x32xf32>
    %202 = arith.mulf %186, %194 : vector<8x32xf32>
    %203 = arith.addf %201, %202 : vector<8x32xf32>
    %204 = math.tanh %203 : vector<8x32xf32>
    %205 = arith.mulf %200, %204 : vector<8x32xf32>
    %c6 = arith.constant 6 : index
    %c0_64 = arith.constant 0 : index
    %c0_65 = arith.constant 0 : index
    %206 = vector.load %arg10[%c6, %c0_64, %c0_65] : memref<8x8x128xbf16, #tpu.memory_space<vmem>>, vector<1x8x128xbf16>
    %207 = vector.shape_cast %206 : vector<1x8x128xbf16> to vector<8x128xbf16>
    %208 = arith.extf %207 : vector<8x128xbf16> to vector<8x128xf32>
    %209 = arith.truncf %205 : vector<8x32xf32> to vector<8x32xbf16>
    %c0_66 = arith.constant 0 : index
    %c0_67 = arith.constant 0 : index
    %210 = vector.load %arg3[%c0_66, %c0_67] : memref<32x128xbf16, #tpu.memory_space<vmem>>, vector<32x128xbf16>
    %cst_68 = arith.constant dense<0.000000e+00> : vector<8x128xf32>
    %211 = tpu.matmul %209, %210, %cst_68 {dimension_numbers = #tpu.dot_dimension_numbers<[1], [0], [0], [1], [0, 0, 1, 1], [], []>} : vector<8x32xbf16>, vector<32x128xbf16>, vector<8x128xf32> -> vector<8x128xf32>
    %212 = arith.addf %208, %211 : vector<8x128xf32>
    %213 = vector.extract_strided_slice %212 {offsets = [0, 0], sizes = [8, 32], strides = [1, 1]} : vector<8x128xf32> to vector<8x32xf32>
    %214 = arith.negf %213 : vector<8x32xf32>
    %215 = math.exp %214 : vector<8x32xf32>
    %cst_69 = arith.constant 1.000000e+00 : f32
    %216 = vector.broadcast %cst_69 : f32 to vector<8x32xf32>
    %217 = arith.addf %216, %215 : vector<8x32xf32>
    %218 = arith.divf %216, %217 : vector<8x32xf32>
    %219 = vector.extract_strided_slice %212 {offsets = [0, 32], sizes = [8, 32], strides = [1, 1]} : vector<8x128xf32> to vector<8x32xf32>
    %220 = arith.negf %219 : vector<8x32xf32>
    %221 = math.exp %220 : vector<8x32xf32>
    %cst_70 = arith.constant 1.000000e+00 : f32
    %222 = vector.broadcast %cst_70 : f32 to vector<8x32xf32>
    %223 = arith.addf %222, %221 : vector<8x32xf32>
    %224 = arith.divf %222, %223 : vector<8x32xf32>
    %225 = vector.extract_strided_slice %212 {offsets = [0, 64], sizes = [8, 32], strides = [1, 1]} : vector<8x128xf32> to vector<8x32xf32>
    %226 = math.tanh %225 : vector<8x32xf32>
    %227 = vector.extract_strided_slice %212 {offsets = [0, 96], sizes = [8, 32], strides = [1, 1]} : vector<8x128xf32> to vector<8x32xf32>
    %228 = arith.negf %227 : vector<8x32xf32>
    %229 = math.exp %228 : vector<8x32xf32>
    %cst_71 = arith.constant 1.000000e+00 : f32
    %230 = vector.broadcast %cst_71 : f32 to vector<8x32xf32>
    %231 = arith.addf %230, %229 : vector<8x32xf32>
    %232 = arith.divf %230, %231 : vector<8x32xf32>
    %233 = arith.mulf %224, %203 : vector<8x32xf32>
    %234 = arith.mulf %218, %226 : vector<8x32xf32>
    %235 = arith.addf %233, %234 : vector<8x32xf32>
    %236 = math.tanh %235 : vector<8x32xf32>
    %237 = arith.mulf %232, %236 : vector<8x32xf32>
    %c7 = arith.constant 7 : index
    %c0_72 = arith.constant 0 : index
    %c0_73 = arith.constant 0 : index
    %238 = vector.load %arg10[%c7, %c0_72, %c0_73] : memref<8x8x128xbf16, #tpu.memory_space<vmem>>, vector<1x8x128xbf16>
    %239 = vector.shape_cast %238 : vector<1x8x128xbf16> to vector<8x128xbf16>
    %240 = arith.extf %239 : vector<8x128xbf16> to vector<8x128xf32>
    %241 = arith.truncf %237 : vector<8x32xf32> to vector<8x32xbf16>
    %c0_74 = arith.constant 0 : index
    %c0_75 = arith.constant 0 : index
    %242 = vector.load %arg3[%c0_74, %c0_75] : memref<32x128xbf16, #tpu.memory_space<vmem>>, vector<32x128xbf16>
    %cst_76 = arith.constant dense<0.000000e+00> : vector<8x128xf32>
    %243 = tpu.matmul %241, %242, %cst_76 {dimension_numbers = #tpu.dot_dimension_numbers<[1], [0], [0], [1], [0, 0, 1, 1], [], []>} : vector<8x32xbf16>, vector<32x128xbf16>, vector<8x128xf32> -> vector<8x128xf32>
    %244 = arith.addf %240, %243 : vector<8x128xf32>
    %245 = vector.extract_strided_slice %244 {offsets = [0, 0], sizes = [8, 32], strides = [1, 1]} : vector<8x128xf32> to vector<8x32xf32>
    %246 = arith.negf %245 : vector<8x32xf32>
    %247 = math.exp %246 : vector<8x32xf32>
    %cst_77 = arith.constant 1.000000e+00 : f32
    %248 = vector.broadcast %cst_77 : f32 to vector<8x32xf32>
    %249 = arith.addf %248, %247 : vector<8x32xf32>
    %250 = arith.divf %248, %249 : vector<8x32xf32>
    %251 = vector.extract_strided_slice %244 {offsets = [0, 32], sizes = [8, 32], strides = [1, 1]} : vector<8x128xf32> to vector<8x32xf32>
    %252 = arith.negf %251 : vector<8x32xf32>
    %253 = math.exp %252 : vector<8x32xf32>
    %cst_78 = arith.constant 1.000000e+00 : f32
    %254 = vector.broadcast %cst_78 : f32 to vector<8x32xf32>
    %255 = arith.addf %254, %253 : vector<8x32xf32>
    %256 = arith.divf %254, %255 : vector<8x32xf32>
    %257 = vector.extract_strided_slice %244 {offsets = [0, 64], sizes = [8, 32], strides = [1, 1]} : vector<8x128xf32> to vector<8x32xf32>
    %258 = math.tanh %257 : vector<8x32xf32>
    %259 = vector.extract_strided_slice %244 {offsets = [0, 96], sizes = [8, 32], strides = [1, 1]} : vector<8x128xf32> to vector<8x32xf32>
    %260 = arith.negf %259 : vector<8x32xf32>
    %261 = math.exp %260 : vector<8x32xf32>
    %cst_79 = arith.constant 1.000000e+00 : f32
    %262 = vector.broadcast %cst_79 : f32 to vector<8x32xf32>
    %263 = arith.addf %262, %261 : vector<8x32xf32>
    %264 = arith.divf %262, %263 : vector<8x32xf32>
    %265 = arith.mulf %256, %235 : vector<8x32xf32>
    %266 = arith.mulf %250, %258 : vector<8x32xf32>
    %267 = arith.addf %265, %266 : vector<8x32xf32>
    %268 = math.tanh %267 : vector<8x32xf32>
    %269 = arith.mulf %264, %268 : vector<8x32xf32>
    %cst_80 = arith.constant 0.000000e+00 : f32
    %270 = vector.broadcast %cst_80 : f32 to vector<8x4xf32>
    %271 = arith.truncf %269 : vector<8x32xf32> to vector<8x32xbf16>
    %c0_81 = arith.constant 0 : index
    %c0_82 = arith.constant 0 : index
    %272 = vector.load %arg5[%c0_81, %c0_82] : memref<32x16xbf16, #tpu.memory_space<vmem>>, vector<32x16xbf16>
    %cst_83 = arith.constant dense<0.000000e+00> : vector<8x16xf32>
    %273 = tpu.matmul %271, %272, %cst_83 {dimension_numbers = #tpu.dot_dimension_numbers<[1], [0], [0], [1], [0, 0, 1, 1], [], []>} : vector<8x32xbf16>, vector<32x16xbf16>, vector<8x16xf32> -> vector<8x16xf32>
    %274 = vector.broadcast %1 : vector<1x16xf32> to vector<8x16xf32>
    %275 = arith.addf %273, %274 : vector<8x16xf32>
    %276 = vector.extract_strided_slice %275 {offsets = [0, 0], sizes = [8, 4], strides = [1, 1]} : vector<8x16xf32> to vector<8x4xf32>
    %277 = arith.negf %276 : vector<8x4xf32>
    %278 = math.exp %277 : vector<8x4xf32>
    %cst_84 = arith.constant 1.000000e+00 : f32
    %279 = vector.broadcast %cst_84 : f32 to vector<8x4xf32>
    %280 = arith.addf %279, %278 : vector<8x4xf32>
    %281 = arith.divf %279, %280 : vector<8x4xf32>
    %282 = vector.extract_strided_slice %275 {offsets = [0, 4], sizes = [8, 4], strides = [1, 1]} : vector<8x16xf32> to vector<8x4xf32>
    %283 = arith.negf %282 : vector<8x4xf32>
    %284 = math.exp %283 : vector<8x4xf32>
    %cst_85 = arith.constant 1.000000e+00 : f32
    %285 = vector.broadcast %cst_85 : f32 to vector<8x4xf32>
    %286 = arith.addf %285, %284 : vector<8x4xf32>
    %287 = arith.divf %285, %286 : vector<8x4xf32>
    %288 = vector.extract_strided_slice %275 {offsets = [0, 8], sizes = [8, 4], strides = [1, 1]} : vector<8x16xf32> to vector<8x4xf32>
    %289 = math.tanh %288 : vector<8x4xf32>
    %290 = vector.extract_strided_slice %275 {offsets = [0, 12], sizes = [8, 4], strides = [1, 1]} : vector<8x16xf32> to vector<8x4xf32>
    %291 = arith.negf %290 : vector<8x4xf32>
    %292 = math.exp %291 : vector<8x4xf32>
    %cst_86 = arith.constant 1.000000e+00 : f32
    %293 = vector.broadcast %cst_86 : f32 to vector<8x4xf32>
    %294 = arith.addf %293, %292 : vector<8x4xf32>
    %295 = arith.divf %293, %294 : vector<8x4xf32>
    %296 = arith.mulf %287, %270 : vector<8x4xf32>
    %297 = arith.mulf %281, %289 : vector<8x4xf32>
    %298 = arith.addf %296, %297 : vector<8x4xf32>
    %299 = math.tanh %298 : vector<8x4xf32>
    %300 = arith.mulf %295, %299 : vector<8x4xf32>
    %c0_87 = arith.constant 0 : index
    %c0_88 = arith.constant 0 : index
    %c0_89 = arith.constant 0 : index
    %301 = vector.load %arg9[%c0_87, %c0_88, %c0_89] : memref<8x8x4xf32, #tpu.memory_space<vmem>>, vector<1x8x4xf32>
    %302 = vector.shape_cast %301 : vector<1x8x4xf32> to vector<8x4xf32>
    %303 = vector.shape_cast %300 : vector<8x4xf32> to vector<1x8x4xf32>
    tpu.vector_store %arg9[%c0_87, %c0_88, %c0_89], %303 {strides = array<i32>} : memref<8x8x4xf32, #tpu.memory_space<vmem>>, vector<1x8x4xf32>,
    %304 = arith.truncf %300 : vector<8x4xf32> to vector<8x4xbf16>
    %c0_90 = arith.constant 0 : index
    %c0_91 = arith.constant 0 : index
    %305 = vector.load %arg7[%c0_90, %c0_91] : memref<4x16xbf16, #tpu.memory_space<vmem>>, vector<4x16xbf16>
    %cst_92 = arith.constant dense<0.000000e+00> : vector<8x16xf32>
    %306 = tpu.matmul %304, %305, %cst_92 {dimension_numbers = #tpu.dot_dimension_numbers<[1], [0], [0], [1], [0, 0, 1, 1], [], []>} : vector<8x4xbf16>, vector<4x16xbf16>, vector<8x16xf32> -> vector<8x16xf32>
    %307 = vector.broadcast %2 : vector<1x16xf32> to vector<8x16xf32>
    %308 = arith.addf %306, %307 : vector<8x16xf32>
    %309 = vector.extract_strided_slice %308 {offsets = [0, 0], sizes = [8, 4], strides = [1, 1]} : vector<8x16xf32> to vector<8x4xf32>
    %310 = arith.negf %309 : vector<8x4xf32>
    %311 = math.exp %310 : vector<8x4xf32>
    %cst_93 = arith.constant 1.000000e+00 : f32
    %312 = vector.broadcast %cst_93 : f32 to vector<8x4xf32>
    %313 = arith.addf %312, %311 : vector<8x4xf32>
    %314 = arith.divf %312, %313 : vector<8x4xf32>
    %315 = vector.extract_strided_slice %308 {offsets = [0, 4], sizes = [8, 4], strides = [1, 1]} : vector<8x16xf32> to vector<8x4xf32>
    %316 = arith.negf %315 : vector<8x4xf32>
    %317 = math.exp %316 : vector<8x4xf32>
    %cst_94 = arith.constant 1.000000e+00 : f32
    %318 = vector.broadcast %cst_94 : f32 to vector<8x4xf32>
    %319 = arith.addf %318, %317 : vector<8x4xf32>
    %320 = arith.divf %318, %319 : vector<8x4xf32>
    %321 = vector.extract_strided_slice %308 {offsets = [0, 8], sizes = [8, 4], strides = [1, 1]} : vector<8x16xf32> to vector<8x4xf32>
    %322 = math.tanh %321 : vector<8x4xf32>
    %323 = vector.extract_strided_slice %308 {offsets = [0, 12], sizes = [8, 4], strides = [1, 1]} : vector<8x16xf32> to vector<8x4xf32>
    %324 = arith.negf %323 : vector<8x4xf32>
    %325 = math.exp %324 : vector<8x4xf32>
    %cst_95 = arith.constant 1.000000e+00 : f32
    %326 = vector.broadcast %cst_95 : f32 to vector<8x4xf32>
    %327 = arith.addf %326, %325 : vector<8x4xf32>
    %328 = arith.divf %326, %327 : vector<8x4xf32>
    %329 = arith.mulf %320, %298 : vector<8x4xf32>
    %330 = arith.mulf %314, %322 : vector<8x4xf32>
    %331 = arith.addf %329, %330 : vector<8x4xf32>
    %332 = math.tanh %331 : vector<8x4xf32>
    %333 = arith.mulf %328, %332 : vector<8x4xf32>
    %334 = vector.shape_cast %333 : vector<8x4xf32> to vector<1x8x4xf32>
    %c7_96 = arith.constant 7 : index
    %c0_97 = arith.constant 0 : index
    %c0_98 = arith.constant 0 : index
    %335 = vector.load %arg9[%c7_96, %c0_97, %c0_98] : memref<8x8x4xf32, #tpu.memory_space<vmem>>, vector<1x8x4xf32>
    tpu.vector_store %arg9[%c7_96, %c0_97, %c0_98], %334 {strides = array<i32>} : memref<8x8x4xf32, #tpu.memory_space<vmem>>, vector<1x8x4xf32>,
    %336 = arith.truncf %333 : vector<8x4xf32> to vector<8x4xbf16>
    %c0_99 = arith.constant 0 : index
    %c0_100 = arith.constant 0 : index
    %337 = vector.load %arg7[%c0_99, %c0_100] : memref<4x16xbf16, #tpu.memory_space<vmem>>, vector<4x16xbf16>
    %cst_101 = arith.constant dense<0.000000e+00> : vector<8x16xf32>
    %338 = tpu.matmul %336, %337, %cst_101 {dimension_numbers = #tpu.dot_dimension_numbers<[1], [0], [0], [1], [0, 0, 1, 1], [], []>} : vector<8x4xbf16>, vector<4x16xbf16>, vector<8x16xf32> -> vector<8x16xf32>
    %339 = vector.broadcast %2 : vector<1x16xf32> to vector<8x16xf32>
    %340 = arith.addf %338, %339 : vector<8x16xf32>
    %341 = vector.extract_strided_slice %340 {offsets = [0, 0], sizes = [8, 4], strides = [1, 1]} : vector<8x16xf32> to vector<8x4xf32>
    %342 = arith.negf %341 : vector<8x4xf32>
    %343 = math.exp %342 : vector<8x4xf32>
    %cst_102 = arith.constant 1.000000e+00 : f32
    %344 = vector.broadcast %cst_102 : f32 to vector<8x4xf32>
    %345 = arith.addf %344, %343 : vector<8x4xf32>
    %346 = arith.divf %344, %345 : vector<8x4xf32>
    %347 = vector.extract_strided_slice %340 {offsets = [0, 4], sizes = [8, 4], strides = [1, 1]} : vector<8x16xf32> to vector<8x4xf32>
    %348 = arith.negf %347 : vector<8x4xf32>
    %349 = math.exp %348 : vector<8x4xf32>
    %cst_103 = arith.constant 1.000000e+00 : f32
    %350 = vector.broadcast %cst_103 : f32 to vector<8x4xf32>
    %351 = arith.addf %350, %349 : vector<8x4xf32>
    %352 = arith.divf %350, %351 : vector<8x4xf32>
    %353 = vector.extract_strided_slice %340 {offsets = [0, 8], sizes = [8, 4], strides = [1, 1]} : vector<8x16xf32> to vector<8x4xf32>
    %354 = math.tanh %353 : vector<8x4xf32>
    %355 = vector.extract_strided_slice %340 {offsets = [0, 12], sizes = [8, 4], strides = [1, 1]} : vector<8x16xf32> to vector<8x4xf32>
    %356 = arith.negf %355 : vector<8x4xf32>
    %357 = math.exp %356 : vector<8x4xf32>
    %cst_104 = arith.constant 1.000000e+00 : f32
    %358 = vector.broadcast %cst_104 : f32 to vector<8x4xf32>
    %359 = arith.addf %358, %357 : vector<8x4xf32>
    %360 = arith.divf %358, %359 : vector<8x4xf32>
    %361 = arith.mulf %352, %331 : vector<8x4xf32>
    %362 = arith.mulf %346, %354 : vector<8x4xf32>
    %363 = arith.addf %361, %362 : vector<8x4xf32>
    %364 = math.tanh %363 : vector<8x4xf32>
    %365 = arith.mulf %360, %364 : vector<8x4xf32>
    %366 = vector.shape_cast %365 : vector<8x4xf32> to vector<1x8x4xf32>
    %c6_105 = arith.constant 6 : index
    %c0_106 = arith.constant 0 : index
    %c0_107 = arith.constant 0 : index
    %367 = vector.load %arg9[%c6_105, %c0_106, %c0_107] : memref<8x8x4xf32, #tpu.memory_space<vmem>>, vector<1x8x4xf32>
    tpu.vector_store %arg9[%c6_105, %c0_106, %c0_107], %366 {strides = array<i32>} : memref<8x8x4xf32, #tpu.memory_space<vmem>>, vector<1x8x4xf32>,
    %368 = arith.truncf %365 : vector<8x4xf32> to vector<8x4xbf16>
    %c0_108 = arith.constant 0 : index
    %c0_109 = arith.constant 0 : index
    %369 = vector.load %arg7[%c0_108, %c0_109] : memref<4x16xbf16, #tpu.memory_space<vmem>>, vector<4x16xbf16>
    %cst_110 = arith.constant dense<0.000000e+00> : vector<8x16xf32>
    %370 = tpu.matmul %368, %369, %cst_110 {dimension_numbers = #tpu.dot_dimension_numbers<[1], [0], [0], [1], [0, 0, 1, 1], [], []>} : vector<8x4xbf16>, vector<4x16xbf16>, vector<8x16xf32> -> vector<8x16xf32>
    %371 = vector.broadcast %2 : vector<1x16xf32> to vector<8x16xf32>
    %372 = arith.addf %370, %371 : vector<8x16xf32>
    %373 = vector.extract_strided_slice %372 {offsets = [0, 0], sizes = [8, 4], strides = [1, 1]} : vector<8x16xf32> to vector<8x4xf32>
    %374 = arith.negf %373 : vector<8x4xf32>
    %375 = math.exp %374 : vector<8x4xf32>
    %cst_111 = arith.constant 1.000000e+00 : f32
    %376 = vector.broadcast %cst_111 : f32 to vector<8x4xf32>
    %377 = arith.addf %376, %375 : vector<8x4xf32>
    %378 = arith.divf %376, %377 : vector<8x4xf32>
    %379 = vector.extract_strided_slice %372 {offsets = [0, 4], sizes = [8, 4], strides = [1, 1]} : vector<8x16xf32> to vector<8x4xf32>
    %380 = arith.negf %379 : vector<8x4xf32>
    %381 = math.exp %380 : vector<8x4xf32>
    %cst_112 = arith.constant 1.000000e+00 : f32
    %382 = vector.broadcast %cst_112 : f32 to vector<8x4xf32>
    %383 = arith.addf %382, %381 : vector<8x4xf32>
    %384 = arith.divf %382, %383 : vector<8x4xf32>
    %385 = vector.extract_strided_slice %372 {offsets = [0, 8], sizes = [8, 4], strides = [1, 1]} : vector<8x16xf32> to vector<8x4xf32>
    %386 = math.tanh %385 : vector<8x4xf32>
    %387 = vector.extract_strided_slice %372 {offsets = [0, 12], sizes = [8, 4], strides = [1, 1]} : vector<8x16xf32> to vector<8x4xf32>
    %388 = arith.negf %387 : vector<8x4xf32>
    %389 = math.exp %388 : vector<8x4xf32>
    %cst_113 = arith.constant 1.000000e+00 : f32
    %390 = vector.broadcast %cst_113 : f32 to vector<8x4xf32>
    %391 = arith.addf %390, %389 : vector<8x4xf32>
    %392 = arith.divf %390, %391 : vector<8x4xf32>
    %393 = arith.mulf %384, %363 : vector<8x4xf32>
    %394 = arith.mulf %378, %386 : vector<8x4xf32>
    %395 = arith.addf %393, %394 : vector<8x4xf32>
    %396 = math.tanh %395 : vector<8x4xf32>
    %397 = arith.mulf %392, %396 : vector<8x4xf32>
    %398 = vector.shape_cast %397 : vector<8x4xf32> to vector<1x8x4xf32>
    %c5_114 = arith.constant 5 : index
    %c0_115 = arith.constant 0 : index
    %c0_116 = arith.constant 0 : index
    %399 = vector.load %arg9[%c5_114, %c0_115, %c0_116] : memref<8x8x4xf32, #tpu.memory_space<vmem>>, vector<1x8x4xf32>
    tpu.vector_store %arg9[%c5_114, %c0_115, %c0_116], %398 {strides = array<i32>} : memref<8x8x4xf32, #tpu.memory_space<vmem>>, vector<1x8x4xf32>,
    %400 = arith.truncf %397 : vector<8x4xf32> to vector<8x4xbf16>
    %c0_117 = arith.constant 0 : index
    %c0_118 = arith.constant 0 : index
    %401 = vector.load %arg7[%c0_117, %c0_118] : memref<4x16xbf16, #tpu.memory_space<vmem>>, vector<4x16xbf16>
    %cst_119 = arith.constant dense<0.000000e+00> : vector<8x16xf32>
    %402 = tpu.matmul %400, %401, %cst_119 {dimension_numbers = #tpu.dot_dimension_numbers<[1], [0], [0], [1], [0, 0, 1, 1], [], []>} : vector<8x4xbf16>, vector<4x16xbf16>, vector<8x16xf32> -> vector<8x16xf32>
    %403 = vector.broadcast %2 : vector<1x16xf32> to vector<8x16xf32>
    %404 = arith.addf %402, %403 : vector<8x16xf32>
    %405 = vector.extract_strided_slice %404 {offsets = [0, 0], sizes = [8, 4], strides = [1, 1]} : vector<8x16xf32> to vector<8x4xf32>
    %406 = arith.negf %405 : vector<8x4xf32>
    %407 = math.exp %406 : vector<8x4xf32>
    %cst_120 = arith.constant 1.000000e+00 : f32
    %408 = vector.broadcast %cst_120 : f32 to vector<8x4xf32>
    %409 = arith.addf %408, %407 : vector<8x4xf32>
    %410 = arith.divf %408, %409 : vector<8x4xf32>
    %411 = vector.extract_strided_slice %404 {offsets = [0, 4], sizes = [8, 4], strides = [1, 1]} : vector<8x16xf32> to vector<8x4xf32>
    %412 = arith.negf %411 : vector<8x4xf32>
    %413 = math.exp %412 : vector<8x4xf32>
    %cst_121 = arith.constant 1.000000e+00 : f32
    %414 = vector.broadcast %cst_121 : f32 to vector<8x4xf32>
    %415 = arith.addf %414, %413 : vector<8x4xf32>
    %416 = arith.divf %414, %415 : vector<8x4xf32>
    %417 = vector.extract_strided_slice %404 {offsets = [0, 8], sizes = [8, 4], strides = [1, 1]} : vector<8x16xf32> to vector<8x4xf32>
    %418 = math.tanh %417 : vector<8x4xf32>
    %419 = vector.extract_strided_slice %404 {offsets = [0, 12], sizes = [8, 4], strides = [1, 1]} : vector<8x16xf32> to vector<8x4xf32>
    %420 = arith.negf %419 : vector<8x4xf32>
    %421 = math.exp %420 : vector<8x4xf32>
    %cst_122 = arith.constant 1.000000e+00 : f32
    %422 = vector.broadcast %cst_122 : f32 to vector<8x4xf32>
    %423 = arith.addf %422, %421 : vector<8x4xf32>
    %424 = arith.divf %422, %423 : vector<8x4xf32>
    %425 = arith.mulf %416, %395 : vector<8x4xf32>
    %426 = arith.mulf %410, %418 : vector<8x4xf32>
    %427 = arith.addf %425, %426 : vector<8x4xf32>
    %428 = math.tanh %427 : vector<8x4xf32>
    %429 = arith.mulf %424, %428 : vector<8x4xf32>
    %430 = vector.shape_cast %429 : vector<8x4xf32> to vector<1x8x4xf32>
    %c4_123 = arith.constant 4 : index
    %c0_124 = arith.constant 0 : index
    %c0_125 = arith.constant 0 : index
    %431 = vector.load %arg9[%c4_123, %c0_124, %c0_125] : memref<8x8x4xf32, #tpu.memory_space<vmem>>, vector<1x8x4xf32>
    tpu.vector_store %arg9[%c4_123, %c0_124, %c0_125], %430 {strides = array<i32>} : memref<8x8x4xf32, #tpu.memory_space<vmem>>, vector<1x8x4xf32>,
    %432 = arith.truncf %429 : vector<8x4xf32> to vector<8x4xbf16>
    %c0_126 = arith.constant 0 : index
    %c0_127 = arith.constant 0 : index
    %433 = vector.load %arg7[%c0_126, %c0_127] : memref<4x16xbf16, #tpu.memory_space<vmem>>, vector<4x16xbf16>
    %cst_128 = arith.constant dense<0.000000e+00> : vector<8x16xf32>
    %434 = tpu.matmul %432, %433, %cst_128 {dimension_numbers = #tpu.dot_dimension_numbers<[1], [0], [0], [1], [0, 0, 1, 1], [], []>} : vector<8x4xbf16>, vector<4x16xbf16>, vector<8x16xf32> -> vector<8x16xf32>
    %435 = vector.broadcast %2 : vector<1x16xf32> to vector<8x16xf32>
    %436 = arith.addf %434, %435 : vector<8x16xf32>
    %437 = vector.extract_strided_slice %436 {offsets = [0, 0], sizes = [8, 4], strides = [1, 1]} : vector<8x16xf32> to vector<8x4xf32>
    %438 = arith.negf %437 : vector<8x4xf32>
    %439 = math.exp %438 : vector<8x4xf32>
    %cst_129 = arith.constant 1.000000e+00 : f32
    %440 = vector.broadcast %cst_129 : f32 to vector<8x4xf32>
    %441 = arith.addf %440, %439 : vector<8x4xf32>
    %442 = arith.divf %440, %441 : vector<8x4xf32>
    %443 = vector.extract_strided_slice %436 {offsets = [0, 4], sizes = [8, 4], strides = [1, 1]} : vector<8x16xf32> to vector<8x4xf32>
    %444 = arith.negf %443 : vector<8x4xf32>
    %445 = math.exp %444 : vector<8x4xf32>
    %cst_130 = arith.constant 1.000000e+00 : f32
    %446 = vector.broadcast %cst_130 : f32 to vector<8x4xf32>
    %447 = arith.addf %446, %445 : vector<8x4xf32>
    %448 = arith.divf %446, %447 : vector<8x4xf32>
    %449 = vector.extract_strided_slice %436 {offsets = [0, 8], sizes = [8, 4], strides = [1, 1]} : vector<8x16xf32> to vector<8x4xf32>
    %450 = math.tanh %449 : vector<8x4xf32>
    %451 = vector.extract_strided_slice %436 {offsets = [0, 12], sizes = [8, 4], strides = [1, 1]} : vector<8x16xf32> to vector<8x4xf32>
    %452 = arith.negf %451 : vector<8x4xf32>
    %453 = math.exp %452 : vector<8x4xf32>
    %cst_131 = arith.constant 1.000000e+00 : f32
    %454 = vector.broadcast %cst_131 : f32 to vector<8x4xf32>
    %455 = arith.addf %454, %453 : vector<8x4xf32>
    %456 = arith.divf %454, %455 : vector<8x4xf32>
    %457 = arith.mulf %448, %427 : vector<8x4xf32>
    %458 = arith.mulf %442, %450 : vector<8x4xf32>
    %459 = arith.addf %457, %458 : vector<8x4xf32>
    %460 = math.tanh %459 : vector<8x4xf32>
    %461 = arith.mulf %456, %460 : vector<8x4xf32>
    %462 = vector.shape_cast %461 : vector<8x4xf32> to vector<1x8x4xf32>
    %c3_132 = arith.constant 3 : index
    %c0_133 = arith.constant 0 : index
    %c0_134 = arith.constant 0 : index
    %463 = vector.load %arg9[%c3_132, %c0_133, %c0_134] : memref<8x8x4xf32, #tpu.memory_space<vmem>>, vector<1x8x4xf32>
    tpu.vector_store %arg9[%c3_132, %c0_133, %c0_134], %462 {strides = array<i32>} : memref<8x8x4xf32, #tpu.memory_space<vmem>>, vector<1x8x4xf32>,
    %464 = arith.truncf %461 : vector<8x4xf32> to vector<8x4xbf16>
    %c0_135 = arith.constant 0 : index
    %c0_136 = arith.constant 0 : index
    %465 = vector.load %arg7[%c0_135, %c0_136] : memref<4x16xbf16, #tpu.memory_space<vmem>>, vector<4x16xbf16>
    %cst_137 = arith.constant dense<0.000000e+00> : vector<8x16xf32>
    %466 = tpu.matmul %464, %465, %cst_137 {dimension_numbers = #tpu.dot_dimension_numbers<[1], [0], [0], [1], [0, 0, 1, 1], [], []>} : vector<8x4xbf16>, vector<4x16xbf16>, vector<8x16xf32> -> vector<8x16xf32>
    %467 = vector.broadcast %2 : vector<1x16xf32> to vector<8x16xf32>
    %468 = arith.addf %466, %467 : vector<8x16xf32>
    %469 = vector.extract_strided_slice %468 {offsets = [0, 0], sizes = [8, 4], strides = [1, 1]} : vector<8x16xf32> to vector<8x4xf32>
    %470 = arith.negf %469 : vector<8x4xf32>
    %471 = math.exp %470 : vector<8x4xf32>
    %cst_138 = arith.constant 1.000000e+00 : f32
    %472 = vector.broadcast %cst_138 : f32 to vector<8x4xf32>
    %473 = arith.addf %472, %471 : vector<8x4xf32>
    %474 = arith.divf %472, %473 : vector<8x4xf32>
    %475 = vector.extract_strided_slice %468 {offsets = [0, 4], sizes = [8, 4], strides = [1, 1]} : vector<8x16xf32> to vector<8x4xf32>
    %476 = arith.negf %475 : vector<8x4xf32>
    %477 = math.exp %476 : vector<8x4xf32>
    %cst_139 = arith.constant 1.000000e+00 : f32
    %478 = vector.broadcast %cst_139 : f32 to vector<8x4xf32>
    %479 = arith.addf %478, %477 : vector<8x4xf32>
    %480 = arith.divf %478, %479 : vector<8x4xf32>
    %481 = vector.extract_strided_slice %468 {offsets = [0, 8], sizes = [8, 4], strides = [1, 1]} : vector<8x16xf32> to vector<8x4xf32>
    %482 = math.tanh %481 : vector<8x4xf32>
    %483 = vector.extract_strided_slice %468 {offsets = [0, 12], sizes = [8, 4], strides = [1, 1]} : vector<8x16xf32> to vector<8x4xf32>
    %484 = arith.negf %483 : vector<8x4xf32>
    %485 = math.exp %484 : vector<8x4xf32>
    %cst_140 = arith.constant 1.000000e+00 : f32
    %486 = vector.broadcast %cst_140 : f32 to vector<8x4xf32>
    %487 = arith.addf %486, %485 : vector<8x4xf32>
    %488 = arith.divf %486, %487 : vector<8x4xf32>
    %489 = arith.mulf %480, %459 : vector<8x4xf32>
    %490 = arith.mulf %474, %482 : vector<8x4xf32>
    %491 = arith.addf %489, %490 : vector<8x4xf32>
    %492 = math.tanh %491 : vector<8x4xf32>
    %493 = arith.mulf %488, %492 : vector<8x4xf32>
    %494 = vector.shape_cast %493 : vector<8x4xf32> to vector<1x8x4xf32>
    %c2_141 = arith.constant 2 : index
    %c0_142 = arith.constant 0 : index
    %c0_143 = arith.constant 0 : index
    %495 = vector.load %arg9[%c2_141, %c0_142, %c0_143] : memref<8x8x4xf32, #tpu.memory_space<vmem>>, vector<1x8x4xf32>
    tpu.vector_store %arg9[%c2_141, %c0_142, %c0_143], %494 {strides = array<i32>} : memref<8x8x4xf32, #tpu.memory_space<vmem>>, vector<1x8x4xf32>,
    %496 = arith.truncf %493 : vector<8x4xf32> to vector<8x4xbf16>
    %c0_144 = arith.constant 0 : index
    %c0_145 = arith.constant 0 : index
    %497 = vector.load %arg7[%c0_144, %c0_145] : memref<4x16xbf16, #tpu.memory_space<vmem>>, vector<4x16xbf16>
    %cst_146 = arith.constant dense<0.000000e+00> : vector<8x16xf32>
    %498 = tpu.matmul %496, %497, %cst_146 {dimension_numbers = #tpu.dot_dimension_numbers<[1], [0], [0], [1], [0, 0, 1, 1], [], []>} : vector<8x4xbf16>, vector<4x16xbf16>, vector<8x16xf32> -> vector<8x16xf32>
    %499 = vector.broadcast %2 : vector<1x16xf32> to vector<8x16xf32>
    %500 = arith.addf %498, %499 : vector<8x16xf32>
    %501 = vector.extract_strided_slice %500 {offsets = [0, 0], sizes = [8, 4], strides = [1, 1]} : vector<8x16xf32> to vector<8x4xf32>
    %502 = arith.negf %501 : vector<8x4xf32>
    %503 = math.exp %502 : vector<8x4xf32>
    %cst_147 = arith.constant 1.000000e+00 : f32
    %504 = vector.broadcast %cst_147 : f32 to vector<8x4xf32>
    %505 = arith.addf %504, %503 : vector<8x4xf32>
    %506 = arith.divf %504, %505 : vector<8x4xf32>
    %507 = vector.extract_strided_slice %500 {offsets = [0, 4], sizes = [8, 4], strides = [1, 1]} : vector<8x16xf32> to vector<8x4xf32>
    %508 = arith.negf %507 : vector<8x4xf32>
    %509 = math.exp %508 : vector<8x4xf32>
    %cst_148 = arith.constant 1.000000e+00 : f32
    %510 = vector.broadcast %cst_148 : f32 to vector<8x4xf32>
    %511 = arith.addf %510, %509 : vector<8x4xf32>
    %512 = arith.divf %510, %511 : vector<8x4xf32>
    %513 = vector.extract_strided_slice %500 {offsets = [0, 8], sizes = [8, 4], strides = [1, 1]} : vector<8x16xf32> to vector<8x4xf32>
    %514 = math.tanh %513 : vector<8x4xf32>
    %515 = vector.extract_strided_slice %500 {offsets = [0, 12], sizes = [8, 4], strides = [1, 1]} : vector<8x16xf32> to vector<8x4xf32>
    %516 = arith.negf %515 : vector<8x4xf32>
    %517 = math.exp %516 : vector<8x4xf32>
    %cst_149 = arith.constant 1.000000e+00 : f32
    %518 = vector.broadcast %cst_149 : f32 to vector<8x4xf32>
    %519 = arith.addf %518, %517 : vector<8x4xf32>
    %520 = arith.divf %518, %519 : vector<8x4xf32>
    %521 = arith.mulf %512, %491 : vector<8x4xf32>
    %522 = arith.mulf %506, %514 : vector<8x4xf32>
    %523 = arith.addf %521, %522 : vector<8x4xf32>
    %524 = math.tanh %523 : vector<8x4xf32>
    %525 = arith.mulf %520, %524 : vector<8x4xf32>
    %526 = vector.shape_cast %525 : vector<8x4xf32> to vector<1x8x4xf32>
    %c1_150 = arith.constant 1 : index
    %c0_151 = arith.constant 0 : index
    %c0_152 = arith.constant 0 : index
    %527 = vector.load %arg9[%c1_150, %c0_151, %c0_152] : memref<8x8x4xf32, #tpu.memory_space<vmem>>, vector<1x8x4xf32>
    tpu.vector_store %arg9[%c1_150, %c0_151, %c0_152], %526 {strides = array<i32>} : memref<8x8x4xf32, #tpu.memory_space<vmem>>, vector<1x8x4xf32>,
    return
  }
  func.func @transform_0(%arg0: i32) -> (i32, i32, i32) {
    %c0_i32 = arith.constant 0 : i32
    %c0_i32_0 = arith.constant 0 : i32
    %c0_i32_1 = arith.constant 0 : i32
    return %c0_i32, %arg0, %c0_i32_0 : i32, i32, i32
  }
  func.func @transform_1(%arg0: i32) -> (i32, i32) {
    %c0_i32 = arith.constant 0 : i32
    %c0_i32_0 = arith.constant 0 : i32
    %c0_i32_1 = arith.constant 0 : i32
    return %c0_i32, %c0_i32_0 : i32, i32
  }
  func.func @transform_2(%arg0: i32) -> (i32, i32) {
    %c0_i32 = arith.constant 0 : i32
    %c0_i32_0 = arith.constant 0 : i32
    %c0_i32_1 = arith.constant 0 : i32
    return %c0_i32, %c0_i32_0 : i32, i32
  }
  func.func @transform_3(%arg0: i32) -> (i32, i32) {
    %c0_i32 = arith.constant 0 : i32
    %c0_i32_0 = arith.constant 0 : i32
    %c0_i32_1 = arith.constant 0 : i32
    return %c0_i32, %c0_i32_0 : i32, i32
  }
  func.func @transform_4(%arg0: i32) -> (i32, i32) {
    %c0_i32 = arith.constant 0 : i32
    %c0_i32_0 = arith.constant 0 : i32
    %c0_i32_1 = arith.constant 0 : i32
    return %c0_i32, %c0_i32_0 : i32, i32
  }
  func.func @transform_5(%arg0: i32) -> (i32, i32) {
    %c0_i32 = arith.constant 0 : i32
    %c0_i32_0 = arith.constant 0 : i32
    %c0_i32_1 = arith.constant 0 : i32
    return %c0_i32, %c0_i32_0 : i32, i32
  }
  func.func @transform_6(%arg0: i32) -> (i32, i32) {
    %c0_i32 = arith.constant 0 : i32
    %c0_i32_0 = arith.constant 0 : i32
    %c0_i32_1 = arith.constant 0 : i32
    return %c0_i32, %c0_i32_0 : i32, i32
  }
  func.func @transform_7(%arg0: i32) -> (i32, i32) {
    %c0_i32 = arith.constant 0 : i32
    %c0_i32_0 = arith.constant 0 : i32
    %c0_i32_1 = arith.constant 0 : i32
    return %c0_i32, %c0_i32_0 : i32, i32
  }
  func.func @transform_8(%arg0: i32) -> (i32, i32, i32) {
    %c0_i32 = arith.constant 0 : i32
    %c0_i32_0 = arith.constant 0 : i32
    %c0_i32_1 = arith.constant 0 : i32
    return %c0_i32, %arg0, %c0_i32_0 : i32, i32, i32
  }
}

</mosaic_0001>

<llo_original>
// kernel: tpu_custom_call.1
$region0: #{tpu_custom_call.1}
  #allocation0 [shape = 'u32[]', space=smem, size = 0x4, offset = 0x4, fixed_abs, tag = 'smem constant byte address 0x4 - core index']
  #allocation1 [shape = 'u32[144,128]{1,0:T(1,128)}', space=vmem, size = 0x12000, scoped, tag = 'internal scratch']
  #allocation2 [shape = 'bf16[8,8,128]{2,1,0:T(8,128)(2,1)}', space=vmem, size = 0x4000, scoped, tag = 'scratch operand']
  %s0 = inlined_call_operand.hbm [shape: bf16[8,8,8], index: 0, kind: input, shape index: {}]
  %s1 = inlined_call_operand.vmem [shape: bf16[8,128], index: 1, kind: input, shape index: {}]
  %s2 = inlined_call_operand.vmem [shape: bf16[32,128], index: 2, kind: input, shape index: {}]
  %s3 = inlined_call_operand.vmem [shape: f32[1,128], index: 3, kind: input, shape index: {}]
  %s4 = inlined_call_operand.vmem [shape: bf16[32,16], index: 4, kind: input, shape index: {}]
  %s5 = inlined_call_operand.vmem [shape: f32[1,16], index: 5, kind: input, shape index: {}]
  %s6 = inlined_call_operand.vmem [shape: bf16[4,16], index: 6, kind: input, shape index: {}]
  %s7 = inlined_call_operand.vmem [shape: f32[1,16], index: 7, kind: input, shape index: {}]
  %s8 = inlined_call_operand.vmem [shape: f32[8,8,4], index: 8, kind: output, shape index: {}]
  %s9 = sld [smem:[#allocation0]]
  $region46: #{tpu_custom_call.1} parent=0
    _
  %s11 = ssub.s32 1, %s9
  %s12 = scalar_select 0, %s11, %s9
  $region1: #{tpu_custom_call.1} parent=0
    #allocation3 [shape = 'u8[16384]{0}', space=vmem, size = 0x4000, scoped, tag = 'input window, operand 0, single buffered']
    #allocation4 [shape = 's32[1]{0}', space=sflag, size = 0x4, scoped, tag = 'scoped memory for tpu_custom_call.1']
    %13 = vsyncpa [#allocation4], 0
    // Predicated region
    $region2: #{tpu_custom_call.1} parent=1 // pred_check
      _
    $region3: #{tpu_custom_call.1} parent=1 // pred_check_branch
      %15 = sbr.rel (0) target = $region5
    $region4: #{tpu_custom_call.1} parent=1 // pred_region
      %s17 = ssub.s32 512, 512
      %18 = vsyncadd [#allocation4], %s17
      %s19 = sshll.u32 [#allocation3], 4
      %s20 = int_to_ptr.vmem [resolvable:$true] %s19
      %25 = dma.hbm_to_vmem [thread:$0]  %s0, 512, %s20, [#allocation4], 64, 64, 4
    $region5: #{tpu_custom_call.1} parent=1 // pred_fallthru
      _
    // Predicated region
    $region6: #{tpu_custom_call.1} parent=1 // pred_check
      _
    $region7: #{tpu_custom_call.1} parent=1 // pred_check_branch
      %27 = sbr.rel (0) target = $region9
    $region8: #{tpu_custom_call.1} parent=1 // pred_region
      _
    $region9: #{tpu_custom_call.1} parent=1 // pred_fallthru
      _
    // Predicated region
    $region10: #{tpu_custom_call.1} parent=1 // pred_check
      _
    $region11: #{tpu_custom_call.1} parent=1 // pred_check_branch
      %29 = sbr.rel (0) target = $region13
    $region12: #{tpu_custom_call.1} parent=1 // pred_region
      _
    $region13: #{tpu_custom_call.1} parent=1 // pred_fallthru
      _
    // Predicated region
    $region14: #{tpu_custom_call.1} parent=1 // pred_check
      _
    $region15: #{tpu_custom_call.1} parent=1 // pred_check_branch
      %31 = sbr.rel (0) target = $region17
    $region16: #{tpu_custom_call.1} parent=1 // pred_region
      _
    $region17: #{tpu_custom_call.1} parent=1 // pred_fallthru
      _
    // Predicated region
    $region18: #{tpu_custom_call.1} parent=1 // pred_check
      _
    $region19: #{tpu_custom_call.1} parent=1 // pred_check_branch
      %33 = sbr.rel (0) target = $region21
    $region20: #{tpu_custom_call.1} parent=1 // pred_region
      _
    $region21: #{tpu_custom_call.1} parent=1 // pred_fallthru
      _
    // Predicated region
    $region22: #{tpu_custom_call.1} parent=1 // pred_check
      _
    $region23: #{tpu_custom_call.1} parent=1 // pred_check_branch
      %35 = sbr.rel (0) target = $region25
    $region24: #{tpu_custom_call.1} parent=1 // pred_region
      _
    $region25: #{tpu_custom_call.1} parent=1 // pred_fallthru
      _
    // Predicated region
    $region26: #{tpu_custom_call.1} parent=1 // pred_check
      _
    $region27: #{tpu_custom_call.1} parent=1 // pred_check_branch
      %37 = sbr.rel (0) target = $region29
    $region28: #{tpu_custom_call.1} parent=1 // pred_region
      _
    $region29: #{tpu_custom_call.1} parent=1 // pred_fallthru
      _
    // Predicated region
    $region30: #{tpu_custom_call.1} parent=1 // pred_check
      _
    $region31: #{tpu_custom_call.1} parent=1 // pred_check_branch
      %39 = sbr.rel (0) target = $region33
    $region32: #{tpu_custom_call.1} parent=1 // pred_region
      _
    $region33: #{tpu_custom_call.1} parent=1 // pred_fallthru
      _
    // Predicated region
    $region34: #{tpu_custom_call.1} parent=1 // pred_check
      _
    $region35: #{tpu_custom_call.1} parent=1 // pred_check_branch
      %41 = sbr.rel (0) target = $region37
    $region36: #{tpu_custom_call.1} parent=1 // pred_region
      %42 = dma.done [#allocation4], 512
    $region37: #{tpu_custom_call.1} parent=1 // pred_fallthru
      _
    %v44 = vld [vmem:[%s3] sm:$0x1]
    %v45 = vld [vmem:[%s5] sm:$0x1]
    %v46 = vld [vmem:[%s7] sm:$0x1]
    %v47 = vld [vmem:[#allocation3] sm:$0xf]
    %v48 = vld [vmem:[#allocation3 + $0x4] sm:$0xf]
    %v49 = vld [vmem:[#allocation3 + $0x8] sm:$0xf]
    %v50 = vld [vmem:[#allocation3 + $0xc] sm:$0xf]
    %v51 = vld [vmem:[#allocation3 + $0x10] sm:$0xf]
    %v52 = vld [vmem:[#allocation3 + $0x14] sm:$0xf]
    %v53 = vld [vmem:[#allocation3 + $0x18] sm:$0xf]
    %v54 = vld [vmem:[#allocation3 + $0x1c] sm:$0xf]
    %v55 = vld [vmem:[%s1] sm:$0xf]
    %v57 = vlaneseq
    %v58 = vshrl.u32 %v57, 7
    %v59 = vsub.s32 0, %v58
    %v60 = vrot.slane %v44, %v59
    %v70 = vunpack.c.l.b16 %v47
    %v71 = vunpack.c.l.b16 %v48
    %v72 = vunpack.c.l.b16 %v49
    %v73 = vunpack.c.l.b16 %v50
    %v74 = vunpack.c.l.b16 %v51
    %v75 = vunpack.c.l.b16 %v52
    %v76 = vunpack.c.l.b16 %v53
    %v77 = vunpack.c.l.b16 %v54
    %v78 = vpack.c.b16 %v71, %v70
    %v79 = vpack.c.b16 %v73, %v72
    %v80 = vpack.c.b16 %v75, %v74
    %v81 = vpack.c.b16 %v77, %v76
    %vm82 = vcmask 64512
    %v84 = vsel %vm82, %v78, 0
    %v87 = vsel %vm82, %v79, 0
    %v90 = vsel %vm82, %v80, 0
    %v93 = vsel %vm82, %v81, 0
    %vm95 = vcmask 1043456
    %v97 = vsel %vm95, %v55, 0
    %99 = vmatprep.subr.bf16.mxu0 0
    %100 = vmatpush1.bf16.msra.mxu0 0
    %101 = vmatprep.subr.bf16.mxu0 0
    %102 = vmatpush1.bf16.msra.mxu0 0
    %103 = vmatprep.subr.bf16.mxu0 0
    %104 = vmatpush1.bf16.msra.mxu0 0
    %105 = vmatprep.subr.bf16.mxu0 0
    %106 = vmatpush1.bf16.msra.mxu0 0
    %107 = vmatprep.subr.bf16.mxu0 0
    %108 = vmatpush1.bf16.msra.mxu0 0
    %109 = vmatprep.subr.bf16.mxu0 0
    %110 = vmatpush1.bf16.msra.mxu0 0
    %111 = vmatprep.subr.bf16.mxu0 0
    %112 = vmatpush1.bf16.msra.mxu0 0
    %113 = vmatprep.subr.bf16.mxu0 0
    %114 = vmatpush1.bf16.msra.mxu0 %v97
    %115 = vmatprep.subr.bf16.mxu0 0
    %116 = vmatpush2.bf16.msra.mxu0 0
    %117 = vmatprep.subr.bf16.mxu0 0
    %118 = vmatpush2.bf16.msra.mxu0 0
    %119 = vmatprep.subr.bf16.mxu0 0
    %120 = vmatpush2.bf16.msra.mxu0 0
    %121 = vmatprep.subr.bf16.mxu0 0
    %122 = vmatpush2.bf16.msra.mxu0 0
    %123 = vmatprep.subr.bf16.mxu0 0
    %124 = vmatpush2.bf16.msra.mxu0 0
    %125 = vmatprep.subr.bf16.mxu0 0
    %126 = vmatpush2.bf16.msra.mxu0 0
    %127 = vmatprep.subr.bf16.mxu0 0
    %128 = vmatpush2.bf16.msra.mxu0 0
    %129 = vmatprep.subr.bf16.mxu0 0
    %130 = vmatpush2.bf16.msra.mxu0 0
    %131 = vmatprep.mubr.bf16.mxu0 0
    %132 = vmatmul.mubr.bf16.gmra.mxu0 %v84
    %v133 = vpop.f32.mrf.mxu0
    %v134 = vadd.f32 %v60, %v133
    %v135 = vpop.f32.mrf.mxu0
    %v136 = vpop.f32.mrf.mxu0
    %v137 = vadd.f32 %v60, %v136
    %v138 = vpop.f32.mrf.mxu0
    %139 = vmatprep.mubr.bf16.mxu0 0
    %140 = vmatmul.mubr.bf16.gmra.mxu0 %v87
    %v141 = vpop.f32.mrf.mxu0
    %v142 = vadd.f32 %v60, %v141
    %v143 = vpop.f32.mrf.mxu0
    %v144 = vpop.f32.mrf.mxu0
    %v145 = vadd.f32 %v60, %v144
    %v146 = vpop.f32.mrf.mxu0
    %147 = vmatprep.mubr.bf16.mxu0 0
    %148 = vmatmul.mubr.bf16.gmra.mxu0 %v90
    %v149 = vpop.f32.mrf.mxu0
    %v150 = vadd.f32 %v60, %v149
    %v151 = vpop.f32.mrf.mxu0
    %v152 = vpop.f32.mrf.mxu0
    %v153 = vadd.f32 %v60, %v152
    %v154 = vpop.f32.mrf.mxu0
    %155 = vmatprep.mubr.bf16.mxu0 0
    %156 = vmatmul.mubr.bf16.gmra.mxu0 %v93
    %v157 = vpop.f32.mrf.mxu0
    %v158 = vadd.f32 %v60, %v157
    %v159 = vpop.f32.mrf.mxu0
    %v160 = vpop.f32.mrf.mxu0
    %v161 = vadd.f32 %v60, %v160
    %v162 = vpop.f32.mrf.mxu0
    %163 = vdwg.mxu0
    %v164 = vpack.c.bf16 %v134, %v134
    %v165 = vpack.c.bf16 %v137, %v137
    %v166 = vpack.c.bf16 %v142, %v142
    %v167 = vpack.c.bf16 %v145, %v145
    %v168 = vpack.c.bf16 %v150, %v150
    %v169 = vpack.c.bf16 %v153, %v153
    %v170 = vpack.c.bf16 %v158, %v158
    %v171 = vpack.c.bf16 %v161, %v161
    %172 = vst [vmem:[#allocation2] sm:$0xf] %v164
    %173 = vst [vmem:[#allocation2 + $0x4] sm:$0xf] %v165
    %174 = vst [vmem:[#allocation2 + $0x8] sm:$0xf] %v166
    %175 = vst [vmem:[#allocation2 + $0xc] sm:$0xf] %v167
    %176 = vst [vmem:[#allocation2 + $0x10] sm:$0xf] %v168
    %177 = vst [vmem:[#allocation2 + $0x14] sm:$0xf] %v169
    %178 = vst [vmem:[#allocation2 + $0x18] sm:$0xf] %v170
    %179 = vst [vmem:[#allocation2 + $0x1c] sm:$0xf] %v171
    %v180 = vld [vmem:[#allocation2] sm:$0xf]
    %v181 = vunpack.c.l.bf16 %v180
    %v182 = vld [vmem:[%s2] sm:$0xf]
    %v183 = vld [vmem:[%s2 + $0x4] sm:$0xf]
    %v184 = vld [vmem:[%s2 + $0x8] sm:$0xf]
    %v185 = vld [vmem:[%s2 + $0xc] sm:$0xf]
    %v190 = vunpack.c.l.b16 %v182
    %v191 = vunpack.c.l.b16 %v183
    %v192 = vunpack.c.l.b16 %v184
    %v193 = vunpack.c.l.b16 %v185
    %v194 = vpack.c.b16 %v191, %v190
    %v195 = vpack.c.b16 %v193, %v192
    %vm198 = vcmask 261120
    %v200 = vsel %vm198, 0, 0
    %202 = vmatprep.subr.bf16.mxu0 0
    %203 = vmatpush1.bf16.msra.mxu0 0
    %204 = vmatprep.subr.bf16.mxu0 0
    %205 = vmatpush1.bf16.msra.mxu0 0
    %206 = vmatprep.subr.bf16.mxu0 0
    %207 = vmatpush1.bf16.msra.mxu0 0
    %208 = vmatprep.subr.bf16.mxu0 0
    %209 = vmatpush1.bf16.msra.mxu0 0
    %210 = vmatprep.subr.bf16.mxu0 0
    %211 = vmatpush1.bf16.msra.mxu0 0
    %212 = vmatprep.subr.bf16.mxu0 0
    %213 = vmatpush1.bf16.msra.mxu0 0
    %214 = vmatprep.subr.bf16.mxu0 0
    %215 = vmatpush1.bf16.msra.mxu0 %v195
    %216 = vmatprep.subr.bf16.mxu0 0
    %217 = vmatpush1.bf16.msra.mxu0 %v194
    %218 = vmatprep.subr.bf16.mxu0 0
    %219 = vmatpush2.bf16.msra.mxu0 0
    %220 = vmatprep.subr.bf16.mxu0 0
    %221 = vmatpush2.bf16.msra.mxu0 0
    %222 = vmatprep.subr.bf16.mxu0 0
    %223 = vmatpush2.bf16.msra.mxu0 0
    %224 = vmatprep.subr.bf16.mxu0 0
    %225 = vmatpush2.bf16.msra.mxu0 0
    %226 = vmatprep.subr.bf16.mxu0 0
    %227 = vmatpush2.bf16.msra.mxu0 0
    %228 = vmatprep.subr.bf16.mxu0 0
    %229 = vmatpush2.bf16.msra.mxu0 0
    %230 = vmatprep.subr.bf16.mxu0 0
    %231 = vmatpush2.bf16.msra.mxu0 0
    %232 = vmatprep.subr.bf16.mxu0 0
    %233 = vmatpush2.bf16.msra.mxu0 0
    %234 = vmatprep.mubr.bf16.mxu0 0
    %235 = vmatmul.mubr.bf16.gmra.mxu0 %v200
    %v236 = vpop.f32.mrf.mxu0
    %v237 = vadd.f32 0.0, %v236
    %v238 = vpop.f32.mrf.mxu0
    %v239 = vpop.f32.mrf.mxu0
    %v240 = vpop.f32.mrf.mxu0
    %241 = vdwg.mxu0
    %v242 = vadd.f32 %v181, %v237
    %v243 = vxor.u32 %v242, 2147483648
    %v244 = vmul.f32 %v243, 1.442695
    %v245 = vpow.pop %v244
    %v246 = vadd.f32 %v245, 1.0
    %v247 = vrcp.pop %v246
    %v248 = vmul.f32 1.0, %v247
    %v249 = vtanh.pop %v242
    %v250 = vmul.f32 %v248, 0.0
    %252 = vrot.lane.b32.xlu0 %v249, 64
    %v253 = vpop.permute.xlu0 %252
    %v255 = vmul.f32 %v248, %v253
    %257 = vrot.lane.b32.xlu0 %v255, 32
    %v258 = vpop.permute.xlu0 %257
    %v260 = vadd.f32 %v250, %v258
    %v261 = vtanh.pop %v260
    %263 = vrot.lane.b32.xlu0 %v261, 64
    %v264 = vpop.permute.xlu0 %263
    %v266 = vmul.f32 %v248, %v264
    %s267 = scalar_lea.vmem [#allocation2], 4
    %v268 = vld [vmem:[%s267] sm:$0xf]
    %v269 = vunpack.c.l.bf16 %v268
    %v270 = vpack.c.bf16 %v266, %v266
    %272 = vrot.lane.b32.xlu0 %v270, 32
    %v273 = vpop.permute.xlu0 %272
    %v275 = vsel %vm198, %v273, 0
    %277 = vmatprep.subr.bf16.mxu0 0
    %278 = vmatpush1.bf16.msra.mxu0 0
    %279 = vmatprep.subr.bf16.mxu0 0
    %280 = vmatpush1.bf16.msra.mxu0 0
    %281 = vmatprep.subr.bf16.mxu0 0
    %282 = vmatpush1.bf16.msra.mxu0 0
    %283 = vmatprep.subr.bf16.mxu0 0
    %284 = vmatpush1.bf16.msra.mxu0 0
    %285 = vmatprep.subr.bf16.mxu0 0
    %286 = vmatpush1.bf16.msra.mxu0 0
    %287 = vmatprep.subr.bf16.mxu0 0
    %288 = vmatpush1.bf16.msra.mxu0 0
    %289 = vmatprep.subr.bf16.mxu0 0
    %290 = vmatpush1.bf16.msra.mxu0 %v195
    %291 = vmatprep.subr.bf16.mxu0 0
    %292 = vmatpush1.bf16.msra.mxu0 %v194
    %293 = vmatprep.subr.bf16.mxu0 0
    %294 = vmatpush2.bf16.msra.mxu0 0
    %295 = vmatprep.subr.bf16.mxu0 0
    %296 = vmatpush2.bf16.msra.mxu0 0
    %297 = vmatprep.subr.bf16.mxu0 0
    %298 = vmatpush2.bf16.msra.mxu0 0
    %299 = vmatprep.subr.bf16.mxu0 0
    %300 = vmatpush2.bf16.msra.mxu0 0
    %301 = vmatprep.subr.bf16.mxu0 0
    %302 = vmatpush2.bf16.msra.mxu0 0
    %303 = vmatprep.subr.bf16.mxu0 0
    %304 = vmatpush2.bf16.msra.mxu0 0
    %305 = vmatprep.subr.bf16.mxu0 0
    %306 = vmatpush2.bf16.msra.mxu0 0
    %307 = vmatprep.subr.bf16.mxu0 0
    %308 = vmatpush2.bf16.msra.mxu0 0
    %309 = vmatprep.mubr.bf16.mxu0 0
    %310 = vmatmul.mubr.bf16.gmra.mxu0 %v275
    %v311 = vpop.f32.mrf.mxu0
    %v312 = vadd.f32 0.0, %v311
    %v313 = vpop.f32.mrf.mxu0
    %v314 = vpop.f32.mrf.mxu0
    %v315 = vpop.f32.mrf.mxu0
    %316 = vdwg.mxu0
    %v317 = vadd.f32 %v269, %v312
    %v318 = vxor.u32 %v317, 2147483648
    %v319 = vmul.f32 %v318, 1.442695
    %v320 = vpow.pop %v319
    %v321 = vadd.f32 %v320, 1.0
    %v322 = vrcp.pop %v321
    %v323 = vmul.f32 1.0, %v322
    %v324 = vtanh.pop %v317
    %v325 = vmul.f32 %v323, %v260
    %327 = vrot.lane.b32.xlu0 %v324, 64
    %v328 = vpop.permute.xlu0 %327
    %v330 = vmul.f32 %v323, %v328
    %332 = vrot.lane.b32.xlu0 %v330, 32
    %v333 = vpop.permute.xlu0 %332
    %v335 = vadd.f32 %v325, %v333
    %v336 = vtanh.pop %v335
    %338 = vrot.lane.b32.xlu0 %v336, 64
    %v339 = vpop.permute.xlu0 %338
    %v341 = vmul.f32 %v323, %v339
    %s342 = scalar_lea.vmem [#allocation2], 8
    %v343 = vld [vmem:[%s342] sm:$0xf]
    %v344 = vunpack.c.l.bf16 %v343
    %v345 = vpack.c.bf16 %v341, %v341
    %347 = vrot.lane.b32.xlu0 %v345, 32
    %v348 = vpop.permute.xlu0 %347
    %v350 = vsel %vm198, %v348, 0
    %352 = vmatprep.subr.bf16.mxu0 0
    %353 = vmatpush1.bf16.msra.mxu0 0
    %354 = vmatprep.subr.bf16.mxu0 0
    %355 = vmatpush1.bf16.msra.mxu0 0
    %356 = vmatprep.subr.bf16.mxu0 0
    %357 = vmatpush1.bf16.msra.mxu0 0
    %358 = vmatprep.subr.bf16.mxu0 0
    %359 = vmatpush1.bf16.msra.mxu0 0
    %360 = vmatprep.subr.bf16.mxu0 0
    %361 = vmatpush1.bf16.msra.mxu0 0
    %362 = vmatprep.subr.bf16.mxu0 0
    %363 = vmatpush1.bf16.msra.mxu0 0
    %364 = vmatprep.subr.bf16.mxu0 0
    %365 = vmatpush1.bf16.msra.mxu0 %v195
    %366 = vmatprep.subr.bf16.mxu0 0
    %367 = vmatpush1.bf16.msra.mxu0 %v194
    %368 = vmatprep.subr.bf16.mxu0 0
    %369 = vmatpush2.bf16.msra.mxu0 0
    %370 = vmatprep.subr.bf16.mxu0 0
    %371 = vmatpush2.bf16.msra.mxu0 0
    %372 = vmatprep.subr.bf16.mxu0 0
    %373 = vmatpush2.bf16.msra.mxu0 0
    %374 = vmatprep.subr.bf16.mxu0 0
    %375 = vmatpush2.bf16.msra.mxu0 0
    %376 = vmatprep.subr.bf16.mxu0 0
    %377 = vmatpush2.bf16.msra.mxu0 0
    %378 = vmatprep.subr.bf16.mxu0 0
    %379 = vmatpush2.bf16.msra.mxu0 0
    %380 = vmatprep.subr.bf16.mxu0 0
    %381 = vmatpush2.bf16.msra.mxu0 0
    %382 = vmatprep.subr.bf16.mxu0 0
    %383 = vmatpush2.bf16.msra.mxu0 0
    %384 = vmatprep.mubr.bf16.mxu0 0
    %385 = vmatmul.mubr.bf16.gmra.mxu0 %v350
    %v386 = vpop.f32.mrf.mxu0
    %v387 = vadd.f32 0.0, %v386
    %v388 = vpop.f32.mrf.mxu0
    %v389 = vpop.f32.mrf.mxu0
    %v390 = vpop.f32.mrf.mxu0
    %391 = vdwg.mxu0
    %v392 = vadd.f32 %v344, %v387
    %v393 = vxor.u32 %v392, 2147483648
    %v394 = vmul.f32 %v393, 1.442695
    %v395 = vpow.pop %v394
    %v396 = vadd.f32 %v395, 1.0
    %v397 = vrcp.pop %v396
    %v398 = vmul.f32 1.0, %v397
    %v399 = vtanh.pop %v392
    %v400 = vmul.f32 %v398, %v335
    %402 = vrot.lane.b32.xlu0 %v399, 64
    %v403 = vpop.permute.xlu0 %402
    %v405 = vmul.f32 %v398, %v403
    %407 = vrot.lane.b32.xlu0 %v405, 32
    %v408 = vpop.permute.xlu0 %407
    %v410 = vadd.f32 %v400, %v408
    %v411 = vtanh.pop %v410
    %413 = vrot.lane.b32.xlu0 %v411, 64
    %v414 = vpop.permute.xlu0 %413
    %v416 = vmul.f32 %v398, %v414
    %s417 = scalar_lea.vmem [#allocation2], 12
    %v418 = vld [vmem:[%s417] sm:$0xf]
    %v419 = vunpack.c.l.bf16 %v418
    %v420 = vpack.c.bf16 %v416, %v416
    %422 = vrot.lane.b32.xlu0 %v420, 32
    %v423 = vpop.permute.xlu0 %422
    %v425 = vsel %vm198, %v423, 0
    %427 = vmatprep.subr.bf16.mxu0 0
    %428 = vmatpush1.bf16.msra.mxu0 0
    %429 = vmatprep.subr.bf16.mxu0 0
    %430 = vmatpush1.bf16.msra.mxu0 0
    %431 = vmatprep.subr.bf16.mxu0 0
    %432 = vmatpush1.bf16.msra.mxu0 0
    %433 = vmatprep.subr.bf16.mxu0 0
    %434 = vmatpush1.bf16.msra.mxu0 0
    %435 = vmatprep.subr.bf16.mxu0 0
    %436 = vmatpush1.bf16.msra.mxu0 0
    %437 = vmatprep.subr.bf16.mxu0 0
    %438 = vmatpush1.bf16.msra.mxu0 0
    %439 = vmatprep.subr.bf16.mxu0 0
    %440 = vmatpush1.bf16.msra.mxu0 %v195
    %441 = vmatprep.subr.bf16.mxu0 0
    %442 = vmatpush1.bf16.msra.mxu0 %v194
    %443 = vmatprep.subr.bf16.mxu0 0
    %444 = vmatpush2.bf16.msra.mxu0 0
    %445 = vmatprep.subr.bf16.mxu0 0
    %446 = vmatpush2.bf16.msra.mxu0 0
    %447 = vmatprep.subr.bf16.mxu0 0
    %448 = vmatpush2.bf16.msra.mxu0 0
    %449 = vmatprep.subr.bf16.mxu0 0
    %450 = vmatpush2.bf16.msra.mxu0 0
    %451 = vmatprep.subr.bf16.mxu0 0
    %452 = vmatpush2.bf16.msra.mxu0 0
    %453 = vmatprep.subr.bf16.mxu0 0
    %454 = vmatpush2.bf16.msra.mxu0 0
    %455 = vmatprep.subr.bf16.mxu0 0
    %456 = vmatpush2.bf16.msra.mxu0 0
    %457 = vmatprep.subr.bf16.mxu0 0
    %458 = vmatpush2.bf16.msra.mxu0 0
    %459 = vmatprep.mubr.bf16.mxu0 0
    %460 = vmatmul.mubr.bf16.gmra.mxu0 %v425
    %v461 = vpop.f32.mrf.mxu0
    %v462 = vadd.f32 0.0, %v461
    %v463 = vpop.f32.mrf.mxu0
    %v464 = vpop.f32.mrf.mxu0
    %v465 = vpop.f32.mrf.mxu0
    %466 = vdwg.mxu0
    %v467 = vadd.f32 %v419, %v462
    %v468 = vxor.u32 %v467, 2147483648
    %v469 = vmul.f32 %v468, 1.442695
    %v470 = vpow.pop %v469
    %v471 = vadd.f32 %v470, 1.0
    %v472 = vrcp.pop %v471
    %v473 = vmul.f32 1.0, %v472
    %v474 = vtanh.pop %v467
    %v475 = vmul.f32 %v473, %v410
    %477 = vrot.lane.b32.xlu0 %v474, 64
    %v478 = vpop.permute.xlu0 %477
    %v480 = vmul.f32 %v473, %v478
    %482 = vrot.lane.b32.xlu0 %v480, 32
    %v483 = vpop.permute.xlu0 %482
    %v485 = vadd.f32 %v475, %v483
    %v486 = vtanh.pop %v485
    %488 = vrot.lane.b32.xlu0 %v486, 64
    %v489 = vpop.permute.xlu0 %488
    %v491 = vmul.f32 %v473, %v489
    %s492 = scalar_lea.vmem [#allocation2], 16
    %v493 = vld [vmem:[%s492] sm:$0xf]
    %v494 = vunpack.c.l.bf16 %v493
    %v495 = vpack.c.bf16 %v491, %v491
    %497 = vrot.lane.b32.xlu0 %v495, 32
    %v498 = vpop.permute.xlu0 %497
    %v500 = vsel %vm198, %v498, 0
    %502 = vmatprep.subr.bf16.mxu0 0
    %503 = vmatpush1.bf16.msra.mxu0 0
    %504 = vmatprep.subr.bf16.mxu0 0
    %505 = vmatpush1.bf16.msra.mxu0 0
    %506 = vmatprep.subr.bf16.mxu0 0
    %507 = vmatpush1.bf16.msra.mxu0 0
    %508 = vmatprep.subr.bf16.mxu0 0
    %509 = vmatpush1.bf16.msra.mxu0 0
    %510 = vmatprep.subr.bf16.mxu0 0
    %511 = vmatpush1.bf16.msra.mxu0 0
    %512 = vmatprep.subr.bf16.mxu0 0
    %513 = vmatpush1.bf16.msra.mxu0 0
    %514 = vmatprep.subr.bf16.mxu0 0
    %515 = vmatpush1.bf16.msra.mxu0 %v195
    %516 = vmatprep.subr.bf16.mxu0 0
    %517 = vmatpush1.bf16.msra.mxu0 %v194
    %518 = vmatprep.subr.bf16.mxu0 0
    %519 = vmatpush2.bf16.msra.mxu0 0
    %520 = vmatprep.subr.bf16.mxu0 0
    %521 = vmatpush2.bf16.msra.mxu0 0
    %522 = vmatprep.subr.bf16.mxu0 0
    %523 = vmatpush2.bf16.msra.mxu0 0
    %524 = vmatprep.subr.bf16.mxu0 0
    %525 = vmatpush2.bf16.msra.mxu0 0
    %526 = vmatprep.subr.bf16.mxu0 0
    %527 = vmatpush2.bf16.msra.mxu0 0
    %528 = vmatprep.subr.bf16.mxu0 0
    %529 = vmatpush2.bf16.msra.mxu0 0
    %530 = vmatprep.subr.bf16.mxu0 0
    %531 = vmatpush2.bf16.msra.mxu0 0
    %532 = vmatprep.subr.bf16.mxu0 0
    %533 = vmatpush2.bf16.msra.mxu0 0
    %534 = vmatprep.mubr.bf16.mxu0 0
    %535 = vmatmul.mubr.bf16.gmra.mxu0 %v500
    %v536 = vpop.f32.mrf.mxu0
    %v537 = vadd.f32 0.0, %v536
    %v538 = vpop.f32.mrf.mxu0
    %v539 = vpop.f32.mrf.mxu0
    %v540 = vpop.f32.mrf.mxu0
    %541 = vdwg.mxu0
    %v542 = vadd.f32 %v494, %v537
    %v543 = vxor.u32 %v542, 2147483648
    %v544 = vmul.f32 %v543, 1.442695
    %v545 = vpow.pop %v544
    %v546 = vadd.f32 %v545, 1.0
    %v547 = vrcp.pop %v546
    %v548 = vmul.f32 1.0, %v547
    %v549 = vtanh.pop %v542
    %v550 = vmul.f32 %v548, %v485
    %552 = vrot.lane.b32.xlu0 %v549, 64
    %v553 = vpop.permute.xlu0 %552
    %v555 = vmul.f32 %v548, %v553
    %557 = vrot.lane.b32.xlu0 %v555, 32
    %v558 = vpop.permute.xlu0 %557
    %v560 = vadd.f32 %v550, %v558
    %v561 = vtanh.pop %v560
    %563 = vrot.lane.b32.xlu0 %v561, 64
    %v564 = vpop.permute.xlu0 %563
    %v566 = vmul.f32 %v548, %v564
    %s567 = scalar_lea.vmem [#allocation2], 20
    %v568 = vld [vmem:[%s567] sm:$0xf]
    %v569 = vunpack.c.l.bf16 %v568
    %v570 = vpack.c.bf16 %v566, %v566
    %572 = vrot.lane.b32.xlu0 %v570, 32
    %v573 = vpop.permute.xlu0 %572
    %v575 = vsel %vm198, %v573, 0
    %577 = vmatprep.subr.bf16.mxu0 0
    %578 = vmatpush1.bf16.msra.mxu0 0
    %579 = vmatprep.subr.bf16.mxu0 0
    %580 = vmatpush1.bf16.msra.mxu0 0
    %581 = vmatprep.subr.bf16.mxu0 0
    %582 = vmatpush1.bf16.msra.mxu0 0
    %583 = vmatprep.subr.bf16.mxu0 0
    %584 = vmatpush1.bf16.msra.mxu0 0
    %585 = vmatprep.subr.bf16.mxu0 0
    %586 = vmatpush1.bf16.msra.mxu0 0
    %587 = vmatprep.subr.bf16.mxu0 0
    %588 = vmatpush1.bf16.msra.mxu0 0
    %589 = vmatprep.subr.bf16.mxu0 0
    %590 = vmatpush1.bf16.msra.mxu0 %v195
    %591 = vmatprep.subr.bf16.mxu0 0
    %592 = vmatpush1.bf16.msra.mxu0 %v194
    %593 = vmatprep.subr.bf16.mxu0 0
    %594 = vmatpush2.bf16.msra.mxu0 0
    %595 = vmatprep.subr.bf16.mxu0 0
    %596 = vmatpush2.bf16.msra.mxu0 0
    %597 = vmatprep.subr.bf16.mxu0 0
    %598 = vmatpush2.bf16.msra.mxu0 0
    %599 = vmatprep.subr.bf16.mxu0 0
    %600 = vmatpush2.bf16.msra.mxu0 0
    %601 = vmatprep.subr.bf16.mxu0 0
    %602 = vmatpush2.bf16.msra.mxu0 0
    %603 = vmatprep.subr.bf16.mxu0 0
    %604 = vmatpush2.bf16.msra.mxu0 0
    %605 = vmatprep.subr.bf16.mxu0 0
    %606 = vmatpush2.bf16.msra.mxu0 0
    %607 = vmatprep.subr.bf16.mxu0 0
    %608 = vmatpush2.bf16.msra.mxu0 0
    %609 = vmatprep.mubr.bf16.mxu0 0
    %610 = vmatmul.mubr.bf16.gmra.mxu0 %v575
    %v611 = vpop.f32.mrf.mxu0
    %v612 = vadd.f32 0.0, %v611
    %v613 = vpop.f32.mrf.mxu0
    %v614 = vpop.f32.mrf.mxu0
    %v615 = vpop.f32.mrf.mxu0
    %616 = vdwg.mxu0
    %v617 = vadd.f32 %v569, %v612
    %v618 = vxor.u32 %v617, 2147483648
    %v619 = vmul.f32 %v618, 1.442695
    %v620 = vpow.pop %v619
    %v621 = vadd.f32 %v620, 1.0
    %v622 = vrcp.pop %v621
    %v623 = vmul.f32 1.0, %v622
    %v624 = vtanh.pop %v617
    %v625 = vmul.f32 %v623, %v560
    %627 = vrot.lane.b32.xlu0 %v624, 64
    %v628 = vpop.permute.xlu0 %627
    %v630 = vmul.f32 %v623, %v628
    %632 = vrot.lane.b32.xlu0 %v630, 32
    %v633 = vpop.permute.xlu0 %632
    %v635 = vadd.f32 %v625, %v633
    %v636 = vtanh.pop %v635
    %638 = vrot.lane.b32.xlu0 %v636, 64
    %v639 = vpop.permute.xlu0 %638
    %v641 = vmul.f32 %v623, %v639
    %s642 = scalar_lea.vmem [#allocation2], 24
    %v643 = vld [vmem:[%s642] sm:$0xf]
    %v644 = vunpack.c.l.bf16 %v643
    %v645 = vpack.c.bf16 %v641, %v641
    %647 = vrot.lane.b32.xlu0 %v645, 32
    %v648 = vpop.permute.xlu0 %647
    %v650 = vsel %vm198, %v648, 0
    %652 = vmatprep.subr.bf16.mxu0 0
    %653 = vmatpush1.bf16.msra.mxu0 0
    %654 = vmatprep.subr.bf16.mxu0 0
    %655 = vmatpush1.bf16.msra.mxu0 0
    %656 = vmatprep.subr.bf16.mxu0 0
    %657 = vmatpush1.bf16.msra.mxu0 0
    %658 = vmatprep.subr.bf16.mxu0 0
    %659 = vmatpush1.bf16.msra.mxu0 0
    %660 = vmatprep.subr.bf16.mxu0 0
    %661 = vmatpush1.bf16.msra.mxu0 0
    %662 = vmatprep.subr.bf16.mxu0 0
    %663 = vmatpush1.bf16.msra.mxu0 0
    %664 = vmatprep.subr.bf16.mxu0 0
    %665 = vmatpush1.bf16.msra.mxu0 %v195
    %666 = vmatprep.subr.bf16.mxu0 0
    %667 = vmatpush1.bf16.msra.mxu0 %v194
    %668 = vmatprep.subr.bf16.mxu0 0
    %669 = vmatpush2.bf16.msra.mxu0 0
    %670 = vmatprep.subr.bf16.mxu0 0
    %671 = vmatpush2.bf16.msra.mxu0 0
    %672 = vmatprep.subr.bf16.mxu0 0
    %673 = vmatpush2.bf16.msra.mxu0 0
    %674 = vmatprep.subr.bf16.mxu0 0
    %675 = vmatpush2.bf16.msra.mxu0 0
    %676 = vmatprep.subr.bf16.mxu0 0
    %677 = vmatpush2.bf16.msra.mxu0 0
    %678 = vmatprep.subr.bf16.mxu0 0
    %679 = vmatpush2.bf16.msra.mxu0 0
    %680 = vmatprep.subr.bf16.mxu0 0
    %681 = vmatpush2.bf16.msra.mxu0 0
    %682 = vmatprep.subr.bf16.mxu0 0
    %683 = vmatpush2.bf16.msra.mxu0 0
    %684 = vmatprep.mubr.bf16.mxu0 0
    %685 = vmatmul.mubr.bf16.gmra.mxu0 %v650
    %v686 = vpop.f32.mrf.mxu0
    %v687 = vadd.f32 0.0, %v686
    %v688 = vpop.f32.mrf.mxu0
    %v689 = vpop.f32.mrf.mxu0
    %v690 = vpop.f32.mrf.mxu0
    %691 = vdwg.mxu0
    %v692 = vadd.f32 %v644, %v687
    %v693 = vxor.u32 %v692, 2147483648
    %v694 = vmul.f32 %v693, 1.442695
    %v695 = vpow.pop %v694
    %v696 = vadd.f32 %v695, 1.0
    %v697 = vrcp.pop %v696
    %v698 = vmul.f32 1.0, %v697
    %v699 = vtanh.pop %v692
    %v700 = vmul.f32 %v698, %v635
    %702 = vrot.lane.b32.xlu0 %v699, 64
    %v703 = vpop.permute.xlu0 %702
    %v705 = vmul.f32 %v698, %v703
    %707 = vrot.lane.b32.xlu0 %v705, 32
    %v708 = vpop.permute.xlu0 %707
    %v710 = vadd.f32 %v700, %v708
    %v711 = vtanh.pop %v710
    %713 = vrot.lane.b32.xlu0 %v711, 64
    %v714 = vpop.permute.xlu0 %713
    %v716 = vmul.f32 %v698, %v714
    %s717 = scalar_lea.vmem [#allocation2], 28
    %v718 = vld [vmem:[%s717] sm:$0xf]
    %v719 = vunpack.c.l.bf16 %v718
    %v720 = vpack.c.bf16 %v716, %v716
    %722 = vrot.lane.b32.xlu0 %v720, 32
    %v723 = vpop.permute.xlu0 %722
    %v725 = vsel %vm198, %v723, 0
    %727 = vmatprep.subr.bf16.mxu0 0
    %728 = vmatpush1.bf16.msra.mxu0 0
    %729 = vmatprep.subr.bf16.mxu0 0
    %730 = vmatpush1.bf16.msra.mxu0 0
    %731 = vmatprep.subr.bf16.mxu0 0
    %732 = vmatpush1.bf16.msra.mxu0 0
    %733 = vmatprep.subr.bf16.mxu0 0
    %734 = vmatpush1.bf16.msra.mxu0 0
    %735 = vmatprep.subr.bf16.mxu0 0
    %736 = vmatpush1.bf16.msra.mxu0 0
    %737 = vmatprep.subr.bf16.mxu0 0
    %738 = vmatpush1.bf16.msra.mxu0 0
    %739 = vmatprep.subr.bf16.mxu0 0
    %740 = vmatpush1.bf16.msra.mxu0 %v195
    %741 = vmatprep.subr.bf16.mxu0 0
    %742 = vmatpush1.bf16.msra.mxu0 %v194
    %743 = vmatprep.subr.bf16.mxu0 0
    %744 = vmatpush2.bf16.msra.mxu0 0
    %745 = vmatprep.subr.bf16.mxu0 0
    %746 = vmatpush2.bf16.msra.mxu0 0
    %747 = vmatprep.subr.bf16.mxu0 0
    %748 = vmatpush2.bf16.msra.mxu0 0
    %749 = vmatprep.subr.bf16.mxu0 0
    %750 = vmatpush2.bf16.msra.mxu0 0
    %751 = vmatprep.subr.bf16.mxu0 0
    %752 = vmatpush2.bf16.msra.mxu0 0
    %753 = vmatprep.subr.bf16.mxu0 0
    %754 = vmatpush2.bf16.msra.mxu0 0
    %755 = vmatprep.subr.bf16.mxu0 0
    %756 = vmatpush2.bf16.msra.mxu0 0
    %757 = vmatprep.subr.bf16.mxu0 0
    %758 = vmatpush2.bf16.msra.mxu0 0
    %759 = vmatprep.mubr.bf16.mxu0 0
    %760 = vmatmul.mubr.bf16.gmra.mxu0 %v725
    %v761 = vpop.f32.mrf.mxu0
    %v762 = vadd.f32 0.0, %v761
    %v763 = vpop.f32.mrf.mxu0
    %v764 = vpop.f32.mrf.mxu0
    %v765 = vpop.f32.mrf.mxu0
    %766 = vdwg.mxu0
    %v767 = vadd.f32 %v719, %v762
    %v768 = vxor.u32 %v767, 2147483648
    %v769 = vmul.f32 %v768, 1.442695
    %v770 = vpow.pop %v769
    %v771 = vadd.f32 %v770, 1.0
    %v772 = vrcp.pop %v771
    %v773 = vmul.f32 1.0, %v772
    %v774 = vtanh.pop %v767
    %v775 = vmul.f32 %v773, %v710
    %777 = vrot.lane.b32.xlu0 %v774, 64
    %v778 = vpop.permute.xlu0 %777
    %v780 = vmul.f32 %v773, %v778
    %782 = vrot.lane.b32.xlu0 %v780, 32
    %v783 = vpop.permute.xlu0 %782
    %v785 = vadd.f32 %v775, %v783
    %v786 = vtanh.pop %v785
    %788 = vrot.lane.b32.xlu0 %v786, 64
    %v789 = vpop.permute.xlu0 %788
    %v791 = vmul.f32 %v773, %v789
    %v792 = vpack.c.bf16 %v791, %v791
    %v793 = vld [vmem:[%s4] sm:$0xf]
    %v794 = vld [vmem:[%s4 + $0x4] sm:$0xf]
    %v795 = vld [vmem:[%s4 + $0x8] sm:$0xf]
    %v796 = vld [vmem:[%s4 + $0xc] sm:$0xf]
    %v798 = vlaneseq
    %v799 = vshrl.u32 %v798, 7
    %v800 = vsub.s32 0, %v799
    %v801 = vrot.slane %v45, %v800
    %804 = vrot.lane.b32.xlu0 %v792, 32
    %v805 = vpop.permute.xlu0 %804
    %v810 = vunpack.c.l.b16 %v793
    %v811 = vunpack.c.l.b16 %v794
    %v812 = vunpack.c.l.b16 %v795
    %v813 = vunpack.c.l.b16 %v796
    %v814 = vpack.c.b16 %v811, %v810
    %v815 = vpack.c.b16 %v813, %v812
    %v819 = vsel %vm198, %v805, 0
    %821 = vmatprep.subr.bf16.mxu0 0
    %822 = vmatpush1.bf16.msra.mxu0 0
    %823 = vmatprep.subr.bf16.mxu0 0
    %824 = vmatpush1.bf16.msra.mxu0 0
    %825 = vmatprep.subr.bf16.mxu0 0
    %826 = vmatpush1.bf16.msra.mxu0 0
    %827 = vmatprep.subr.bf16.mxu0 0
    %828 = vmatpush1.bf16.msra.mxu0 0
    %829 = vmatprep.subr.bf16.mxu0 0
    %830 = vmatpush1.bf16.msra.mxu0 0
    %831 = vmatprep.subr.bf16.mxu0 0
    %832 = vmatpush1.bf16.msra.mxu0 0
    %833 = vmatprep.subr.bf16.mxu0 0
    %834 = vmatpush1.bf16.msra.mxu0 %v815
    %835 = vmatprep.subr.bf16.mxu0 0
    %836 = vmatpush1.bf16.msra.mxu0 %v814
    %837 = vmatprep.subr.bf16.mxu0 0
    %838 = vmatpush2.bf16.msra.mxu0 0
    %839 = vmatprep.subr.bf16.mxu0 0
    %840 = vmatpush2.bf16.msra.mxu0 0
    %841 = vmatprep.subr.bf16.mxu0 0
    %842 = vmatpush2.bf16.msra.mxu0 0
    %843 = vmatprep.subr.bf16.mxu0 0
    %844 = vmatpush2.bf16.msra.mxu0 0
    %845 = vmatprep.subr.bf16.mxu0 0
    %846 = vmatpush2.bf16.msra.mxu0 0
    %847 = vmatprep.subr.bf16.mxu0 0
    %848 = vmatpush2.bf16.msra.mxu0 0
    %849 = vmatprep.subr.bf16.mxu0 0
    %850 = vmatpush2.bf16.msra.mxu0 0
    %851 = vmatprep.subr.bf16.mxu0 0
    %852 = vmatpush2.bf16.msra.mxu0 0
    %853 = vmatprep.mubr.bf16.mxu0 0
    %854 = vmatmul.mubr.bf16.gmra.mxu0 %v819
    %v855 = vpop.f32.mrf.mxu0
    %v856 = vadd.f32 %v801, %v855
    %v857 = vpop.f32.mrf.mxu0
    %v858 = vpop.f32.mrf.mxu0
    %v859 = vpop.f32.mrf.mxu0
    %860 = vdwg.mxu0
    %v861 = vxor.u32 %v856, 2147483648
    %v862 = vmul.f32 %v861, 1.442695
    %v863 = vpow.pop %v862
    %v864 = vadd.f32 %v863, 1.0
    %v865 = vrcp.pop %v864
    %v866 = vmul.f32 1.0, %v865
    %v867 = vtanh.pop %v856
    %v868 = vmul.f32 %v866, 0.0
    %870 = vrot.lane.b32.xlu0 %v867, 120
    %v871 = vpop.permute.xlu0 %870
    %v873 = vmul.f32 %v866, %v871
    %875 = vrot.lane.b32.xlu0 %v873, 4
    %v876 = vpop.permute.xlu0 %875
    %v878 = vadd.f32 %v868, %v876
    %v879 = vtanh.pop %v878
    %881 = vrot.lane.b32.xlu0 %v879, 8
    %v882 = vpop.permute.xlu0 %881
    %v884 = vmul.f32 %v866, %v882
    %886 = vrot.lane.b32.xlu0 %v884, 116
    %v887 = vpop.permute.xlu0 %886
    %vm889 = vcmask 31744
    %890 = vst.msk [vmem:[%s8] sm:$0xff] %vm889, %v887
    %v891 = vpack.c.bf16 %v884, %v884
    %v892 = vld [vmem:[%s6] sm:$0x3]
    %v894 = vlaneseq
    %v895 = vshrl.u32 %v894, 7
    %v896 = vsub.s32 0, %v895
    %v897 = vrot.slane %v46, %v896
    %900 = vrot.lane.b32.xlu0 %v891, 116
    %v901 = vpop.permute.xlu0 %900
    %v903 = vsel %vm889, %v901, 0
    %vm905 = vcmask 1041408
    %v907 = vsel %vm905, %v892, 0
    %909 = vmatprep.subr.bf16.mxu0 0
    %910 = vmatpush1.bf16.msra.mxu0 0
    %911 = vmatprep.subr.bf16.mxu0 0
    %912 = vmatpush1.bf16.msra.mxu0 0
    %913 = vmatprep.subr.bf16.mxu0 0
    %914 = vmatpush1.bf16.msra.mxu0 0
    %915 = vmatprep.subr.bf16.mxu0 0
    %916 = vmatpush1.bf16.msra.mxu0 0
    %917 = vmatprep.subr.bf16.mxu0 0
    %918 = vmatpush1.bf16.msra.mxu0 0
    %919 = vmatprep.subr.bf16.mxu0 0
    %920 = vmatpush1.bf16.msra.mxu0 0
    %921 = vmatprep.subr.bf16.mxu0 0
    %922 = vmatpush1.bf16.msra.mxu0 0
    %923 = vmatprep.subr.bf16.mxu0 0
    %924 = vmatpush1.bf16.msra.mxu0 %v907
    %925 = vmatprep.subr.bf16.mxu0 0
    %926 = vmatpush2.bf16.msra.mxu0 0
    %927 = vmatprep.subr.bf16.mxu0 0
    %928 = vmatpush2.bf16.msra.mxu0 0
    %929 = vmatprep.subr.bf16.mxu0 0
    %930 = vmatpush2.bf16.msra.mxu0 0
    %931 = vmatprep.subr.bf16.mxu0 0
    %932 = vmatpush2.bf16.msra.mxu0 0
    %933 = vmatprep.subr.bf16.mxu0 0
    %934 = vmatpush2.bf16.msra.mxu0 0
    %935 = vmatprep.subr.bf16.mxu0 0
    %936 = vmatpush2.bf16.msra.mxu0 0
    %937 = vmatprep.subr.bf16.mxu0 0
    %938 = vmatpush2.bf16.msra.mxu0 0
    %939 = vmatprep.subr.bf16.mxu0 0
    %940 = vmatpush2.bf16.msra.mxu0 0
    %941 = vmatprep.mubr.bf16.mxu0 0
    %942 = vmatmul.mubr.bf16.gmra.mxu0 %v903
    %v943 = vpop.f32.mrf.mxu0
    %v944 = vadd.f32 %v897, %v943
    %v945 = vpop.f32.mrf.mxu0
    %v946 = vpop.f32.mrf.mxu0
    %v947 = vpop.f32.mrf.mxu0
    %948 = vdwg.mxu0
    %v949 = vxor.u32 %v944, 2147483648
    %v950 = vmul.f32 %v949, 1.442695
    %v951 = vpow.pop %v950
    %v952 = vadd.f32 %v951, 1.0
    %v953 = vrcp.pop %v952
    %v954 = vmul.f32 1.0, %v953
    %v955 = vtanh.pop %v944
    %v956 = vmul.f32 %v954, %v878
    %958 = vrot.lane.b32.xlu0 %v955, 120
    %v959 = vpop.permute.xlu0 %958
    %v961 = vmul.f32 %v954, %v959
    %963 = vrot.lane.b32.xlu0 %v961, 4
    %v964 = vpop.permute.xlu0 %963
    %v966 = vadd.f32 %v956, %v964
    %v967 = vtanh.pop %v966
    %969 = vrot.lane.b32.xlu0 %v967, 8
    %v970 = vpop.permute.xlu0 %969
    %v972 = vmul.f32 %v954, %v970
    %974 = vrot.lane.b32.xlu0 %v972, 116
    %v975 = vpop.permute.xlu0 %974
    %s977 = scalar_lea.vmem %s8, 56
    %978 = vst.msk [vmem:[%s977] sm:$0xff] %vm889, %v975
    %v979 = vpack.c.bf16 %v972, %v972
    %v980 = vld [vmem:[%s6] sm:$0x3]
    %982 = vrot.lane.b32.xlu0 %v979, 116
    %v983 = vpop.permute.xlu0 %982
    %v985 = vsel %vm889, %v983, 0
    %v988 = vsel %vm905, %v980, 0
    %990 = vmatprep.subr.bf16.mxu0 0
    %991 = vmatpush1.bf16.msra.mxu0 0
    %992 = vmatprep.subr.bf16.mxu0 0
    %993 = vmatpush1.bf16.msra.mxu0 0
    %994 = vmatprep.subr.bf16.mxu0 0
    %995 = vmatpush1.bf16.msra.mxu0 0
    %996 = vmatprep.subr.bf16.mxu0 0
    %997 = vmatpush1.bf16.msra.mxu0 0
    %998 = vmatprep.subr.bf16.mxu0 0
    %999 = vmatpush1.bf16.msra.mxu0 0
    %1000 = vmatprep.subr.bf16.mxu0 0
    %1001 = vmatpush1.bf16.msra.mxu0 0
    %1002 = vmatprep.subr.bf16.mxu0 0
    %1003 = vmatpush1.bf16.msra.mxu0 0
    %1004 = vmatprep.subr.bf16.mxu0 0
    %1005 = vmatpush1.bf16.msra.mxu0 %v988
    %1006 = vmatprep.subr.bf16.mxu0 0
    %1007 = vmatpush2.bf16.msra.mxu0 0
    %1008 = vmatprep.subr.bf16.mxu0 0
    %1009 = vmatpush2.bf16.msra.mxu0 0
    %1010 = vmatprep.subr.bf16.mxu0 0
    %1011 = vmatpush2.bf16.msra.mxu0 0
    %1012 = vmatprep.subr.bf16.mxu0 0
    %1013 = vmatpush2.bf16.msra.mxu0 0
    %1014 = vmatprep.subr.bf16.mxu0 0
    %1015 = vmatpush2.bf16.msra.mxu0 0
    %1016 = vmatprep.subr.bf16.mxu0 0
    %1017 = vmatpush2.bf16.msra.mxu0 0
    %1018 = vmatprep.subr.bf16.mxu0 0
    %1019 = vmatpush2.bf16.msra.mxu0 0
    %1020 = vmatprep.subr.bf16.mxu0 0
    %1021 = vmatpush2.bf16.msra.mxu0 0
    %1022 = vmatprep.mubr.bf16.mxu0 0
    %1023 = vmatmul.mubr.bf16.gmra.mxu0 %v985
    %v1024 = vpop.f32.mrf.mxu0
    %v1025 = vadd.f32 %v897, %v1024
    %v1026 = vpop.f32.mrf.mxu0
    %v1027 = vpop.f32.mrf.mxu0
    %v1028 = vpop.f32.mrf.mxu0
    %1029 = vdwg.mxu0
    %v1030 = vxor.u32 %v1025, 2147483648
    %v1031 = vmul.f32 %v1030, 1.442695
    %v1032 = vpow.pop %v1031
    %v1033 = vadd.f32 %v1032, 1.0
    %v1034 = vrcp.pop %v1033
    %v1035 = vmul.f32 1.0, %v1034
    %v1036 = vtanh.pop %v1025
    %v1037 = vmul.f32 %v1035, %v966
    %1039 = vrot.lane.b32.xlu0 %v1036, 120
    %v1040 = vpop.permute.xlu0 %1039
    %v1042 = vmul.f32 %v1035, %v1040
    %1044 = vrot.lane.b32.xlu0 %v1042, 4
    %v1045 = vpop.permute.xlu0 %1044
    %v1047 = vadd.f32 %v1037, %v1045
    %v1048 = vtanh.pop %v1047
    %1050 = vrot.lane.b32.xlu0 %v1048, 8
    %v1051 = vpop.permute.xlu0 %1050
    %v1053 = vmul.f32 %v1035, %v1051
    %1055 = vrot.lane.b32.xlu0 %v1053, 116
    %v1056 = vpop.permute.xlu0 %1055
    %s1058 = scalar_lea.vmem %s8, 48
    %1059 = vst.msk [vmem:[%s1058] sm:$0xff] %vm889, %v1056
    %v1060 = vpack.c.bf16 %v1053, %v1053
    %v1061 = vld [vmem:[%s6] sm:$0x3]
    %1063 = vrot.lane.b32.xlu0 %v1060, 116
    %v1064 = vpop.permute.xlu0 %1063
    %v1066 = vsel %vm889, %v1064, 0
    %v1069 = vsel %vm905, %v1061, 0
    %1071 = vmatprep.subr.bf16.mxu0 0
    %1072 = vmatpush1.bf16.msra.mxu0 0
    %1073 = vmatprep.subr.bf16.mxu0 0
    %1074 = vmatpush1.bf16.msra.mxu0 0
    %1075 = vmatprep.subr.bf16.mxu0 0
    %1076 = vmatpush1.bf16.msra.mxu0 0
    %1077 = vmatprep.subr.bf16.mxu0 0
    %1078 = vmatpush1.bf16.msra.mxu0 0
    %1079 = vmatprep.subr.bf16.mxu0 0
    %1080 = vmatpush1.bf16.msra.mxu0 0
    %1081 = vmatprep.subr.bf16.mxu0 0
    %1082 = vmatpush1.bf16.msra.mxu0 0
    %1083 = vmatprep.subr.bf16.mxu0 0
    %1084 = vmatpush1.bf16.msra.mxu0 0
    %1085 = vmatprep.subr.bf16.mxu0 0
    %1086 = vmatpush1.bf16.msra.mxu0 %v1069
    %1087 = vmatprep.subr.bf16.mxu0 0
    %1088 = vmatpush2.bf16.msra.mxu0 0
    %1089 = vmatprep.subr.bf16.mxu0 0
    %1090 = vmatpush2.bf16.msra.mxu0 0
    %1091 = vmatprep.subr.bf16.mxu0 0
    %1092 = vmatpush2.bf16.msra.mxu0 0
    %1093 = vmatprep.subr.bf16.mxu0 0
    %1094 = vmatpush2.bf16.msra.mxu0 0
    %1095 = vmatprep.subr.bf16.mxu0 0
    %1096 = vmatpush2.bf16.msra.mxu0 0
    %1097 = vmatprep.subr.bf16.mxu0 0
    %1098 = vmatpush2.bf16.msra.mxu0 0
    %1099 = vmatprep.subr.bf16.mxu0 0
    %1100 = vmatpush2.bf16.msra.mxu0 0
    %1101 = vmatprep.subr.bf16.mxu0 0
    %1102 = vmatpush2.bf16.msra.mxu0 0
    %1103 = vmatprep.mubr.bf16.mxu0 0
    %1104 = vmatmul.mubr.bf16.gmra.mxu0 %v1066
    %v1105 = vpop.f32.mrf.mxu0
    %v1106 = vadd.f32 %v897, %v1105
    %v1107 = vpop.f32.mrf.mxu0
    %v1108 = vpop.f32.mrf.mxu0
    %v1109 = vpop.f32.mrf.mxu0
    %1110 = vdwg.mxu0
    %v1111 = vxor.u32 %v1106, 2147483648
    %v1112 = vmul.f32 %v1111, 1.442695
    %v1113 = vpow.pop %v1112
    %v1114 = vadd.f32 %v1113, 1.0
    %v1115 = vrcp.pop %v1114
    %v1116 = vmul.f32 1.0, %v1115
    %v1117 = vtanh.pop %v1106
    %v1118 = vmul.f32 %v1116, %v1047
    %1120 = vrot.lane.b32.xlu0 %v1117, 120
    %v1121 = vpop.permute.xlu0 %1120
    %v1123 = vmul.f32 %v1116, %v1121
    %1125 = vrot.lane.b32.xlu0 %v1123, 4
    %v1126 = vpop.permute.xlu0 %1125
    %v1128 = vadd.f32 %v1118, %v1126
    %v1129 = vtanh.pop %v1128
    %1131 = vrot.lane.b32.xlu0 %v1129, 8
    %v1132 = vpop.permute.xlu0 %1131
    %v1134 = vmul.f32 %v1116, %v1132
    %1136 = vrot.lane.b32.xlu0 %v1134, 116
    %v1137 = vpop.permute.xlu0 %1136
    %s1139 = scalar_lea.vmem %s8, 40
    %1140 = vst.msk [vmem:[%s1139] sm:$0xff] %vm889, %v1137
    %v1141 = vpack.c.bf16 %v1134, %v1134
    %v1142 = vld [vmem:[%s6] sm:$0x3]
    %1144 = vrot.lane.b32.xlu0 %v1141, 116
    %v1145 = vpop.permute.xlu0 %1144
    %v1147 = vsel %vm889, %v1145, 0
    %v1150 = vsel %vm905, %v1142, 0
    %1152 = vmatprep.subr.bf16.mxu0 0
    %1153 = vmatpush1.bf16.msra.mxu0 0
    %1154 = vmatprep.subr.bf16.mxu0 0
    %1155 = vmatpush1.bf16.msra.mxu0 0
    %1156 = vmatprep.subr.bf16.mxu0 0
    %1157 = vmatpush1.bf16.msra.mxu0 0
    %1158 = vmatprep.subr.bf16.mxu0 0
    %1159 = vmatpush1.bf16.msra.mxu0 0
    %1160 = vmatprep.subr.bf16.mxu0 0
    %1161 = vmatpush1.bf16.msra.mxu0 0
    %1162 = vmatprep.subr.bf16.mxu0 0
    %1163 = vmatpush1.bf16.msra.mxu0 0
    %1164 = vmatprep.subr.bf16.mxu0 0
    %1165 = vmatpush1.bf16.msra.mxu0 0
    %1166 = vmatprep.subr.bf16.mxu0 0
    %1167 = vmatpush1.bf16.msra.mxu0 %v1150
    %1168 = vmatprep.subr.bf16.mxu0 0
    %1169 = vmatpush2.bf16.msra.mxu0 0
    %1170 = vmatprep.subr.bf16.mxu0 0
    %1171 = vmatpush2.bf16.msra.mxu0 0
    %1172 = vmatprep.subr.bf16.mxu0 0
    %1173 = vmatpush2.bf16.msra.mxu0 0
    %1174 = vmatprep.subr.bf16.mxu0 0
    %1175 = vmatpush2.bf16.msra.mxu0 0
    %1176 = vmatprep.subr.bf16.mxu0 0
    %1177 = vmatpush2.bf16.msra.mxu0 0
    %1178 = vmatprep.subr.bf16.mxu0 0
    %1179 = vmatpush2.bf16.msra.mxu0 0
    %1180 = vmatprep.subr.bf16.mxu0 0
    %1181 = vmatpush2.bf16.msra.mxu0 0
    %1182 = vmatprep.subr.bf16.mxu0 0
    %1183 = vmatpush2.bf16.msra.mxu0 0
    %1184 = vmatprep.mubr.bf16.mxu0 0
    %1185 = vmatmul.mubr.bf16.gmra.mxu0 %v1147
    %v1186 = vpop.f32.mrf.mxu0
    %v1187 = vadd.f32 %v897, %v1186
    %v1188 = vpop.f32.mrf.mxu0
    %v1189 = vpop.f32.mrf.mxu0
    %v1190 = vpop.f32.mrf.mxu0
    %1191 = vdwg.mxu0
    %v1192 = vxor.u32 %v1187, 2147483648
    %v1193 = vmul.f32 %v1192, 1.442695
    %v1194 = vpow.pop %v1193
    %v1195 = vadd.f32 %v1194, 1.0
    %v1196 = vrcp.pop %v1195
    %v1197 = vmul.f32 1.0, %v1196
    %v1198 = vtanh.pop %v1187
    %v1199 = vmul.f32 %v1197, %v1128
    %1201 = vrot.lane.b32.xlu0 %v1198, 120
    %v1202 = vpop.permute.xlu0 %1201
    %v1204 = vmul.f32 %v1197, %v1202
    %1206 = vrot.lane.b32.xlu0 %v1204, 4
    %v1207 = vpop.permute.xlu0 %1206
    %v1209 = vadd.f32 %v1199, %v1207
    %v1210 = vtanh.pop %v1209
    %1212 = vrot.lane.b32.xlu0 %v1210, 8
    %v1213 = vpop.permute.xlu0 %1212
    %v1215 = vmul.f32 %v1197, %v1213
    %1217 = vrot.lane.b32.xlu0 %v1215, 116
    %v1218 = vpop.permute.xlu0 %1217
    %s1220 = scalar_lea.vmem %s8, 32
    %1221 = vst.msk [vmem:[%s1220] sm:$0xff] %vm889, %v1218
    %v1222 = vpack.c.bf16 %v1215, %v1215
    %v1223 = vld [vmem:[%s6] sm:$0x3]
    %1225 = vrot.lane.b32.xlu0 %v1222, 116
    %v1226 = vpop.permute.xlu0 %1225
    %v1228 = vsel %vm889, %v1226, 0
    %v1231 = vsel %vm905, %v1223, 0
    %1233 = vmatprep.subr.bf16.mxu0 0
    %1234 = vmatpush1.bf16.msra.mxu0 0
    %1235 = vmatprep.subr.bf16.mxu0 0
    %1236 = vmatpush1.bf16.msra.mxu0 0
    %1237 = vmatprep.subr.bf16.mxu0 0
    %1238 = vmatpush1.bf16.msra.mxu0 0
    %1239 = vmatprep.subr.bf16.mxu0 0
    %1240 = vmatpush1.bf16.msra.mxu0 0
    %1241 = vmatprep.subr.bf16.mxu0 0
    %1242 = vmatpush1.bf16.msra.mxu0 0
    %1243 = vmatprep.subr.bf16.mxu0 0
    %1244 = vmatpush1.bf16.msra.mxu0 0
    %1245 = vmatprep.subr.bf16.mxu0 0
    %1246 = vmatpush1.bf16.msra.mxu0 0
    %1247 = vmatprep.subr.bf16.mxu0 0
    %1248 = vmatpush1.bf16.msra.mxu0 %v1231
    %1249 = vmatprep.subr.bf16.mxu0 0
    %1250 = vmatpush2.bf16.msra.mxu0 0
    %1251 = vmatprep.subr.bf16.mxu0 0
    %1252 = vmatpush2.bf16.msra.mxu0 0
    %1253 = vmatprep.subr.bf16.mxu0 0
    %1254 = vmatpush2.bf16.msra.mxu0 0
    %1255 = vmatprep.subr.bf16.mxu0 0
    %1256 = vmatpush2.bf16.msra.mxu0 0
    %1257 = vmatprep.subr.bf16.mxu0 0
    %1258 = vmatpush2.bf16.msra.mxu0 0
    %1259 = vmatprep.subr.bf16.mxu0 0
    %1260 = vmatpush2.bf16.msra.mxu0 0
    %1261 = vmatprep.subr.bf16.mxu0 0
    %1262 = vmatpush2.bf16.msra.mxu0 0
    %1263 = vmatprep.subr.bf16.mxu0 0
    %1264 = vmatpush2.bf16.msra.mxu0 0
    %1265 = vmatprep.mubr.bf16.mxu0 0
    %1266 = vmatmul.mubr.bf16.gmra.mxu0 %v1228
    %v1267 = vpop.f32.mrf.mxu0
    %v1268 = vadd.f32 %v897, %v1267
    %v1269 = vpop.f32.mrf.mxu0
    %v1270 = vpop.f32.mrf.mxu0
    %v1271 = vpop.f32.mrf.mxu0
    %1272 = vdwg.mxu0
    %v1273 = vxor.u32 %v1268, 2147483648
    %v1274 = vmul.f32 %v1273, 1.442695
    %v1275 = vpow.pop %v1274
    %v1276 = vadd.f32 %v1275, 1.0
    %v1277 = vrcp.pop %v1276
    %v1278 = vmul.f32 1.0, %v1277
    %v1279 = vtanh.pop %v1268
    %v1280 = vmul.f32 %v1278, %v1209
    %1282 = vrot.lane.b32.xlu0 %v1279, 120
    %v1283 = vpop.permute.xlu0 %1282
    %v1285 = vmul.f32 %v1278, %v1283
    %1287 = vrot.lane.b32.xlu0 %v1285, 4
    %v1288 = vpop.permute.xlu0 %1287
    %v1290 = vadd.f32 %v1280, %v1288
    %v1291 = vtanh.pop %v1290
    %1293 = vrot.lane.b32.xlu0 %v1291, 8
    %v1294 = vpop.permute.xlu0 %1293
    %v1296 = vmul.f32 %v1278, %v1294
    %1298 = vrot.lane.b32.xlu0 %v1296, 116
    %v1299 = vpop.permute.xlu0 %1298
    %s1301 = scalar_lea.vmem %s8, 24
    %1302 = vst.msk [vmem:[%s1301] sm:$0xff] %vm889, %v1299
    %v1303 = vpack.c.bf16 %v1296, %v1296
    %v1304 = vld [vmem:[%s6] sm:$0x3]
    %1306 = vrot.lane.b32.xlu0 %v1303, 116
    %v1307 = vpop.permute.xlu0 %1306
    %v1309 = vsel %vm889, %v1307, 0
    %v1312 = vsel %vm905, %v1304, 0
    %1314 = vmatprep.subr.bf16.mxu0 0
    %1315 = vmatpush1.bf16.msra.mxu0 0
    %1316 = vmatprep.subr.bf16.mxu0 0
    %1317 = vmatpush1.bf16.msra.mxu0 0
    %1318 = vmatprep.subr.bf16.mxu0 0
    %1319 = vmatpush1.bf16.msra.mxu0 0
    %1320 = vmatprep.subr.bf16.mxu0 0
    %1321 = vmatpush1.bf16.msra.mxu0 0
    %1322 = vmatprep.subr.bf16.mxu0 0
    %1323 = vmatpush1.bf16.msra.mxu0 0
    %1324 = vmatprep.subr.bf16.mxu0 0
    %1325 = vmatpush1.bf16.msra.mxu0 0
    %1326 = vmatprep.subr.bf16.mxu0 0
    %1327 = vmatpush1.bf16.msra.mxu0 0
    %1328 = vmatprep.subr.bf16.mxu0 0
    %1329 = vmatpush1.bf16.msra.mxu0 %v1312
    %1330 = vmatprep.subr.bf16.mxu0 0
    %1331 = vmatpush2.bf16.msra.mxu0 0
    %1332 = vmatprep.subr.bf16.mxu0 0
    %1333 = vmatpush2.bf16.msra.mxu0 0
    %1334 = vmatprep.subr.bf16.mxu0 0
    %1335 = vmatpush2.bf16.msra.mxu0 0
    %1336 = vmatprep.subr.bf16.mxu0 0
    %1337 = vmatpush2.bf16.msra.mxu0 0
    %1338 = vmatprep.subr.bf16.mxu0 0
    %1339 = vmatpush2.bf16.msra.mxu0 0
    %1340 = vmatprep.subr.bf16.mxu0 0
    %1341 = vmatpush2.bf16.msra.mxu0 0
    %1342 = vmatprep.subr.bf16.mxu0 0
    %1343 = vmatpush2.bf16.msra.mxu0 0
    %1344 = vmatprep.subr.bf16.mxu0 0
    %1345 = vmatpush2.bf16.msra.mxu0 0
    %1346 = vmatprep.mubr.bf16.mxu0 0
    %1347 = vmatmul.mubr.bf16.gmra.mxu0 %v1309
    %v1348 = vpop.f32.mrf.mxu0
    %v1349 = vadd.f32 %v897, %v1348
    %v1350 = vpop.f32.mrf.mxu0
    %v1351 = vpop.f32.mrf.mxu0
    %v1352 = vpop.f32.mrf.mxu0
    %1353 = vdwg.mxu0
    %v1354 = vxor.u32 %v1349, 2147483648
    %v1355 = vmul.f32 %v1354, 1.442695
    %v1356 = vpow.pop %v1355
    %v1357 = vadd.f32 %v1356, 1.0
    %v1358 = vrcp.pop %v1357
    %v1359 = vmul.f32 1.0, %v1358
    %v1360 = vtanh.pop %v1349
    %v1361 = vmul.f32 %v1359, %v1290
    %1363 = vrot.lane.b32.xlu0 %v1360, 120
    %v1364 = vpop.permute.xlu0 %1363
    %v1366 = vmul.f32 %v1359, %v1364
    %1368 = vrot.lane.b32.xlu0 %v1366, 4
    %v1369 = vpop.permute.xlu0 %1368
    %v1371 = vadd.f32 %v1361, %v1369
    %v1372 = vtanh.pop %v1371
    %1374 = vrot.lane.b32.xlu0 %v1372, 8
    %v1375 = vpop.permute.xlu0 %1374
    %v1377 = vmul.f32 %v1359, %v1375
    %1379 = vrot.lane.b32.xlu0 %v1377, 116
    %v1380 = vpop.permute.xlu0 %1379
    %s1382 = scalar_lea.vmem %s8, 16
    %1383 = vst.msk [vmem:[%s1382] sm:$0xff] %vm889, %v1380
    %v1384 = vpack.c.bf16 %v1377, %v1377
    %v1385 = vld [vmem:[%s6] sm:$0x3]
    %1387 = vrot.lane.b32.xlu0 %v1384, 116
    %v1388 = vpop.permute.xlu0 %1387
    %v1390 = vsel %vm889, %v1388, 0
    %v1393 = vsel %vm905, %v1385, 0
    %1395 = vmatprep.subr.bf16.mxu0 0
    %1396 = vmatpush1.bf16.msra.mxu0 0
    %1397 = vmatprep.subr.bf16.mxu0 0
    %1398 = vmatpush1.bf16.msra.mxu0 0
    %1399 = vmatprep.subr.bf16.mxu0 0
    %1400 = vmatpush1.bf16.msra.mxu0 0
    %1401 = vmatprep.subr.bf16.mxu0 0
    %1402 = vmatpush1.bf16.msra.mxu0 0
    %1403 = vmatprep.subr.bf16.mxu0 0
    %1404 = vmatpush1.bf16.msra.mxu0 0
    %1405 = vmatprep.subr.bf16.mxu0 0
    %1406 = vmatpush1.bf16.msra.mxu0 0
    %1407 = vmatprep.subr.bf16.mxu0 0
    %1408 = vmatpush1.bf16.msra.mxu0 0
    %1409 = vmatprep.subr.bf16.mxu0 0
    %1410 = vmatpush1.bf16.msra.mxu0 %v1393
    %1411 = vmatprep.subr.bf16.mxu0 0
    %1412 = vmatpush2.bf16.msra.mxu0 0
    %1413 = vmatprep.subr.bf16.mxu0 0
    %1414 = vmatpush2.bf16.msra.mxu0 0
    %1415 = vmatprep.subr.bf16.mxu0 0
    %1416 = vmatpush2.bf16.msra.mxu0 0
    %1417 = vmatprep.subr.bf16.mxu0 0
    %1418 = vmatpush2.bf16.msra.mxu0 0
    %1419 = vmatprep.subr.bf16.mxu0 0
    %1420 = vmatpush2.bf16.msra.mxu0 0
    %1421 = vmatprep.subr.bf16.mxu0 0
    %1422 = vmatpush2.bf16.msra.mxu0 0
    %1423 = vmatprep.subr.bf16.mxu0 0
    %1424 = vmatpush2.bf16.msra.mxu0 0
    %1425 = vmatprep.subr.bf16.mxu0 0
    %1426 = vmatpush2.bf16.msra.mxu0 0
    %1427 = vmatprep.mubr.bf16.mxu0 0
    %1428 = vmatmul.mubr.bf16.gmra.mxu0 %v1390
    %v1429 = vpop.f32.mrf.mxu0
    %v1430 = vadd.f32 %v897, %v1429
    %v1431 = vpop.f32.mrf.mxu0
    %v1432 = vpop.f32.mrf.mxu0
    %v1433 = vpop.f32.mrf.mxu0
    %1434 = vdwg.mxu0
    %v1435 = vxor.u32 %v1430, 2147483648
    %v1436 = vmul.f32 %v1435, 1.442695
    %v1437 = vpow.pop %v1436
    %v1438 = vadd.f32 %v1437, 1.0
    %v1439 = vrcp.pop %v1438
    %v1440 = vmul.f32 1.0, %v1439
    %v1441 = vtanh.pop %v1430
    %v1442 = vmul.f32 %v1440, %v1371
    %1444 = vrot.lane.b32.xlu0 %v1441, 120
    %v1445 = vpop.permute.xlu0 %1444
    %v1447 = vmul.f32 %v1440, %v1445
    %1449 = vrot.lane.b32.xlu0 %v1447, 4
    %v1450 = vpop.permute.xlu0 %1449
    %v1452 = vadd.f32 %v1442, %v1450
    %v1453 = vtanh.pop %v1452
    %1455 = vrot.lane.b32.xlu0 %v1453, 8
    %v1456 = vpop.permute.xlu0 %1455
    %v1458 = vmul.f32 %v1440, %v1456
    %1460 = vrot.lane.b32.xlu0 %v1458, 116
    %v1461 = vpop.permute.xlu0 %1460
    %s1463 = scalar_lea.vmem %s8, 8
    %1464 = vst.msk [vmem:[%s1463] sm:$0xff] %vm889, %v1461
    // Predicated region
    $region38: #{tpu_custom_call.1} parent=1 // pred_check
      _
    $region39: #{tpu_custom_call.1} parent=1 // pred_check_branch
      %1466 = sbr.rel (0) target = $region41
    $region40: #{tpu_custom_call.1} parent=1 // pred_region
      _
    $region41: #{tpu_custom_call.1} parent=1 // pred_fallthru
      _
    // Predicated region
    $region42: #{tpu_custom_call.1} parent=1 // pred_check
      _
    $region43: #{tpu_custom_call.1} parent=1 // pred_check_branch
      %1468 = sbr.rel (0) target = $region45
    $region44: #{tpu_custom_call.1} parent=1 // pred_region
      _
    $region45: #{tpu_custom_call.1} parent=1 // pred_fallthru
      _
    %1469 = vsyncpa [#allocation4], 1

// kernel: tpu_custom_call.1
$region0: #{tpu_custom_call.1}
  #allocation0 [shape = 'u32[]', space=smem, size = 0x4, offset = 0x4, fixed_abs, tag = 'smem constant byte address 0x4 - core index']
  #allocation1 [shape = 'u32[144,128]{1,0:T(1,128)}', space=vmem, size = 0x12000, scoped, tag = 'internal scratch']
  #allocation2 [shape = 'bf16[8,8,128]{2,1,0:T(8,128)(2,1)}', space=vmem, size = 0x4000, scoped, tag = 'scratch operand']
  %s0 = inlined_call_operand.hbm [shape: bf16[8,8,8], index: 0, kind: input, shape index: {}]
  %s1 = inlined_call_operand.vmem [shape: bf16[8,128], index: 1, kind: input, shape index: {}]
  %s2 = inlined_call_operand.vmem [shape: bf16[32,128], index: 2, kind: input, shape index: {}]
  %s3 = inlined_call_operand.vmem [shape: f32[1,128], index: 3, kind: input, shape index: {}]
  %s4 = inlined_call_operand.vmem [shape: bf16[32,16], index: 4, kind: input, shape index: {}]
  %s5 = inlined_call_operand.vmem [shape: f32[1,16], index: 5, kind: input, shape index: {}]
  %s6 = inlined_call_operand.vmem [shape: bf16[4,16], index: 6, kind: input, shape index: {}]
  %s7 = inlined_call_operand.vmem [shape: f32[1,16], index: 7, kind: input, shape index: {}]
  %s8 = inlined_call_operand.vmem [shape: f32[8,8,4], index: 8, kind: output, shape index: {}]
  %s9 = sld [smem:[#allocation0]]
  $region46: #{tpu_custom_call.1} parent=0
    _
  %s11 = ssub.s32 1, %s9
  %s12 = scalar_select 0, %s11, %s9
  $region1: #{tpu_custom_call.1} parent=0
    #allocation3 [shape = 'u8[16384]{0}', space=vmem, size = 0x4000, scoped, tag = 'input window, operand 0, single buffered']
    #allocation4 [shape = 's32[1]{0}', space=sflag, size = 0x4, scoped, tag = 'scoped memory for tpu_custom_call.1']
    %13 = vsyncpa [#allocation4], 0
    // Predicated region
    $region2: #{tpu_custom_call.1} parent=1 // pred_check
      _
    $region3: #{tpu_custom_call.1} parent=1 // pred_check_branch
      %15 = sbr.rel (0) target = $region5
    $region4: #{tpu_custom_call.1} parent=1 // pred_region
      %s17 = ssub.s32 512, 512
      %18 = vsyncadd [#allocation4], %s17
      %s19 = sshll.u32 [#allocation3], 4
      %s20 = int_to_ptr.vmem [resolvable:$true] %s19
      %25 = dma.hbm_to_vmem [thread:$0]  %s0, 512, %s20, [#allocation4], 64, 64, 4
    $region5: #{tpu_custom_call.1} parent=1 // pred_fallthru
      _
    // Predicated region
    $region6: #{tpu_custom_call.1} parent=1 // pred_check
      _
    $region7: #{tpu_custom_call.1} parent=1 // pred_check_branch
      %27 = sbr.rel (0) target = $region9
    $region8: #{tpu_custom_call.1} parent=1 // pred_region
      _
    $region9: #{tpu_custom_call.1} parent=1 // pred_fallthru
      _
    // Predicated region
    $region10: #{tpu_custom_call.1} parent=1 // pred_check
      _
    $region11: #{tpu_custom_call.1} parent=1 // pred_check_branch
      %29 = sbr.rel (0) target = $region13
    $region12: #{tpu_custom_call.1} parent=1 // pred_region
      _
    $region13: #{tpu_custom_call.1} parent=1 // pred_fallthru
      _
    // Predicated region
    $region14: #{tpu_custom_call.1} parent=1 // pred_check
      _
    $region15: #{tpu_custom_call.1} parent=1 // pred_check_branch
      %31 = sbr.rel (0) target = $region17
    $region16: #{tpu_custom_call.1} parent=1 // pred_region
      _
    $region17: #{tpu_custom_call.1} parent=1 // pred_fallthru
      _
    // Predicated region
    $region18: #{tpu_custom_call.1} parent=1 // pred_check
      _
    $region19: #{tpu_custom_call.1} parent=1 // pred_check_branch
      %33 = sbr.rel (0) target = $region21
    $region20: #{tpu_custom_call.1} parent=1 // pred_region
      _
    $region21: #{tpu_custom_call.1} parent=1 // pred_fallthru
      _
    // Predicated region
    $region22: #{tpu_custom_call.1} parent=1 // pred_check
      _
    $region23: #{tpu_custom_call.1} parent=1 // pred_check_branch
      %35 = sbr.rel (0) target = $region25
    $region24: #{tpu_custom_call.1} parent=1 // pred_region
      _
    $region25: #{tpu_custom_call.1} parent=1 // pred_fallthru
      _
    // Predicated region
    $region26: #{tpu_custom_call.1} parent=1 // pred_check
      _
    $region27: #{tpu_custom_call.1} parent=1 // pred_check_branch
      %37 = sbr.rel (0) target = $region29
    $region28: #{tpu_custom_call.1} parent=1 // pred_region
      _
    $region29: #{tpu_custom_call.1} parent=1 // pred_fallthru
      _
    // Predicated region
    $region30: #{tpu_custom_call.1} parent=1 // pred_check
      _
    $region31: #{tpu_custom_call.1} parent=1 // pred_check_branch
      %39 = sbr.rel (0) target = $region33
    $region32: #{tpu_custom_call.1} parent=1 // pred_region
      _
    $region33: #{tpu_custom_call.1} parent=1 // pred_fallthru
      _
    // Predicated region
    $region34: #{tpu_custom_call.1} parent=1 // pred_check
      _
    $region35: #{tpu_custom_call.1} parent=1 // pred_check_branch
      %41 = sbr.rel (0) target = $region37
    $region36: #{tpu_custom_call.1} parent=1 // pred_region
      %42 = dma.done [#allocation4], 512
    $region37: #{tpu_custom_call.1} parent=1 // pred_fallthru
      _
    %v44 = vld [vmem:[%s3] sm:$0x1]
    %v45 = vld [vmem:[%s5] sm:$0x1]
    %v46 = vld [vmem:[%s7] sm:$0x1]
    %v47 = vld [vmem:[#allocation3] sm:$0xf]
    %v48 = vld [vmem:[#allocation3 + $0x4] sm:$0xf]
    %v49 = vld [vmem:[#allocation3 + $0x8] sm:$0xf]
    %v50 = vld [vmem:[#allocation3 + $0xc] sm:$0xf]
    %v51 = vld [vmem:[#allocation3 + $0x10] sm:$0xf]
    %v52 = vld [vmem:[#allocation3 + $0x14] sm:$0xf]
    %v53 = vld [vmem:[#allocation3 + $0x18] sm:$0xf]
    %v54 = vld [vmem:[#allocation3 + $0x1c] sm:$0xf]
    %v55 = vld [vmem:[%s1] sm:$0xf]
    %v57 = vlaneseq
    %v58 = vshrl.u32 %v57, 7
    %v59 = vsub.s32 0, %v58
    %v60 = vrot.slane %v44, %v59
    %v70 = vunpack.c.l.b16 %v47
    %v71 = vunpack.c.l.b16 %v48
    %v72 = vunpack.c.l.b16 %v49
    %v73 = vunpack.c.l.b16 %v50
    %v74 = vunpack.c.l.b16 %v51
    %v75 = vunpack.c.l.b16 %v52
    %v76 = vunpack.c.l.b16 %v53
    %v77 = vunpack.c.l.b16 %v54
    %v78 = vpack.c.b16 %v71, %v70
    %v79 = vpack.c.b16 %v73, %v72
    %v80 = vpack.c.b16 %v75, %v74
    %v81 = vpack.c.b16 %v77, %v76
    %vm82 = vcmask 64512
    %v84 = vsel %vm82, %v78, 0
    %v87 = vsel %vm82, %v79, 0
    %v90 = vsel %vm82, %v80, 0
    %v93 = vsel %vm82, %v81, 0
    %vm95 = vcmask 1043456
    %v97 = vsel %vm95, %v55, 0
    %99 = vmatprep.subr.bf16.mxu0 0
    %100 = vmatpush1.bf16.msra.mxu0 0
    %101 = vmatprep.subr.bf16.mxu0 0
    %102 = vmatpush1.bf16.msra.mxu0 0
    %103 = vmatprep.subr.bf16.mxu0 0
    %104 = vmatpush1.bf16.msra.mxu0 0
    %105 = vmatprep.subr.bf16.mxu0 0
    %106 = vmatpush1.bf16.msra.mxu0 0
    %107 = vmatprep.subr.bf16.mxu0 0
    %108 = vmatpush1.bf16.msra.mxu0 0
    %109 = vmatprep.subr.bf16.mxu0 0
    %110 = vmatpush1.bf16.msra.mxu0 0
    %111 = vmatprep.subr.bf16.mxu0 0
    %112 = vmatpush1.bf16.msra.mxu0 0
    %113 = vmatprep.subr.bf16.mxu0 0
    %114 = vmatpush1.bf16.msra.mxu0 %v97
    %115 = vmatprep.subr.bf16.mxu0 0
    %116 = vmatpush2.bf16.msra.mxu0 0
    %117 = vmatprep.subr.bf16.mxu0 0
    %118 = vmatpush2.bf16.msra.mxu0 0
    %119 = vmatprep.subr.bf16.mxu0 0
    %120 = vmatpush2.bf16.msra.mxu0 0
    %121 = vmatprep.subr.bf16.mxu0 0
    %122 = vmatpush2.bf16.msra.mxu0 0
    %123 = vmatprep.subr.bf16.mxu0 0
    %124 = vmatpush2.bf16.msra.mxu0 0
    %125 = vmatprep.subr.bf16.mxu0 0
    %126 = vmatpush2.bf16.msra.mxu0 0
    %127 = vmatprep.subr.bf16.mxu0 0
    %128 = vmatpush2.bf16.msra.mxu0 0
    %129 = vmatprep.subr.bf16.mxu0 0
    %130 = vmatpush2.bf16.msra.mxu0 0
    %131 = vmatprep.mubr.bf16.mxu0 0
    %132 = vmatmul.mubr.bf16.gmra.mxu0 %v84
    %v133 = vpop.f32.mrf.mxu0
    %v134 = vadd.f32 %v60, %v133
    %v135 = vpop.f32.mrf.mxu0
    %v136 = vpop.f32.mrf.mxu0
    %v137 = vadd.f32 %v60, %v136
    %v138 = vpop.f32.mrf.mxu0
    %139 = vmatprep.mubr.bf16.mxu0 0
    %140 = vmatmul.mubr.bf16.gmra.mxu0 %v87
    %v141 = vpop.f32.mrf.mxu0
    %v142 = vadd.f32 %v60, %v141
    %v143 = vpop.f32.mrf.mxu0
    %v144 = vpop.f32.mrf.mxu0
    %v145 = vadd.f32 %v60, %v144
    %v146 = vpop.f32.mrf.mxu0
    %147 = vmatprep.mubr.bf16.mxu0 0
    %148 = vmatmul.mubr.bf16.gmra.mxu0 %v90
    %v149 = vpop.f32.mrf.mxu0
    %v150 = vadd.f32 %v60, %v149
    %v151 = vpop.f32.mrf.mxu0
    %v152 = vpop.f32.mrf.mxu0
    %v153 = vadd.f32 %v60, %v152
    %v154 = vpop.f32.mrf.mxu0
    %155 = vmatprep.mubr.bf16.mxu0 0
    %156 = vmatmul.mubr.bf16.gmra.mxu0 %v93
    %v157 = vpop.f32.mrf.mxu0
    %v158 = vadd.f32 %v60, %v157
    %v159 = vpop.f32.mrf.mxu0
    %v160 = vpop.f32.mrf.mxu0
    %v161 = vadd.f32 %v60, %v160
    %v162 = vpop.f32.mrf.mxu0
    %163 = vdwg.mxu0
    %v164 = vpack.c.bf16 %v134, %v134
    %v165 = vpack.c.bf16 %v137, %v137
    %v166 = vpack.c.bf16 %v142, %v142
    %v167 = vpack.c.bf16 %v145, %v145
    %v168 = vpack.c.bf16 %v150, %v150
    %v169 = vpack.c.bf16 %v153, %v153
    %v170 = vpack.c.bf16 %v158, %v158
    %v171 = vpack.c.bf16 %v161, %v161
    %172 = vst [vmem:[#allocation2] sm:$0xf] %v164
    %173 = vst [vmem:[#allocation2 + $0x4] sm:$0xf] %v165
    %174 = vst [vmem:[#allocation2 + $0x8] sm:$0xf] %v166
    %175 = vst [vmem:[#allocation2 + $0xc] sm:$0xf] %v167
    %176 = vst [vmem:[#allocation2 + $0x10] sm:$0xf] %v168
    %177 = vst [vmem:[#allocation2 + $0x14] sm:$0xf] %v169
    %178 = vst [vmem:[#allocation2 + $0x18] sm:$0xf] %v170
    %179 = vst [vmem:[#allocation2 + $0x1c] sm:$0xf] %v171
    %v180 = vld [vmem:[#allocation2] sm:$0xf]
    %v181 = vunpack.c.l.bf16 %v180
    %v182 = vld [vmem:[%s2] sm:$0xf]
    %v183 = vld [vmem:[%s2 + $0x4] sm:$0xf]
    %v184 = vld [vmem:[%s2 + $0x8] sm:$0xf]
    %v185 = vld [vmem:[%s2 + $0xc] sm:$0xf]
    %v190 = vunpack.c.l.b16 %v182
    %v191 = vunpack.c.l.b16 %v183
    %v192 = vunpack.c.l.b16 %v184
    %v193 = vunpack.c.l.b16 %v185
    %v194 = vpack.c.b16 %v191, %v190
    %v195 = vpack.c.b16 %v193, %v192
    %vm198 = vcmask 261120
    %v200 = vsel %vm198, 0, 0
    %202 = vmatprep.subr.bf16.mxu0 0
    %203 = vmatpush1.bf16.msra.mxu0 0
    %204 = vmatprep.subr.bf16.mxu0 0
    %205 = vmatpush1.bf16.msra.mxu0 0
    %206 = vmatprep.subr.bf16.mxu0 0
    %207 = vmatpush1.bf16.msra.mxu0 0
    %208 = vmatprep.subr.bf16.mxu0 0
    %209 = vmatpush1.bf16.msra.mxu0 0
    %210 = vmatprep.subr.bf16.mxu0 0
    %211 = vmatpush1.bf16.msra.mxu0 0
    %212 = vmatprep.subr.bf16.mxu0 0
    %213 = vmatpush1.bf16.msra.mxu0 0
    %214 = vmatprep.subr.bf16.mxu0 0
    %215 = vmatpush1.bf16.msra.mxu0 %v195
    %216 = vmatprep.subr.bf16.mxu0 0
    %217 = vmatpush1.bf16.msra.mxu0 %v194
    %218 = vmatprep.subr.bf16.mxu0 0
    %219 = vmatpush2.bf16.msra.mxu0 0
    %220 = vmatprep.subr.bf16.mxu0 0
    %221 = vmatpush2.bf16.msra.mxu0 0
    %222 = vmatprep.subr.bf16.mxu0 0
    %223 = vmatpush2.bf16.msra.mxu0 0
    %224 = vmatprep.subr.bf16.mxu0 0
    %225 = vmatpush2.bf16.msra.mxu0 0
    %226 = vmatprep.subr.bf16.mxu0 0
    %227 = vmatpush2.bf16.msra.mxu0 0
    %228 = vmatprep.subr.bf16.mxu0 0
    %229 = vmatpush2.bf16.msra.mxu0 0
    %230 = vmatprep.subr.bf16.mxu0 0
    %231 = vmatpush2.bf16.msra.mxu0 0
    %232 = vmatprep.subr.bf16.mxu0 0
    %233 = vmatpush2.bf16.msra.mxu0 0
    %234 = vmatprep.mubr.bf16.mxu0 0
    %235 = vmatmul.mubr.bf16.gmra.mxu0 %v200
    %v236 = vpop.f32.mrf.mxu0
    %v237 = vadd.f32 0.0, %v236
    %v238 = vpop.f32.mrf.mxu0
    %v239 = vpop.f32.mrf.mxu0
    %v240 = vpop.f32.mrf.mxu0
    %241 = vdwg.mxu0
    %v242 = vadd.f32 %v181, %v237
    %v243 = vxor.u32 %v242, 2147483648
    %v244 = vmul.f32 %v243, 1.442695
    %v245 = vpow.pop %v244
    %v246 = vadd.f32 %v245, 1.0
    %v247 = vrcp.pop %v246
    %v248 = vmul.f32 1.0, %v247
    %v249 = vtanh.pop %v242
    %v250 = vmul.f32 %v248, 0.0
    %252 = vrot.lane.b32.xlu0 %v249, 64
    %v253 = vpop.permute.xlu0 %252
    %v255 = vmul.f32 %v248, %v253
    %257 = vrot.lane.b32.xlu0 %v255, 32
    %v258 = vpop.permute.xlu0 %257
    %v260 = vadd.f32 %v250, %v258
    %v261 = vtanh.pop %v260
    %263 = vrot.lane.b32.xlu0 %v261, 64
    %v264 = vpop.permute.xlu0 %263
    %v266 = vmul.f32 %v248, %v264
    %s267 = scalar_lea.vmem [#allocation2], 4
    %v268 = vld [vmem:[%s267] sm:$0xf]
    %v269 = vunpack.c.l.bf16 %v268
    %v270 = vpack.c.bf16 %v266, %v266
    %272 = vrot.lane.b32.xlu0 %v270, 32
    %v273 = vpop.permute.xlu0 %272
    %v275 = vsel %vm198, %v273, 0
    %277 = vmatprep.subr.bf16.mxu0 0
    %278 = vmatpush1.bf16.msra.mxu0 0
    %279 = vmatprep.subr.bf16.mxu0 0
    %280 = vmatpush1.bf16.msra.mxu0 0
    %281 = vmatprep.subr.bf16.mxu0 0
    %282 = vmatpush1.bf16.msra.mxu0 0
    %283 = vmatprep.subr.bf16.mxu0 0
    %284 = vmatpush1.bf16.msra.mxu0 0
    %285 = vmatprep.subr.bf16.mxu0 0
    %286 = vmatpush1.bf16.msra.mxu0 0
    %287 = vmatprep.subr.bf16.mxu0 0
    %288 = vmatpush1.bf16.msra.mxu0 0
    %289 = vmatprep.subr.bf16.mxu0 0
    %290 = vmatpush1.bf16.msra.mxu0 %v195
    %291 = vmatprep.subr.bf16.mxu0 0
    %292 = vmatpush1.bf16.msra.mxu0 %v194
    %293 = vmatprep.subr.bf16.mxu0 0
    %294 = vmatpush2.bf16.msra.mxu0 0
    %295 = vmatprep.subr.bf16.mxu0 0
    %296 = vmatpush2.bf16.msra.mxu0 0
    %297 = vmatprep.subr.bf16.mxu0 0
    %298 = vmatpush2.bf16.msra.mxu0 0
    %299 = vmatprep.subr.bf16.mxu0 0
    %300 = vmatpush2.bf16.msra.mxu0 0
    %301 = vmatprep.subr.bf16.mxu0 0
    %302 = vmatpush2.bf16.msra.mxu0 0
    %303 = vmatprep.subr.bf16.mxu0 0
    %304 = vmatpush2.bf16.msra.mxu0 0
    %305 = vmatprep.subr.bf16.mxu0 0
    %306 = vmatpush2.bf16.msra.mxu0 0
    %307 = vmatprep.subr.bf16.mxu0 0
    %308 = vmatpush2.bf16.msra.mxu0 0
    %309 = vmatprep.mubr.bf16.mxu0 0
    %310 = vmatmul.mubr.bf16.gmra.mxu0 %v275
    %v311 = vpop.f32.mrf.mxu0
    %v312 = vadd.f32 0.0, %v311
    %v313 = vpop.f32.mrf.mxu0
    %v314 = vpop.f32.mrf.mxu0
    %v315 = vpop.f32.mrf.mxu0
    %316 = vdwg.mxu0
    %v317 = vadd.f32 %v269, %v312
    %v318 = vxor.u32 %v317, 2147483648
    %v319 = vmul.f32 %v318, 1.442695
    %v320 = vpow.pop %v319
    %v321 = vadd.f32 %v320, 1.0
    %v322 = vrcp.pop %v321
    %v323 = vmul.f32 1.0, %v322
    %v324 = vtanh.pop %v317
    %v325 = vmul.f32 %v323, %v260
    %327 = vrot.lane.b32.xlu0 %v324, 64
    %v328 = vpop.permute.xlu0 %327
    %v330 = vmul.f32 %v323, %v328
    %332 = vrot.lane.b32.xlu0 %v330, 32
    %v333 = vpop.permute.xlu0 %332
    %v335 = vadd.f32 %v325, %v333
    %v336 = vtanh.pop %v335
    %338 = vrot.lane.b32.xlu0 %v336, 64
    %v339 = vpop.permute.xlu0 %338
    %v341 = vmul.f32 %v323, %v339
    %s342 = scalar_lea.vmem [#allocation2], 8
    %v343 = vld [vmem:[%s342] sm:$0xf]
    %v344 = vunpack.c.l.bf16 %v343
    %v345 = vpack.c.bf16 %v341, %v341
    %347 = vrot.lane.b32.xlu0 %v345, 32
    %v348 = vpop.permute.xlu0 %347
    %v350 = vsel %vm198, %v348, 0
    %352 = vmatprep.subr.bf16.mxu0 0
    %353 = vmatpush1.bf16.msra.mxu0 0
    %354 = vmatprep.subr.bf16.mxu0 0
    %355 = vmatpush1.bf16.msra.mxu0 0
    %356 = vmatprep.subr.bf16.mxu0 0
    %357 = vmatpush1.bf16.msra.mxu0 0
    %358 = vmatprep.subr.bf16.mxu0 0
    %359 = vmatpush1.bf16.msra.mxu0 0
    %360 = vmatprep.subr.bf16.mxu0 0
    %361 = vmatpush1.bf16.msra.mxu0 0
    %362 = vmatprep.subr.bf16.mxu0 0
    %363 = vmatpush1.bf16.msra.mxu0 0
    %364 = vmatprep.subr.bf16.mxu0 0
    %365 = vmatpush1.bf16.msra.mxu0 %v195
    %366 = vmatprep.subr.bf16.mxu0 0
    %367 = vmatpush1.bf16.msra.mxu0 %v194
    %368 = vmatprep.subr.bf16.mxu0 0
    %369 = vmatpush2.bf16.msra.mxu0 0
    %370 = vmatprep.subr.bf16.mxu0 0
    %371 = vmatpush2.bf16.msra.mxu0 0
    %372 = vmatprep.subr.bf16.mxu0 0
    %373 = vmatpush2.bf16.msra.mxu0 0
    %374 = vmatprep.subr.bf16.mxu0 0
    %375 = vmatpush2.bf16.msra.mxu0 0
    %376 = vmatprep.subr.bf16.mxu0 0
    %377 = vmatpush2.bf16.msra.mxu0 0
    %378 = vmatprep.subr.bf16.mxu0 0
    %379 = vmatpush2.bf16.msra.mxu0 0
    %380 = vmatprep.subr.bf16.mxu0 0
    %381 = vmatpush2.bf16.msra.mxu0 0
    %382 = vmatprep.subr.bf16.mxu0 0
    %383 = vmatpush2.bf16.msra.mxu0 0
    %384 = vmatprep.mubr.bf16.mxu0 0
    %385 = vmatmul.mubr.bf16.gmra.mxu0 %v350
    %v386 = vpop.f32.mrf.mxu0
    %v387 = vadd.f32 0.0, %v386
    %v388 = vpop.f32.mrf.mxu0
    %v389 = vpop.f32.mrf.mxu0
    %v390 = vpop.f32.mrf.mxu0
    %391 = vdwg.mxu0
    %v392 = vadd.f32 %v344, %v387
    %v393 = vxor.u32 %v392, 2147483648
    %v394 = vmul.f32 %v393, 1.442695
    %v395 = vpow.pop %v394
    %v396 = vadd.f32 %v395, 1.0
    %v397 = vrcp.pop %v396
    %v398 = vmul.f32 1.0, %v397
    %v399 = vtanh.pop %v392
    %v400 = vmul.f32 %v398, %v335
    %402 = vrot.lane.b32.xlu0 %v399, 64
    %v403 = vpop.permute.xlu0 %402
    %v405 = vmul.f32 %v398, %v403
    %407 = vrot.lane.b32.xlu0 %v405, 32
    %v408 = vpop.permute.xlu0 %407
    %v410 = vadd.f32 %v400, %v408
    %v411 = vtanh.pop %v410
    %413 = vrot.lane.b32.xlu0 %v411, 64
    %v414 = vpop.permute.xlu0 %413
    %v416 = vmul.f32 %v398, %v414
    %s417 = scalar_lea.vmem [#allocation2], 12
    %v418 = vld [vmem:[%s417] sm:$0xf]
    %v419 = vunpack.c.l.bf16 %v418
    %v420 = vpack.c.bf16 %v416, %v416
    %422 = vrot.lane.b32.xlu0 %v420, 32
    %v423 = vpop.permute.xlu0 %422
    %v425 = vsel %vm198, %v423, 0
    %427 = vmatprep.subr.bf16.mxu0 0
    %428 = vmatpush1.bf16.msra.mxu0 0
    %429 = vmatprep.subr.bf16.mxu0 0
    %430 = vmatpush1.bf16.msra.mxu0 0
    %431 = vmatprep.subr.bf16.mxu0 0
    %432 = vmatpush1.bf16.msra.mxu0 0
    %433 = vmatprep.subr.bf16.mxu0 0
    %434 = vmatpush1.bf16.msra.mxu0 0
    %435 = vmatprep.subr.bf16.mxu0 0
    %436 = vmatpush1.bf16.msra.mxu0 0
    %437 = vmatprep.subr.bf16.mxu0 0
    %438 = vmatpush1.bf16.msra.mxu0 0
    %439 = vmatprep.subr.bf16.mxu0 0
    %440 = vmatpush1.bf16.msra.mxu0 %v195
    %441 = vmatprep.subr.bf16.mxu0 0
    %442 = vmatpush1.bf16.msra.mxu0 %v194
    %443 = vmatprep.subr.bf16.mxu0 0
    %444 = vmatpush2.bf16.msra.mxu0 0
    %445 = vmatprep.subr.bf16.mxu0 0
    %446 = vmatpush2.bf16.msra.mxu0 0
    %447 = vmatprep.subr.bf16.mxu0 0
    %448 = vmatpush2.bf16.msra.mxu0 0
    %449 = vmatprep.subr.bf16.mxu0 0
    %450 = vmatpush2.bf16.msra.mxu0 0
    %451 = vmatprep.subr.bf16.mxu0 0
    %452 = vmatpush2.bf16.msra.mxu0 0
    %453 = vmatprep.subr.bf16.mxu0 0
    %454 = vmatpush2.bf16.msra.mxu0 0
    %455 = vmatprep.subr.bf16.mxu0 0
    %456 = vmatpush2.bf16.msra.mxu0 0
    %457 = vmatprep.subr.bf16.mxu0 0
    %458 = vmatpush2.bf16.msra.mxu0 0
    %459 = vmatprep.mubr.bf16.mxu0 0
    %460 = vmatmul.mubr.bf16.gmra.mxu0 %v425
    %v461 = vpop.f32.mrf.mxu0
    %v462 = vadd.f32 0.0, %v461
    %v463 = vpop.f32.mrf.mxu0
    %v464 = vpop.f32.mrf.mxu0
    %v465 = vpop.f32.mrf.mxu0
    %466 = vdwg.mxu0
    %v467 = vadd.f32 %v419, %v462
    %v468 = vxor.u32 %v467, 2147483648
    %v469 = vmul.f32 %v468, 1.442695
    %v470 = vpow.pop %v469
    %v471 = vadd.f32 %v470, 1.0
    %v472 = vrcp.pop %v471
    %v473 = vmul.f32 1.0, %v472
    %v474 = vtanh.pop %v467
    %v475 = vmul.f32 %v473, %v410
    %477 = vrot.lane.b32.xlu0 %v474, 64
    %v478 = vpop.permute.xlu0 %477
    %v480 = vmul.f32 %v473, %v478
    %482 = vrot.lane.b32.xlu0 %v480, 32
    %v483 = vpop.permute.xlu0 %482
    %v485 = vadd.f32 %v475, %v483
    %v486 = vtanh.pop %v485
    %488 = vrot.lane.b32.xlu0 %v486, 64
    %v489 = vpop.permute.xlu0 %488
    %v491 = vmul.f32 %v473, %v489
    %s492 = scalar_lea.vmem [#allocation2], 16
    %v493 = vld [vmem:[%s492] sm:$0xf]
    %v494 = vunpack.c.l.bf16 %v493
    %v495 = vpack.c.bf16 %v491, %v491
    %497 = vrot.lane.b32.xlu0 %v495, 32
    %v498 = vpop.permute.xlu0 %497
    %v500 = vsel %vm198, %v498, 0
    %502 = vmatprep.subr.bf16.mxu0 0
    %503 = vmatpush1.bf16.msra.mxu0 0
    %504 = vmatprep.subr.bf16.mxu0 0
    %505 = vmatpush1.bf16.msra.mxu0 0
    %506 = vmatprep.subr.bf16.mxu0 0
    %507 = vmatpush1.bf16.msra.mxu0 0
    %508 = vmatprep.subr.bf16.mxu0 0
    %509 = vmatpush1.bf16.msra.mxu0 0
    %510 = vmatprep.subr.bf16.mxu0 0
    %511 = vmatpush1.bf16.msra.mxu0 0
    %512 = vmatprep.subr.bf16.mxu0 0
    %513 = vmatpush1.bf16.msra.mxu0 0
    %514 = vmatprep.subr.bf16.mxu0 0
    %515 = vmatpush1.bf16.msra.mxu0 %v195
    %516 = vmatprep.subr.bf16.mxu0 0
    %517 = vmatpush1.bf16.msra.mxu0 %v194
    %518 = vmatprep.subr.bf16.mxu0 0
    %519 = vmatpush2.bf16.msra.mxu0 0
    %520 = vmatprep.subr.bf16.mxu0 0
    %521 = vmatpush2.bf16.msra.mxu0 0
    %522 = vmatprep.subr.bf16.mxu0 0
    %523 = vmatpush2.bf16.msra.mxu0 0
    %524 = vmatprep.subr.bf16.mxu0 0
    %525 = vmatpush2.bf16.msra.mxu0 0
    %526 = vmatprep.subr.bf16.mxu0 0
    %527 = vmatpush2.bf16.msra.mxu0 0
    %528 = vmatprep.subr.bf16.mxu0 0
    %529 = vmatpush2.bf16.msra.mxu0 0
    %530 = vmatprep.subr.bf16.mxu0 0
    %531 = vmatpush2.bf16.msra.mxu0 0
    %532 = vmatprep.subr.bf16.mxu0 0
    %533 = vmatpush2.bf16.msra.mxu0 0
    %534 = vmatprep.mubr.bf16.mxu0 0
    %535 = vmatmul.mubr.bf16.gmra.mxu0 %v500
    %v536 = vpop.f32.mrf.mxu0
    %v537 = vadd.f32 0.0, %v536
    %v538 = vpop.f32.mrf.mxu0
    %v539 = vpop.f32.mrf.mxu0
    %v540 = vpop.f32.mrf.mxu0
    %541 = vdwg.mxu0
    %v542 = vadd.f32 %v494, %v537
    %v543 = vxor.u32 %v542, 2147483648
    %v544 = vmul.f32 %v543, 1.442695
    %v545 = vpow.pop %v544
    %v546 = vadd.f32 %v545, 1.0
    %v547 = vrcp.pop %v546
    %v548 = vmul.f32 1.0, %v547
    %v549 = vtanh.pop %v542
    %v550 = vmul.f32 %v548, %v485
    %552 = vrot.lane.b32.xlu0 %v549, 64
    %v553 = vpop.permute.xlu0 %552
    %v555 = vmul.f32 %v548, %v553
    %557 = vrot.lane.b32.xlu0 %v555, 32
    %v558 = vpop.permute.xlu0 %557
    %v560 = vadd.f32 %v550, %v558
    %v561 = vtanh.pop %v560
    %563 = vrot.lane.b32.xlu0 %v561, 64
    %v564 = vpop.permute.xlu0 %563
    %v566 = vmul.f32 %v548, %v564
    %s567 = scalar_lea.vmem [#allocation2], 20
    %v568 = vld [vmem:[%s567] sm:$0xf]
    %v569 = vunpack.c.l.bf16 %v568
    %v570 = vpack.c.bf16 %v566, %v566
    %572 = vrot.lane.b32.xlu0 %v570, 32
    %v573 = vpop.permute.xlu0 %572
    %v575 = vsel %vm198, %v573, 0
    %577 = vmatprep.subr.bf16.mxu0 0
    %578 = vmatpush1.bf16.msra.mxu0 0
    %579 = vmatprep.subr.bf16.mxu0 0
    %580 = vmatpush1.bf16.msra.mxu0 0
    %581 = vmatprep.subr.bf16.mxu0 0
    %582 = vmatpush1.bf16.msra.mxu0 0
    %583 = vmatprep.subr.bf16.mxu0 0
    %584 = vmatpush1.bf16.msra.mxu0 0
    %585 = vmatprep.subr.bf16.mxu0 0
    %586 = vmatpush1.bf16.msra.mxu0 0
    %587 = vmatprep.subr.bf16.mxu0 0
    %588 = vmatpush1.bf16.msra.mxu0 0
    %589 = vmatprep.subr.bf16.mxu0 0
    %590 = vmatpush1.bf16.msra.mxu0 %v195
    %591 = vmatprep.subr.bf16.mxu0 0
    %592 = vmatpush1.bf16.msra.mxu0 %v194
    %593 = vmatprep.subr.bf16.mxu0 0
    %594 = vmatpush2.bf16.msra.mxu0 0
    %595 = vmatprep.subr.bf16.mxu0 0
    %596 = vmatpush2.bf16.msra.mxu0 0
    %597 = vmatprep.subr.bf16.mxu0 0
    %598 = vmatpush2.bf16.msra.mxu0 0
    %599 = vmatprep.subr.bf16.mxu0 0
    %600 = vmatpush2.bf16.msra.mxu0 0
    %601 = vmatprep.subr.bf16.mxu0 0
    %602 = vmatpush2.bf16.msra.mxu0 0
    %603 = vmatprep.subr.bf16.mxu0 0
    %604 = vmatpush2.bf16.msra.mxu0 0
    %605 = vmatprep.subr.bf16.mxu0 0
    %606 = vmatpush2.bf16.msra.mxu0 0
    %607 = vmatprep.subr.bf16.mxu0 0
    %608 = vmatpush2.bf16.msra.mxu0 0
    %609 = vmatprep.mubr.bf16.mxu0 0
    %610 = vmatmul.mubr.bf16.gmra.mxu0 %v575
    %v611 = vpop.f32.mrf.mxu0
    %v612 = vadd.f32 0.0, %v611
    %v613 = vpop.f32.mrf.mxu0
    %v614 = vpop.f32.mrf.mxu0
    %v615 = vpop.f32.mrf.mxu0
    %616 = vdwg.mxu0
    %v617 = vadd.f32 %v569, %v612
    %v618 = vxor.u32 %v617, 2147483648
    %v619 = vmul.f32 %v618, 1.442695
    %v620 = vpow.pop %v619
    %v621 = vadd.f32 %v620, 1.0
    %v622 = vrcp.pop %v621
    %v623 = vmul.f32 1.0, %v622
    %v624 = vtanh.pop %v617
    %v625 = vmul.f32 %v623, %v560
    %627 = vrot.lane.b32.xlu0 %v624, 64
    %v628 = vpop.permute.xlu0 %627
    %v630 = vmul.f32 %v623, %v628
    %632 = vrot.lane.b32.xlu0 %v630, 32
    %v633 = vpop.permute.xlu0 %632
    %v635 = vadd.f32 %v625, %v633
    %v636 = vtanh.pop %v635
    %638 = vrot.lane.b32.xlu0 %v636, 64
    %v639 = vpop.permute.xlu0 %638
    %v641 = vmul.f32 %v623, %v639
    %s642 = scalar_lea.vmem [#allocation2], 24
    %v643 = vld [vmem:[%s642] sm:$0xf]
    %v644 = vunpack.c.l.bf16 %v643
    %v645 = vpack.c.bf16 %v641, %v641
    %647 = vrot.lane.b32.xlu0 %v645, 32
    %v648 = vpop.permute.xlu0 %647
    %v650 = vsel %vm198, %v648, 0
    %652 = vmatprep.subr.bf16.mxu0 0
    %653 = vmatpush1.bf16.msra.mxu0 0
    %654 = vmatprep.subr.bf16.mxu0 0
    %655 = vmatpush1.bf16.msra.mxu0 0
    %656 = vmatprep.subr.bf16.mxu0 0
    %657 = vmatpush1.bf16.msra.mxu0 0
    %658 = vmatprep.subr.bf16.mxu0 0
    %659 = vmatpush1.bf16.msra.mxu0 0
    %660 = vmatprep.subr.bf16.mxu0 0
    %661 = vmatpush1.bf16.msra.mxu0 0
    %662 = vmatprep.subr.bf16.mxu0 0
    %663 = vmatpush1.bf16.msra.mxu0 0
    %664 = vmatprep.subr.bf16.mxu0 0
    %665 = vmatpush1.bf16.msra.mxu0 %v195
    %666 = vmatprep.subr.bf16.mxu0 0
    %667 = vmatpush1.bf16.msra.mxu0 %v194
    %668 = vmatprep.subr.bf16.mxu0 0
    %669 = vmatpush2.bf16.msra.mxu0 0
    %670 = vmatprep.subr.bf16.mxu0 0
    %671 = vmatpush2.bf16.msra.mxu0 0
    %672 = vmatprep.subr.bf16.mxu0 0
    %673 = vmatpush2.bf16.msra.mxu0 0
    %674 = vmatprep.subr.bf16.mxu0 0
    %675 = vmatpush2.bf16.msra.mxu0 0
    %676 = vmatprep.subr.bf16.mxu0 0
    %677 = vmatpush2.bf16.msra.mxu0 0
    %678 = vmatprep.subr.bf16.mxu0 0
    %679 = vmatpush2.bf16.msra.mxu0 0
    %680 = vmatprep.subr.bf16.mxu0 0
    %681 = vmatpush2.bf16.msra.mxu0 0
    %682 = vmatprep.subr.bf16.mxu0 0
    %683 = vmatpush2.bf16.msra.mxu0 0
    %684 = vmatprep.mubr.bf16.mxu0 0
    %685 = vmatmul.mubr.bf16.gmra.mxu0 %v650
    %v686 = vpop.f32.mrf.mxu0
    %v687 = vadd.f32 0.0, %v686
    %v688 = vpop.f32.mrf.mxu0
    %v689 = vpop.f32.mrf.mxu0
    %v690 = vpop.f32.mrf.mxu0
    %691 = vdwg.mxu0
    %v692 = vadd.f32 %v644, %v687
    %v693 = vxor.u32 %v692, 2147483648
    %v694 = vmul.f32 %v693, 1.442695
    %v695 = vpow.pop %v694
    %v696 = vadd.f32 %v695, 1.0
    %v697 = vrcp.pop %v696
    %v698 = vmul.f32 1.0, %v697
    %v699 = vtanh.pop %v692
    %v700 = vmul.f32 %v698, %v635
    %702 = vrot.lane.b32.xlu0 %v699, 64
    %v703 = vpop.permute.xlu0 %702
    %v705 = vmul.f32 %v698, %v703
    %707 = vrot.lane.b32.xlu0 %v705, 32
    %v708 = vpop.permute.xlu0 %707
    %v710 = vadd.f32 %v700, %v708
    %v711 = vtanh.pop %v710
    %713 = vrot.lane.b32.xlu0 %v711, 64
    %v714 = vpop.permute.xlu0 %713
    %v716 = vmul.f32 %v698, %v714
    %s717 = scalar_lea.vmem [#allocation2], 28
    %v718 = vld [vmem:[%s717] sm:$0xf]
    %v719 = vunpack.c.l.bf16 %v718
    %v720 = vpack.c.bf16 %v716, %v716
    %722 = vrot.lane.b32.xlu0 %v720, 32
    %v723 = vpop.permute.xlu0 %722
    %v725 = vsel %vm198, %v723, 0
    %727 = vmatprep.subr.bf16.mxu0 0
    %728 = vmatpush1.bf16.msra.mxu0 0
    %729 = vmatprep.subr.bf16.mxu0 0
    %730 = vmatpush1.bf16.msra.mxu0 0
    %731 = vmatprep.subr.bf16.mxu0 0
    %732 = vmatpush1.bf16.msra.mxu0 0
    %733 = vmatprep.subr.bf16.mxu0 0
    %734 = vmatpush1.bf16.msra.mxu0 0
    %735 = vmatprep.subr.bf16.mxu0 0
    %736 = vmatpush1.bf16.msra.mxu0 0
    %737 = vmatprep.subr.bf16.mxu0 0
    %738 = vmatpush1.bf16.msra.mxu0 0
    %739 = vmatprep.subr.bf16.mxu0 0
    %740 = vmatpush1.bf16.msra.mxu0 %v195
    %741 = vmatprep.subr.bf16.mxu0 0
    %742 = vmatpush1.bf16.msra.mxu0 %v194
    %743 = vmatprep.subr.bf16.mxu0 0
    %744 = vmatpush2.bf16.msra.mxu0 0
    %745 = vmatprep.subr.bf16.mxu0 0
    %746 = vmatpush2.bf16.msra.mxu0 0
    %747 = vmatprep.subr.bf16.mxu0 0
    %748 = vmatpush2.bf16.msra.mxu0 0
    %749 = vmatprep.subr.bf16.mxu0 0
    %750 = vmatpush2.bf16.msra.mxu0 0
    %751 = vmatprep.subr.bf16.mxu0 0
    %752 = vmatpush2.bf16.msra.mxu0 0
    %753 = vmatprep.subr.bf16.mxu0 0
    %754 = vmatpush2.bf16.msra.mxu0 0
    %755 = vmatprep.subr.bf16.mxu0 0
    %756 = vmatpush2.bf16.msra.mxu0 0
    %757 = vmatprep.subr.bf16.mxu0 0
    %758 = vmatpush2.bf16.msra.mxu0 0
    %759 = vmatprep.mubr.bf16.mxu0 0
    %760 = vmatmul.mubr.bf16.gmra.mxu0 %v725
    %v761 = vpop.f32.mrf.mxu0
    %v762 = vadd.f32 0.0, %v761
    %v763 = vpop.f32.mrf.mxu0
    %v764 = vpop.f32.mrf.mxu0
    %v765 = vpop.f32.mrf.mxu0
    %766 = vdwg.mxu0
    %v767 = vadd.f32 %v719, %v762
    %v768 = vxor.u32 %v767, 2147483648
    %v769 = vmul.f32 %v768, 1.442695
    %v770 = vpow.pop %v769
    %v771 = vadd.f32 %v770, 1.0
    %v772 = vrcp.pop %v771
    %v773 = vmul.f32 1.0, %v772
    %v774 = vtanh.pop %v767
    %v775 = vmul.f32 %v773, %v710
    %777 = vrot.lane.b32.xlu0 %v774, 64
    %v778 = vpop.permute.xlu0 %777
    %v780 = vmul.f32 %v773, %v778
    %782 = vrot.lane.b32.xlu0 %v780, 32
    %v783 = vpop.permute.xlu0 %782
    %v785 = vadd.f32 %v775, %v783
    %v786 = vtanh.pop %v785
    %788 = vrot.lane.b32.xlu0 %v786, 64
    %v789 = vpop.permute.xlu0 %788
    %v791 = vmul.f32 %v773, %v789
    %v792 = vpack.c.bf16 %v791, %v791
    %v793 = vld [vmem:[%s4] sm:$0xf]
    %v794 = vld [vmem:[%s4 + $0x4] sm:$0xf]
    %v795 = vld [vmem:[%s4 + $0x8] sm:$0xf]
    %v796 = vld [vmem:[%s4 + $0xc] sm:$0xf]
    %v798 = vlaneseq
    %v799 = vshrl.u32 %v798, 7
    %v800 = vsub.s32 0, %v799
    %v801 = vrot.slane %v45, %v800
    %804 = vrot.lane.b32.xlu0 %v792, 32
    %v805 = vpop.permute.xlu0 %804
    %v810 = vunpack.c.l.b16 %v793
    %v811 = vunpack.c.l.b16 %v794
    %v812 = vunpack.c.l.b16 %v795
    %v813 = vunpack.c.l.b16 %v796
    %v814 = vpack.c.b16 %v811, %v810
    %v815 = vpack.c.b16 %v813, %v812
    %v819 = vsel %vm198, %v805, 0
    %821 = vmatprep.subr.bf16.mxu0 0
    %822 = vmatpush1.bf16.msra.mxu0 0
    %823 = vmatprep.subr.bf16.mxu0 0
    %824 = vmatpush1.bf16.msra.mxu0 0
    %825 = vmatprep.subr.bf16.mxu0 0
    %826 = vmatpush1.bf16.msra.mxu0 0
    %827 = vmatprep.subr.bf16.mxu0 0
    %828 = vmatpush1.bf16.msra.mxu0 0
    %829 = vmatprep.subr.bf16.mxu0 0
    %830 = vmatpush1.bf16.msra.mxu0 0
    %831 = vmatprep.subr.bf16.mxu0 0
    %832 = vmatpush1.bf16.msra.mxu0 0
    %833 = vmatprep.subr.bf16.mxu0 0
    %834 = vmatpush1.bf16.msra.mxu0 %v815
    %835 = vmatprep.subr.bf16.mxu0 0
    %836 = vmatpush1.bf16.msra.mxu0 %v814
    %837 = vmatprep.subr.bf16.mxu0 0
    %838 = vmatpush2.bf16.msra.mxu0 0
    %839 = vmatprep.subr.bf16.mxu0 0
    %840 = vmatpush2.bf16.msra.mxu0 0
    %841 = vmatprep.subr.bf16.mxu0 0
    %842 = vmatpush2.bf16.msra.mxu0 0
    %843 = vmatprep.subr.bf16.mxu0 0
    %844 = vmatpush2.bf16.msra.mxu0 0
    %845 = vmatprep.subr.bf16.mxu0 0
    %846 = vmatpush2.bf16.msra.mxu0 0
    %847 = vmatprep.subr.bf16.mxu0 0
    %848 = vmatpush2.bf16.msra.mxu0 0
    %849 = vmatprep.subr.bf16.mxu0 0
    %850 = vmatpush2.bf16.msra.mxu0 0
    %851 = vmatprep.subr.bf16.mxu0 0
    %852 = vmatpush2.bf16.msra.mxu0 0
    %853 = vmatprep.mubr.bf16.mxu0 0
    %854 = vmatmul.mubr.bf16.gmra.mxu0 %v819
    %v855 = vpop.f32.mrf.mxu0
    %v856 = vadd.f32 %v801, %v855
    %v857 = vpop.f32.mrf.mxu0
    %v858 = vpop.f32.mrf.mxu0
    %v859 = vpop.f32.mrf.mxu0
    %860 = vdwg.mxu0
    %v861 = vxor.u32 %v856, 2147483648
    %v862 = vmul.f32 %v861, 1.442695
    %v863 = vpow.pop %v862
    %v864 = vadd.f32 %v863, 1.0
    %v865 = vrcp.pop %v864
    %v866 = vmul.f32 1.0, %v865
    %v867 = vtanh.pop %v856
    %v868 = vmul.f32 %v866, 0.0
    %870 = vrot.lane.b32.xlu0 %v867, 120
    %v871 = vpop.permute.xlu0 %870
    %v873 = vmul.f32 %v866, %v871
    %875 = vrot.lane.b32.xlu0 %v873, 4
    %v876 = vpop.permute.xlu0 %875
    %v878 = vadd.f32 %v868, %v876
    %v879 = vtanh.pop %v878
    %881 = vrot.lane.b32.xlu0 %v879, 8
    %v882 = vpop.permute.xlu0 %881
    %v884 = vmul.f32 %v866, %v882
    %886 = vrot.lane.b32.xlu0 %v884, 116
    %v887 = vpop.permute.xlu0 %886
    %vm889 = vcmask 31744
    %890 = vst.msk [vmem:[%s8] sm:$0xff] %vm889, %v887
    %v891 = vpack.c.bf16 %v884, %v884
    %v892 = vld [vmem:[%s6] sm:$0x3]
    %v894 = vlaneseq
    %v895 = vshrl.u32 %v894, 7
    %v896 = vsub.s32 0, %v895
    %v897 = vrot.slane %v46, %v896
    %900 = vrot.lane.b32.xlu0 %v891, 116
    %v901 = vpop.permute.xlu0 %900
    %v903 = vsel %vm889, %v901, 0
    %vm905 = vcmask 1041408
    %v907 = vsel %vm905, %v892, 0
    %909 = vmatprep.subr.bf16.mxu0 0
    %910 = vmatpush1.bf16.msra.mxu0 0
    %911 = vmatprep.subr.bf16.mxu0 0
    %912 = vmatpush1.bf16.msra.mxu0 0
    %913 = vmatprep.subr.bf16.mxu0 0
    %914 = vmatpush1.bf16.msra.mxu0 0
    %915 = vmatprep.subr.bf16.mxu0 0
    %916 = vmatpush1.bf16.msra.mxu0 0
    %917 = vmatprep.subr.bf16.mxu0 0
    %918 = vmatpush1.bf16.msra.mxu0 0
    %919 = vmatprep.subr.bf16.mxu0 0
    %920 = vmatpush1.bf16.msra.mxu0 0
    %921 = vmatprep.subr.bf16.mxu0 0
    %922 = vmatpush1.bf16.msra.mxu0 0
    %923 = vmatprep.subr.bf16.mxu0 0
    %924 = vmatpush1.bf16.msra.mxu0 %v907
    %925 = vmatprep.subr.bf16.mxu0 0
    %926 = vmatpush2.bf16.msra.mxu0 0
    %927 = vmatprep.subr.bf16.mxu0 0
    %928 = vmatpush2.bf16.msra.mxu0 0
    %929 = vmatprep.subr.bf16.mxu0 0
    %930 = vmatpush2.bf16.msra.mxu0 0
    %931 = vmatprep.subr.bf16.mxu0 0
    %932 = vmatpush2.bf16.msra.mxu0 0
    %933 = vmatprep.subr.bf16.mxu0 0
    %934 = vmatpush2.bf16.msra.mxu0 0
    %935 = vmatprep.subr.bf16.mxu0 0
    %936 = vmatpush2.bf16.msra.mxu0 0
    %937 = vmatprep.subr.bf16.mxu0 0
    %938 = vmatpush2.bf16.msra.mxu0 0
    %939 = vmatprep.subr.bf16.mxu0 0
    %940 = vmatpush2.bf16.msra.mxu0 0
    %941 = vmatprep.mubr.bf16.mxu0 0
    %942 = vmatmul.mubr.bf16.gmra.mxu0 %v903
    %v943 = vpop.f32.mrf.mxu0
    %v944 = vadd.f32 %v897, %v943
    %v945 = vpop.f32.mrf.mxu0
    %v946 = vpop.f32.mrf.mxu0
    %v947 = vpop.f32.mrf.mxu0
    %948 = vdwg.mxu0
    %v949 = vxor.u32 %v944, 2147483648
    %v950 = vmul.f32 %v949, 1.442695
    %v951 = vpow.pop %v950
    %v952 = vadd.f32 %v951, 1.0
    %v953 = vrcp.pop %v952
    %v954 = vmul.f32 1.0, %v953
    %v955 = vtanh.pop %v944
    %v956 = vmul.f32 %v954, %v878
    %958 = vrot.lane.b32.xlu0 %v955, 120
    %v959 = vpop.permute.xlu0 %958
    %v961 = vmul.f32 %v954, %v959
    %963 = vrot.lane.b32.xlu0 %v961, 4
    %v964 = vpop.permute.xlu0 %963
    %v966 = vadd.f32 %v956, %v964
    %v967 = vtanh.pop %v966
    %969 = vrot.lane.b32.xlu0 %v967, 8
    %v970 = vpop.permute.xlu0 %969
    %v972 = vmul.f32 %v954, %v970
    %974 = vrot.lane.b32.xlu0 %v972, 116
    %v975 = vpop.permute.xlu0 %974
    %s977 = scalar_lea.vmem %s8, 56
    %978 = vst.msk [vmem:[%s977] sm:$0xff] %vm889, %v975
    %v979 = vpack.c.bf16 %v972, %v972
    %v980 = vld [vmem:[%s6] sm:$0x3]
    %982 = vrot.lane.b32.xlu0 %v979, 116
    %v983 = vpop.permute.xlu0 %982
    %v985 = vsel %vm889, %v983, 0
    %v988 = vsel %vm905, %v980, 0
    %990 = vmatprep.subr.bf16.mxu0 0
    %991 = vmatpush1.bf16.msra.mxu0 0
    %992 = vmatprep.subr.bf16.mxu0 0
    %993 = vmatpush1.bf16.msra.mxu0 0
    %994 = vmatprep.subr.bf16.mxu0 0
    %995 = vmatpush1.bf16.msra.mxu0 0
    %996 = vmatprep.subr.bf16.mxu0 0
    %997 = vmatpush1.bf16.msra.mxu0 0
    %998 = vmatprep.subr.bf16.mxu0 0
    %999 = vmatpush1.bf16.msra.mxu0 0
    %1000 = vmatprep.subr.bf16.mxu0 0
    %1001 = vmatpush1.bf16.msra.mxu0 0
    %1002 = vmatprep.subr.bf16.mxu0 0
    %1003 = vmatpush1.bf16.msra.mxu0 0
    %1004 = vmatprep.subr.bf16.mxu0 0
    %1005 = vmatpush1.bf16.msra.mxu0 %v988
    %1006 = vmatprep.subr.bf16.mxu0 0
    %1007 = vmatpush2.bf16.msra.mxu0 0
    %1008 = vmatprep.subr.bf16.mxu0 0
    %1009 = vmatpush2.bf16.msra.mxu0 0
    %1010 = vmatprep.subr.bf16.mxu0 0
    %1011 = vmatpush2.bf16.msra.mxu0 0
    %1012 = vmatprep.subr.bf16.mxu0 0
    %1013 = vmatpush2.bf16.msra.mxu0 0
    %1014 = vmatprep.subr.bf16.mxu0 0
    %1015 = vmatpush2.bf16.msra.mxu0 0
    %1016 = vmatprep.subr.bf16.mxu0 0
    %1017 = vmatpush2.bf16.msra.mxu0 0
    %1018 = vmatprep.subr.bf16.mxu0 0
    %1019 = vmatpush2.bf16.msra.mxu0 0
    %1020 = vmatprep.subr.bf16.mxu0 0
    %1021 = vmatpush2.bf16.msra.mxu0 0
    %1022 = vmatprep.mubr.bf16.mxu0 0
    %1023 = vmatmul.mubr.bf16.gmra.mxu0 %v985
    %v1024 = vpop.f32.mrf.mxu0
    %v1025 = vadd.f32 %v897, %v1024
    %v1026 = vpop.f32.mrf.mxu0
    %v1027 = vpop.f32.mrf.mxu0
    %v1028 = vpop.f32.mrf.mxu0
    %1029 = vdwg.mxu0
    %v1030 = vxor.u32 %v1025, 2147483648
    %v1031 = vmul.f32 %v1030, 1.442695
    %v1032 = vpow.pop %v1031
    %v1033 = vadd.f32 %v1032, 1.0
    %v1034 = vrcp.pop %v1033
    %v1035 = vmul.f32 1.0, %v1034
    %v1036 = vtanh.pop %v1025
    %v1037 = vmul.f32 %v1035, %v966
    %1039 = vrot.lane.b32.xlu0 %v1036, 120
    %v1040 = vpop.permute.xlu0 %1039
    %v1042 = vmul.f32 %v1035, %v1040
    %1044 = vrot.lane.b32.xlu0 %v1042, 4
    %v1045 = vpop.permute.xlu0 %1044
    %v1047 = vadd.f32 %v1037, %v1045
    %v1048 = vtanh.pop %v1047
    %1050 = vrot.lane.b32.xlu0 %v1048, 8
    %v1051 = vpop.permute.xlu0 %1050
    %v1053 = vmul.f32 %v1035, %v1051
    %1055 = vrot.lane.b32.xlu0 %v1053, 116
    %v1056 = vpop.permute.xlu0 %1055
    %s1058 = scalar_lea.vmem %s8, 48
    %1059 = vst.msk [vmem:[%s1058] sm:$0xff] %vm889, %v1056
    %v1060 = vpack.c.bf16 %v1053, %v1053
    %v1061 = vld [vmem:[%s6] sm:$0x3]
    %1063 = vrot.lane.b32.xlu0 %v1060, 116
    %v1064 = vpop.permute.xlu0 %1063
    %v1066 = vsel %vm889, %v1064, 0
    %v1069 = vsel %vm905, %v1061, 0
    %1071 = vmatprep.subr.bf16.mxu0 0
    %1072 = vmatpush1.bf16.msra.mxu0 0
    %1073 = vmatprep.subr.bf16.mxu0 0
    %1074 = vmatpush1.bf16.msra.mxu0 0
    %1075 = vmatprep.subr.bf16.mxu0 0
    %1076 = vmatpush1.bf16.msra.mxu0 0
    %1077 = vmatprep.subr.bf16.mxu0 0
    %1078 = vmatpush1.bf16.msra.mxu0 0
    %1079 = vmatprep.subr.bf16.mxu0 0
    %1080 = vmatpush1.bf16.msra.mxu0 0
    %1081 = vmatprep.subr.bf16.mxu0 0
    %1082 = vmatpush1.bf16.msra.mxu0 0
    %1083 = vmatprep.subr.bf16.mxu0 0
    %1084 = vmatpush1.bf16.msra.mxu0 0
    %1085 = vmatprep.subr.bf16.mxu0 0
    %1086 = vmatpush1.bf16.msra.mxu0 %v1069
    %1087 = vmatprep.subr.bf16.mxu0 0
    %1088 = vmatpush2.bf16.msra.mxu0 0
    %1089 = vmatprep.subr.bf16.mxu0 0
    %1090 = vmatpush2.bf16.msra.mxu0 0
    %1091 = vmatprep.subr.bf16.mxu0 0
    %1092 = vmatpush2.bf16.msra.mxu0 0
    %1093 = vmatprep.subr.bf16.mxu0 0
    %1094 = vmatpush2.bf16.msra.mxu0 0
    %1095 = vmatprep.subr.bf16.mxu0 0
    %1096 = vmatpush2.bf16.msra.mxu0 0
    %1097 = vmatprep.subr.bf16.mxu0 0
    %1098 = vmatpush2.bf16.msra.mxu0 0
    %1099 = vmatprep.subr.bf16.mxu0 0
    %1100 = vmatpush2.bf16.msra.mxu0 0
    %1101 = vmatprep.subr.bf16.mxu0 0
    %1102 = vmatpush2.bf16.msra.mxu0 0
    %1103 = vmatprep.mubr.bf16.mxu0 0
    %1104 = vmatmul.mubr.bf16.gmra.mxu0 %v1066
    %v1105 = vpop.f32.mrf.mxu0
    %v1106 = vadd.f32 %v897, %v1105
    %v1107 = vpop.f32.mrf.mxu0
    %v1108 = vpop.f32.mrf.mxu0
    %v1109 = vpop.f32.mrf.mxu0
    %1110 = vdwg.mxu0
    %v1111 = vxor.u32 %v1106, 2147483648
    %v1112 = vmul.f32 %v1111, 1.442695
    %v1113 = vpow.pop %v1112
    %v1114 = vadd.f32 %v1113, 1.0
    %v1115 = vrcp.pop %v1114
    %v1116 = vmul.f32 1.0, %v1115
    %v1117 = vtanh.pop %v1106
    %v1118 = vmul.f32 %v1116, %v1047
    %1120 = vrot.lane.b32.xlu0 %v1117, 120
    %v1121 = vpop.permute.xlu0 %1120
    %v1123 = vmul.f32 %v1116, %v1121
    %1125 = vrot.lane.b32.xlu0 %v1123, 4
    %v1126 = vpop.permute.xlu0 %1125
    %v1128 = vadd.f32 %v1118, %v1126
    %v1129 = vtanh.pop %v1128
    %1131 = vrot.lane.b32.xlu0 %v1129, 8
    %v1132 = vpop.permute.xlu0 %1131
    %v1134 = vmul.f32 %v1116, %v1132
    %1136 = vrot.lane.b32.xlu0 %v1134, 116
    %v1137 = vpop.permute.xlu0 %1136
    %s1139 = scalar_lea.vmem %s8, 40
    %1140 = vst.msk [vmem:[%s1139] sm:$0xff] %vm889, %v1137
    %v1141 = vpack.c.bf16 %v1134, %v1134
    %v1142 = vld [vmem:[%s6] sm:$0x3]
    %1144 = vrot.lane.b32.xlu0 %v1141, 116
    %v1145 = vpop.permute.xlu0 %1144
    %v1147 = vsel %vm889, %v1145, 0
    %v1150 = vsel %vm905, %v1142, 0
    %1152 = vmatprep.subr.bf16.mxu0 0
    %1153 = vmatpush1.bf16.msra.mxu0 0
    %1154 = vmatprep.subr.bf16.mxu0 0
    %1155 = vmatpush1.bf16.msra.mxu0 0
    %1156 = vmatprep.subr.bf16.mxu0 0
    %1157 = vmatpush1.bf16.msra.mxu0 0
    %1158 = vmatprep.subr.bf16.mxu0 0
    %1159 = vmatpush1.bf16.msra.mxu0 0
    %1160 = vmatprep.subr.bf16.mxu0 0
    %1161 = vmatpush1.bf16.msra.mxu0 0
    %1162 = vmatprep.subr.bf16.mxu0 0
    %1163 = vmatpush1.bf16.msra.mxu0 0
    %1164 = vmatprep.subr.bf16.mxu0 0
    %1165 = vmatpush1.bf16.msra.mxu0 0
    %1166 = vmatprep.subr.bf16.mxu0 0
    %1167 = vmatpush1.bf16.msra.mxu0 %v1150
    %1168 = vmatprep.subr.bf16.mxu0 0
    %1169 = vmatpush2.bf16.msra.mxu0 0
    %1170 = vmatprep.subr.bf16.mxu0 0
    %1171 = vmatpush2.bf16.msra.mxu0 0
    %1172 = vmatprep.subr.bf16.mxu0 0
    %1173 = vmatpush2.bf16.msra.mxu0 0
    %1174 = vmatprep.subr.bf16.mxu0 0
    %1175 = vmatpush2.bf16.msra.mxu0 0
    %1176 = vmatprep.subr.bf16.mxu0 0
    %1177 = vmatpush2.bf16.msra.mxu0 0
    %1178 = vmatprep.subr.bf16.mxu0 0
    %1179 = vmatpush2.bf16.msra.mxu0 0
    %1180 = vmatprep.subr.bf16.mxu0 0
    %1181 = vmatpush2.bf16.msra.mxu0 0
    %1182 = vmatprep.subr.bf16.mxu0 0
    %1183 = vmatpush2.bf16.msra.mxu0 0
    %1184 = vmatprep.mubr.bf16.mxu0 0
    %1185 = vmatmul.mubr.bf16.gmra.mxu0 %v1147
    %v1186 = vpop.f32.mrf.mxu0
    %v1187 = vadd.f32 %v897, %v1186
    %v1188 = vpop.f32.mrf.mxu0
    %v1189 = vpop.f32.mrf.mxu0
    %v1190 = vpop.f32.mrf.mxu0
    %1191 = vdwg.mxu0
    %v1192 = vxor.u32 %v1187, 2147483648
    %v1193 = vmul.f32 %v1192, 1.442695
    %v1194 = vpow.pop %v1193
    %v1195 = vadd.f32 %v1194, 1.0
    %v1196 = vrcp.pop %v1195
    %v1197 = vmul.f32 1.0, %v1196
    %v1198 = vtanh.pop %v1187
    %v1199 = vmul.f32 %v1197, %v1128
    %1201 = vrot.lane.b32.xlu0 %v1198, 120
    %v1202 = vpop.permute.xlu0 %1201
    %v1204 = vmul.f32 %v1197, %v1202
    %1206 = vrot.lane.b32.xlu0 %v1204, 4
    %v1207 = vpop.permute.xlu0 %1206
    %v1209 = vadd.f32 %v1199, %v1207
    %v1210 = vtanh.pop %v1209
    %1212 = vrot.lane.b32.xlu0 %v1210, 8
    %v1213 = vpop.permute.xlu0 %1212
    %v1215 = vmul.f32 %v1197, %v1213
    %1217 = vrot.lane.b32.xlu0 %v1215, 116
    %v1218 = vpop.permute.xlu0 %1217
    %s1220 = scalar_lea.vmem %s8, 32
    %1221 = vst.msk [vmem:[%s1220] sm:$0xff] %vm889, %v1218
    %v1222 = vpack.c.bf16 %v1215, %v1215
    %v1223 = vld [vmem:[%s6] sm:$0x3]
    %1225 = vrot.lane.b32.xlu0 %v1222, 116
    %v1226 = vpop.permute.xlu0 %1225
    %v1228 = vsel %vm889, %v1226, 0
    %v1231 = vsel %vm905, %v1223, 0
    %1233 = vmatprep.subr.bf16.mxu0 0
    %1234 = vmatpush1.bf16.msra.mxu0 0
    %1235 = vmatprep.subr.bf16.mxu0 0
    %1236 = vmatpush1.bf16.msra.mxu0 0
    %1237 = vmatprep.subr.bf16.mxu0 0
    %1238 = vmatpush1.bf16.msra.mxu0 0
    %1239 = vmatprep.subr.bf16.mxu0 0
    %1240 = vmatpush1.bf16.msra.mxu0 0
    %1241 = vmatprep.subr.bf16.mxu0 0
    %1242 = vmatpush1.bf16.msra.mxu0 0
    %1243 = vmatprep.subr.bf16.mxu0 0
    %1244 = vmatpush1.bf16.msra.mxu0 0
    %1245 = vmatprep.subr.bf16.mxu0 0
    %1246 = vmatpush1.bf16.msra.mxu0 0
    %1247 = vmatprep.subr.bf16.mxu0 0
    %1248 = vmatpush1.bf16.msra.mxu0 %v1231
    %1249 = vmatprep.subr.bf16.mxu0 0
    %1250 = vmatpush2.bf16.msra.mxu0 0
    %1251 = vmatprep.subr.bf16.mxu0 0
    %1252 = vmatpush2.bf16.msra.mxu0 0
    %1253 = vmatprep.subr.bf16.mxu0 0
    %1254 = vmatpush2.bf16.msra.mxu0 0
    %1255 = vmatprep.subr.bf16.mxu0 0
    %1256 = vmatpush2.bf16.msra.mxu0 0
    %1257 = vmatprep.subr.bf16.mxu0 0
    %1258 = vmatpush2.bf16.msra.mxu0 0
    %1259 = vmatprep.subr.bf16.mxu0 0
    %1260 = vmatpush2.bf16.msra.mxu0 0
    %1261 = vmatprep.subr.bf16.mxu0 0
    %1262 = vmatpush2.bf16.msra.mxu0 0
    %1263 = vmatprep.subr.bf16.mxu0 0
    %1264 = vmatpush2.bf16.msra.mxu0 0
    %1265 = vmatprep.mubr.bf16.mxu0 0
    %1266 = vmatmul.mubr.bf16.gmra.mxu0 %v1228
    %v1267 = vpop.f32.mrf.mxu0
    %v1268 = vadd.f32 %v897, %v1267
    %v1269 = vpop.f32.mrf.mxu0
    %v1270 = vpop.f32.mrf.mxu0
    %v1271 = vpop.f32.mrf.mxu0
    %1272 = vdwg.mxu0
    %v1273 = vxor.u32 %v1268, 2147483648
    %v1274 = vmul.f32 %v1273, 1.442695
    %v1275 = vpow.pop %v1274
    %v1276 = vadd.f32 %v1275, 1.0
    %v1277 = vrcp.pop %v1276
    %v1278 = vmul.f32 1.0, %v1277
    %v1279 = vtanh.pop %v1268
    %v1280 = vmul.f32 %v1278, %v1209
    %1282 = vrot.lane.b32.xlu0 %v1279, 120
    %v1283 = vpop.permute.xlu0 %1282
    %v1285 = vmul.f32 %v1278, %v1283
    %1287 = vrot.lane.b32.xlu0 %v1285, 4
    %v1288 = vpop.permute.xlu0 %1287
    %v1290 = vadd.f32 %v1280, %v1288
    %v1291 = vtanh.pop %v1290
    %1293 = vrot.lane.b32.xlu0 %v1291, 8
    %v1294 = vpop.permute.xlu0 %1293
    %v1296 = vmul.f32 %v1278, %v1294
    %1298 = vrot.lane.b32.xlu0 %v1296, 116
    %v1299 = vpop.permute.xlu0 %1298
    %s1301 = scalar_lea.vmem %s8, 24
    %1302 = vst.msk [vmem:[%s1301] sm:$0xff] %vm889, %v1299
    %v1303 = vpack.c.bf16 %v1296, %v1296
    %v1304 = vld [vmem:[%s6] sm:$0x3]
    %1306 = vrot.lane.b32.xlu0 %v1303, 116
    %v1307 = vpop.permute.xlu0 %1306
    %v1309 = vsel %vm889, %v1307, 0
    %v1312 = vsel %vm905, %v1304, 0
    %1314 = vmatprep.subr.bf16.mxu0 0
    %1315 = vmatpush1.bf16.msra.mxu0 0
    %1316 = vmatprep.subr.bf16.mxu0 0
    %1317 = vmatpush1.bf16.msra.mxu0 0
    %1318 = vmatprep.subr.bf16.mxu0 0
    %1319 = vmatpush1.bf16.msra.mxu0 0
    %1320 = vmatprep.subr.bf16.mxu0 0
    %1321 = vmatpush1.bf16.msra.mxu0 0
    %1322 = vmatprep.subr.bf16.mxu0 0
    %1323 = vmatpush1.bf16.msra.mxu0 0
    %1324 = vmatprep.subr.bf16.mxu0 0
    %1325 = vmatpush1.bf16.msra.mxu0 0
    %1326 = vmatprep.subr.bf16.mxu0 0
    %1327 = vmatpush1.bf16.msra.mxu0 0
    %1328 = vmatprep.subr.bf16.mxu0 0
    %1329 = vmatpush1.bf16.msra.mxu0 %v1312
    %1330 = vmatprep.subr.bf16.mxu0 0
    %1331 = vmatpush2.bf16.msra.mxu0 0
    %1332 = vmatprep.subr.bf16.mxu0 0
    %1333 = vmatpush2.bf16.msra.mxu0 0
    %1334 = vmatprep.subr.bf16.mxu0 0
    %1335 = vmatpush2.bf16.msra.mxu0 0
    %1336 = vmatprep.subr.bf16.mxu0 0
    %1337 = vmatpush2.bf16.msra.mxu0 0
    %1338 = vmatprep.subr.bf16.mxu0 0
    %1339 = vmatpush2.bf16.msra.mxu0 0
    %1340 = vmatprep.subr.bf16.mxu0 0
    %1341 = vmatpush2.bf16.msra.mxu0 0
    %1342 = vmatprep.subr.bf16.mxu0 0
    %1343 = vmatpush2.bf16.msra.mxu0 0
    %1344 = vmatprep.subr.bf16.mxu0 0
    %1345 = vmatpush2.bf16.msra.mxu0 0
    %1346 = vmatprep.mubr.bf16.mxu0 0
    %1347 = vmatmul.mubr.bf16.gmra.mxu0 %v1309
    %v1348 = vpop.f32.mrf.mxu0
    %v1349 = vadd.f32 %v897, %v1348
    %v1350 = vpop.f32.mrf.mxu0
    %v1351 = vpop.f32.mrf.mxu0
    %v1352 = vpop.f32.mrf.mxu0
    %1353 = vdwg.mxu0
    %v1354 = vxor.u32 %v1349, 2147483648
    %v1355 = vmul.f32 %v1354, 1.442695
    %v1356 = vpow.pop %v1355
    %v1357 = vadd.f32 %v1356, 1.0
    %v1358 = vrcp.pop %v1357
    %v1359 = vmul.f32 1.0, %v1358
    %v1360 = vtanh.pop %v1349
    %v1361 = vmul.f32 %v1359, %v1290
    %1363 = vrot.lane.b32.xlu0 %v1360, 120
    %v1364 = vpop.permute.xlu0 %1363
    %v1366 = vmul.f32 %v1359, %v1364
    %1368 = vrot.lane.b32.xlu0 %v1366, 4
    %v1369 = vpop.permute.xlu0 %1368
    %v1371 = vadd.f32 %v1361, %v1369
    %v1372 = vtanh.pop %v1371
    %1374 = vrot.lane.b32.xlu0 %v1372, 8
    %v1375 = vpop.permute.xlu0 %1374
    %v1377 = vmul.f32 %v1359, %v1375
    %1379 = vrot.lane.b32.xlu0 %v1377, 116
    %v1380 = vpop.permute.xlu0 %1379
    %s1382 = scalar_lea.vmem %s8, 16
    %1383 = vst.msk [vmem:[%s1382] sm:$0xff] %vm889, %v1380
    %v1384 = vpack.c.bf16 %v1377, %v1377
    %v1385 = vld [vmem:[%s6] sm:$0x3]
    %1387 = vrot.lane.b32.xlu0 %v1384, 116
    %v1388 = vpop.permute.xlu0 %1387
    %v1390 = vsel %vm889, %v1388, 0
    %v1393 = vsel %vm905, %v1385, 0
    %1395 = vmatprep.subr.bf16.mxu0 0
    %1396 = vmatpush1.bf16.msra.mxu0 0
    %1397 = vmatprep.subr.bf16.mxu0 0
    %1398 = vmatpush1.bf16.msra.mxu0 0
    %1399 = vmatprep.subr.bf16.mxu0 0
    %1400 = vmatpush1.bf16.msra.mxu0 0
    %1401 = vmatprep.subr.bf16.mxu0 0
    %1402 = vmatpush1.bf16.msra.mxu0 0
    %1403 = vmatprep.subr.bf16.mxu0 0
    %1404 = vmatpush1.bf16.msra.mxu0 0
    %1405 = vmatprep.subr.bf16.mxu0 0
    %1406 = vmatpush1.bf16.msra.mxu0 0
    %1407 = vmatprep.subr.bf16.mxu0 0
    %1408 = vmatpush1.bf16.msra.mxu0 0
    %1409 = vmatprep.subr.bf16.mxu0 0
    %1410 = vmatpush1.bf16.msra.mxu0 %v1393
    %1411 = vmatprep.subr.bf16.mxu0 0
    %1412 = vmatpush2.bf16.msra.mxu0 0
    %1413 = vmatprep.subr.bf16.mxu0 0
    %1414 = vmatpush2.bf16.msra.mxu0 0
    %1415 = vmatprep.subr.bf16.mxu0 0
    %1416 = vmatpush2.bf16.msra.mxu0 0
    %1417 = vmatprep.subr.bf16.mxu0 0
    %1418 = vmatpush2.bf16.msra.mxu0 0
    %1419 = vmatprep.subr.bf16.mxu0 0
    %1420 = vmatpush2.bf16.msra.mxu0 0
    %1421 = vmatprep.subr.bf16.mxu0 0
    %1422 = vmatpush2.bf16.msra.mxu0 0
    %1423 = vmatprep.subr.bf16.mxu0 0
    %1424 = vmatpush2.bf16.msra.mxu0 0
    %1425 = vmatprep.subr.bf16.mxu0 0
    %1426 = vmatpush2.bf16.msra.mxu0 0
    %1427 = vmatprep.mubr.bf16.mxu0 0
    %1428 = vmatmul.mubr.bf16.gmra.mxu0 %v1390
    %v1429 = vpop.f32.mrf.mxu0
    %v1430 = vadd.f32 %v897, %v1429
    %v1431 = vpop.f32.mrf.mxu0
    %v1432 = vpop.f32.mrf.mxu0
    %v1433 = vpop.f32.mrf.mxu0
    %1434 = vdwg.mxu0
    %v1435 = vxor.u32 %v1430, 2147483648
    %v1436 = vmul.f32 %v1435, 1.442695
    %v1437 = vpow.pop %v1436
    %v1438 = vadd.f32 %v1437, 1.0
    %v1439 = vrcp.pop %v1438
    %v1440 = vmul.f32 1.0, %v1439
    %v1441 = vtanh.pop %v1430
    %v1442 = vmul.f32 %v1440, %v1371
    %1444 = vrot.lane.b32.xlu0 %v1441, 120
    %v1445 = vpop.permute.xlu0 %1444
    %v1447 = vmul.f32 %v1440, %v1445
    %1449 = vrot.lane.b32.xlu0 %v1447, 4
    %v1450 = vpop.permute.xlu0 %1449
    %v1452 = vadd.f32 %v1442, %v1450
    %v1453 = vtanh.pop %v1452
    %1455 = vrot.lane.b32.xlu0 %v1453, 8
    %v1456 = vpop.permute.xlu0 %1455
    %v1458 = vmul.f32 %v1440, %v1456
    %1460 = vrot.lane.b32.xlu0 %v1458, 116
    %v1461 = vpop.permute.xlu0 %1460
    %s1463 = scalar_lea.vmem %s8, 8
    %1464 = vst.msk [vmem:[%s1463] sm:$0xff] %vm889, %v1461
    // Predicated region
    $region38: #{tpu_custom_call.1} parent=1 // pred_check
      _
    $region39: #{tpu_custom_call.1} parent=1 // pred_check_branch
      %1466 = sbr.rel (0) target = $region41
    $region40: #{tpu_custom_call.1} parent=1 // pred_region
      _
    $region41: #{tpu_custom_call.1} parent=1 // pred_fallthru
      _
    // Predicated region
    $region42: #{tpu_custom_call.1} parent=1 // pred_check
      _
    $region43: #{tpu_custom_call.1} parent=1 // pred_check_branch
      %1468 = sbr.rel (0) target = $region45
    $region44: #{tpu_custom_call.1} parent=1 // pred_region
      _
    $region45: #{tpu_custom_call.1} parent=1 // pred_fallthru
      _
    %1469 = vsyncpa [#allocation4], 1

</llo_original>
